<compile_context>
chip_gen: v5e
topology: v5e:2x2
jax: 0.10.0
libtpu: 0.0.40
codegen_flags: <defaults>
</compile_context>

<pallas_src>
import functools
import math

import jax
import jax.numpy as jnp
from jax.experimental import pallas as pl
from jax.experimental.pallas import tpu as pltpu


# ----------------------------- Pallas kernels -----------------------------

def _lstm_expand_ln_kernel(xt_ref, hx_ref, cx_ref, w_ref, p_ref, pt_ref,
                           g_ref, b_ref, hy_ref, cy_ref, y_ref, *, inv_c):
    # TODO(synk): DATSwinTransformerBlock (deformable window attention) source was
    # not provided with the module; Ft = DATSwin(xt, hx) is stood in by xt + hx.
    # The gating below reproduces SwinLSTMCell.forward exactly given Ft.
    ft = xt_ref[0] + hx_ref[0]
    gate = jax.nn.sigmoid(ft)
    cell = jnp.tanh(ft)
    cy = gate * (cx_ref[0] + cell)
    hy = gate * jnp.tanh(cy)
    hy_ref[0] = hy
    cy_ref[0] = cy

    # PatchExpanding: Linear(dim, 2*dim, bias=False) on the MXU (bf16 in, f32 acc).
    y = jnp.dot(hy.astype(jnp.bfloat16), w_ref[...],
                preferred_element_type=jnp.float32)                      # (L, 2C)

    # Per-future-token LayerNorm over c = dim // 2 channels.  Each (L, 2C) row
    # holds 4 future tokens of c channels; segment means/vars are computed with
    # 0/1 pooling matmuls (lane-dense, no sub-128 reshapes inside the kernel).
    mean = jnp.dot(y, p_ref[...], preferred_element_type=jnp.float32) * inv_c      # (L, 4)
    mean_c = jnp.dot(mean, pt_ref[...], preferred_element_type=jnp.float32)        # (L, 2C)
    d = y - mean_c
    var = jnp.dot(d * d, p_ref[...], preferred_element_type=jnp.float32) * inv_c
    var_c = jnp.dot(var, pt_ref[...], preferred_element_type=jnp.float32)
    yn = d * jax.lax.rsqrt(var_c + 1e-5)
    y_ref[0] = yn * g_ref[...] + b_ref[...]


def _deconv_gn_lrelu_kernel(xc_ref, w_ref, bias_ref, m_ref, mt_ref,
                            g_ref, b_ref, o_ref, *, inv_n):
    # ConvTranspose2d(k=3, s=2, p=1, op=1) as ONE K-packed matmul: input is
    # [x00|x01|x10|x11] along K, output holds the 4 parities along N.
    xc = xc_ref[0]                                                        # (HW, 4*cin) bf16
    y = jnp.dot(xc, w_ref[...], preferred_element_type=jnp.float32) + bias_ref[...]
    # GroupNorm(16): stats are permutation invariant -> compute on the packed
    # layout via per-group pooling matmuls.
    colsum = jnp.sum(y, axis=0, keepdims=True)                            # (1, 4*cout)
    gmean = jnp.dot(colsum, m_ref[...], preferred_element_type=jnp.float32) * inv_n
    mean_c = jnp.dot(gmean, mt_ref[...], preferred_element_type=jnp.float32)
    d = y - mean_c
    colsq = jnp.sum(d * d, axis=0, keepdims=True)
    gvar = jnp.dot(colsq, m_ref[...], preferred_element_type=jnp.float32) * inv_n
    rstd = jax.lax.rsqrt(gvar + 1e-5)
    rstd_c = jnp.dot(rstd, mt_ref[...], preferred_element_type=jnp.float32)
    yn = d * rstd_c * g_ref[...] + b_ref[...]
    o_ref[0] = jnp.where(yn > 0.0, yn, 0.2 * yn)                          # LeakyReLU(0.2)


def _deconv_sigmoid_kernel(xc_ref, w_ref, bias_ref, o_ref):
    xc = xc_ref[0]                                                        # (HW, 4*cin) bf16
    y = jnp.dot(xc, w_ref[...], preferred_element_type=jnp.float32) + bias_ref[...]
    o_ref[0] = jax.nn.sigmoid(y)


# --------------------------- wrappers / layout -----------------------------

def fused_lstm_expand(xt, hidden, expand_w, gamma, beta):
    """SwinLSTMCell gating + PatchExpanding Linear + LayerNorm, one pallas_call."""
    B, L, C = xt.shape
    c = C // 2
    if hidden is None:
        hx = jnp.zeros((B, L, C), jnp.float32)
        cx = jnp.zeros((B, L, C), jnp.float32)
    else:
        hx, cx = hidden

    seg = jnp.arange(2 * C, dtype=jnp.int32) // c
    P = (seg[:, None] == jnp.arange(4, dtype=jnp.int32)[None, :]).astype(jnp.float32)
    PT = P.T
    g_t = jnp.tile(gamma, 4).reshape(1, 2 * C)
    b_t = jnp.tile(beta, 4).reshape(1, 2 * C)
    w_bf16 = expand_w.astype(jnp.bfloat16)

    x_spec = pl.BlockSpec((1, L, C), lambda b: (b, 0, 0))
    y_spec = pl.BlockSpec((1, L, 2 * C), lambda b: (b, 0, 0))

    def full2d(shape):
        return pl.BlockSpec(shape, lambda b: (0, 0))

    hy, cy, y = pl.pallas_call(
        functools.partial(_lstm_expand_ln_kernel, inv_c=1.0 / c),
        grid=(B,),
        in_specs=[x_spec, x_spec, x_spec,
                  full2d((C, 2 * C)), full2d((2 * C, 4)), full2d((4, 2 * C)),
                  full2d((1, 2 * C)), full2d((1, 2 * C))],
        out_specs=(x_spec, x_spec, y_spec),
        out_shape=(jax.ShapeDtypeStruct((B, L, C), jnp.float32),
                   jax.ShapeDtypeStruct((B, L, C), jnp.float32),
                   jax.ShapeDtypeStruct((B, L, 2 * C), jnp.float32)),
        compiler_params=pltpu.CompilerParams(dimension_semantics=("parallel",)),
    )(xt, hx, cx, w_bf16, P, PT, g_t, b_t)
    return hy, cy, y


def _pixel_shuffle(y, H, W):
    """b (h w) (p1 p2 c) -> b (h p1 w p2) c  (LN already applied per token)."""
    B, L, C2 = y.shape
    c = C2 // 4
    y = y.reshape(B, H, W, 2, 2, c).transpose(0, 1, 3, 2, 4, 5)
    return y.reshape(B, 4 * H * W, c)


def _shifted_pack(x_nhwc):
    """[x00 | x01 | x10 | x11] along channels -> (B, H*W, 4*C) bf16 slab."""
    B, H, W, C = x_nhwc.shape
    xp = jnp.pad(x_nhwc, ((0, 0), (0, 1), (0, 1), (0, 0)))
    xc = jnp.concatenate([xp[:, :H, :W, :], xp[:, :H, 1:, :],
                          xp[:, 1:, :W, :], xp[:, 1:, 1:, :]], axis=-1)
    return xc.reshape(B, H * W, 4 * C).astype(jnp.bfloat16)


def _pack_deconv_weight(w):
    """Pack (kh, kw, cin, cout) deconv taps into one (4*cin, 4*cout) matrix.

    Row blocks match the [x00|x01|x10|x11] input packing; column blocks are the
    output parities (ee, eo, oe, oo) of ConvTranspose2d(k=3, s=2, p=1, op=1).
    NOTE: PyTorch checkpoints store ConvTranspose2d weights as (Cin, Cout, kH, kW);
    permute to (kH, kW, Cin, Cout) before calling this when loading real weights.
    """
    cin, cout = w.shape[2], w.shape[3]
    z = jnp.zeros((cin, cout), w.dtype)
    cols = [
        jnp.concatenate([w[1, 1], z,       z,       z      ], axis=0),   # (even, even)
        jnp.concatenate([w[1, 2], w[1, 0], z,       z      ], axis=0),   # (even, odd)
        jnp.concatenate([w[2, 1], z,       w[0, 1], z      ], axis=0),   # (odd,  even)
        jnp.concatenate([w[2, 2], w[2, 0], w[0, 2], w[0, 0]], axis=0),   # (odd,  odd)
    ]
    return jnp.concatenate(cols, axis=1).astype(jnp.bfloat16)            # (4cin, 4cout)


def deconv_gn_lrelu(x_nhwc, w, bias, gamma, beta, groups=16):
    """ConvTranspose2d(s=2) + GroupNorm(16) + LeakyReLU(0.2), one pallas_call."""
    B, H, W, cin = x_nhwc.shape
    cout = w.shape[-1]
    cg = cout // groups
    HW = H * W
    xc = _shifted_pack(x_nhwc)
    wp = _pack_deconv_weight(w)
    bias_t = jnp.tile(bias, 4).reshape(1, 4 * cout)
    g_t = jnp.tile(gamma, 4).reshape(1, 4 * cout)
    b_t = jnp.tile(beta, 4).reshape(1, 4 * cout)
    ch = jnp.arange(4 * cout, dtype=jnp.int32) % cout
    M = ((ch[:, None] // cg) == jnp.arange(groups, dtype=jnp.int32)[None, :]
         ).astype(jnp.float32)                                           # (4cout, G)
    MT = M.T

    x_spec = pl.BlockSpec((1, HW, 4 * cin), lambda b: (b, 0, 0))
    o_spec = pl.BlockSpec((1, HW, 4 * cout), lambda b: (b, 0, 0))
    out = pl.pallas_call(
        functools.partial(_deconv_gn_lrelu_kernel, inv_n=1.0 / (HW * 4 * cg)),
        grid=(B,),
        in_specs=[x_spec,
                  pl.BlockSpec((4 * cin, 4 * cout), lambda b: (0, 0)),
                  pl.BlockSpec((1, 4 * cout), lambda b: (0, 0)),
                  pl.BlockSpec((4 * cout, groups), lambda b: (0, 0)),
                  pl.BlockSpec((groups, 4 * cout), lambda b: (0, 0)),
                  pl.BlockSpec((1, 4 * cout), lambda b: (0, 0)),
                  pl.BlockSpec((1, 4 * cout), lambda b: (0, 0))],
        out_specs=o_spec,
        out_shape=jax.ShapeDtypeStruct((B, HW, 4 * cout), jnp.float32),
        compiler_params=pltpu.CompilerParams(dimension_semantics=("parallel",)),
    )(xc, wp, bias_t, M, MT, g_t, b_t)
    # interleave the 4 parities back to NHWC (B, 2H, 2W, cout)
    y = out.reshape(B, H, W, 2, 2, cout).transpose(0, 1, 3, 2, 4, 5)
    return y.reshape(B, 2 * H, 2 * W, cout)


def deconv_sigmoid_nchw(x_nhwc, w, bias):
    """ConvTranspose2d(s=2) + sigmoid, one pallas_call; unpacks straight to NCHW."""
    B, H, W, cin = x_nhwc.shape
    cout = w.shape[-1]
    HW = H * W
    xc = _shifted_pack(x_nhwc)
    wp = _pack_deconv_weight(w)
    bias_t = jnp.tile(bias, 4).reshape(1, 4 * cout)

    x_spec = pl.BlockSpec((1, HW, 4 * cin), lambda b: (b, 0, 0))
    o_spec = pl.BlockSpec((1, HW, 4 * cout), lambda b: (b, 0, 0))
    out = pl.pallas_call(
        _deconv_sigmoid_kernel,
        grid=(B,),
        in_specs=[x_spec,
                  pl.BlockSpec((4 * cin, 4 * cout), lambda b: (0, 0)),
                  pl.BlockSpec((1, 4 * cout), lambda b: (0, 0))],
        out_specs=o_spec,
        out_shape=jax.ShapeDtypeStruct((B, HW, 4 * cout), jnp.float32),
        compiler_params=pltpu.CompilerParams(dimension_semantics=("parallel",)),
    )(xc, wp, bias_t)
    # parity unpack directly to NCHW (B, cout, 2H, 2W) -> no extra NHWC->NCHW transpose
    y = out.reshape(B, H, W, 2, 2, cout).transpose(0, 5, 1, 3, 2, 4)
    return y.reshape(B, cout, 2 * H, 2 * W)


# ----------------------------- module wrappers -----------------------------

def patch_inflated(x, p):
    B, L, C = x.shape
    H = W = math.isqrt(L)
    assert H * W == L and H % 2 == 0 and W % 2 == 0, "input feature has wrong size"
    x = x.reshape(B, H, W, C)                                            # NHWC
    h = deconv_gn_lrelu(x, p["conv1_w"], p["conv1_b"], p["gn_g"], p["gn_b"], groups=16)
    return deconv_sigmoid_nchw(h, p["conv2_w"], p["conv2_b"])            # NCHW


def upsample_forward(params, x, y):
    hidden_states_up = []
    for idx, p in enumerate(params["upsample"]):
        B, L, C = x.shape
        H = W = math.isqrt(L)
        assert H * W == L, "input feature has wrong size"
        hy, cy, yln = fused_lstm_expand(x, y[idx], p["expand_w"],
                                        p["norm_g"], p["norm_b"])
        hidden_states_up.append((hy, cy))
        x = _pixel_shuffle(yln, H, W)                                    # (B, 4L, C//2)
    out = patch_inflated(x, params["unembed"])
    return hidden_states_up, out


# ----------------------------- parameter init -----------------------------

def init_upsample_params(key, img_size, patch_size, in_chans, embed_dim,
                         depths_upsample):
    num_layers = len(depths_upsample)
    pr = img_size // patch_size
    params = {"layers": [], "upsample": []}
    for i_layer in range(num_layers):
        key, k1, k2, k3 = jax.random.split(key, 4)
        dim = int(embed_dim * 2 ** (num_layers - i_layer))
        params["layers"].append({})  # TODO(synk): DATSwin block weights (source not provided)
        params["upsample"].append({
            "expand_w": 0.02 * jax.random.normal(k1, (dim, 2 * dim), jnp.float32),
            "norm_g": 1.0 + 0.05 * jax.random.normal(k2, (dim // 2,), jnp.float32),
            "norm_b": 0.05 * jax.random.normal(k3, (dim // 2,), jnp.float32),
        })
    key, k1, k2, k3, k4, k5, k6 = jax.random.split(key, 7)
    params["unembed"] = {
        # (kh, kw, cin, cout) tap layout; permute PyTorch (Cin,Cout,kH,kW) when porting.
        "conv1_w": 0.05 * jax.random.normal(k1, (3, 3, embed_dim, embed_dim), jnp.float32),
        "conv1_b": 0.05 * jax.random.normal(k2, (embed_dim,), jnp.float32),
        "gn_g": 1.0 + 0.05 * jax.random.normal(k3, (embed_dim,), jnp.float32),
        "gn_b": 0.05 * jax.random.normal(k4, (embed_dim,), jnp.float32),
        "conv2_w": 0.05 * jax.random.normal(k5, (3, 3, embed_dim, in_chans), jnp.float32),
        "conv2_b": 0.05 * jax.random.normal(k6, (in_chans,), jnp.float32),
    }
    return params


# ----------------------------------- main -----------------------------------

if __name__ == "__main__":
    img_size, patch_size, in_chans, embed_dim = 32, 4, 4, 32
    depths_upsample = (2, 2)
    num_layers = len(depths_upsample)
    B = 2
    pr = img_size // patch_size                       # 8
    L0 = (pr // 2 ** num_layers) ** 2                 # 4 tokens entering layer 0
    C0 = embed_dim * 2 ** num_layers                  # 128 channels entering layer 0

    key = jax.random.PRNGKey(0)
    key, kp, kx = jax.random.split(key, 3)
    params = init_upsample_params(kp, img_size, patch_size, in_chans, embed_dim,
                                  depths_upsample)

    x = jax.random.normal(kx, (B, L0, C0), jnp.float32)
    y = []
    for i_layer in range(num_layers):
        res = pr // 2 ** (num_layers - i_layer)
        dim = int(embed_dim * 2 ** (num_layers - i_layer))
        key, kh, kc = jax.random.split(key, 3)
        y.append((jax.random.normal(kh, (B, res * res, dim), jnp.float32),
                  jax.random.normal(kc, (B, res * res, dim), jnp.float32)))

    fwd = jax.jit(upsample_forward)
    hidden_states_up, out = fwd(params, x, y)
    jax.block_until_ready(out)
    for h in hidden_states_up:
        jax.block_until_ready(h[0])
        jax.block_until_ready(h[1])

    assert out.shape == (B, in_chans, img_size, img_size)
    print("KERNEL_OK")
</pallas_src>

<mosaic_0001>
module attributes {stable_mosaic.version = 11 : i64} {
  func.func @_lstm_expand_ln_kernel(%arg0: i32, %arg1: memref<1x4x128xf32, #tpu.memory_space<vmem>>, %arg2: memref<1x4x128xf32, #tpu.memory_space<vmem>>, %arg3: memref<1x4x128xf32, #tpu.memory_space<vmem>>, %arg4: memref<128x256xbf16, #tpu.memory_space<vmem>>, %arg5: memref<256x4xf32, #tpu.memory_space<vmem>>, %arg6: memref<4x256xf32, #tpu.memory_space<vmem>>, %arg7: memref<1x256xf32, #tpu.memory_space<vmem>>, %arg8: memref<1x256xf32, #tpu.memory_space<vmem>>, %arg9: memref<1x4x128xf32, #tpu.memory_space<vmem>>, %arg10: memref<1x4x128xf32, #tpu.memory_space<vmem>>, %arg11: memref<1x4x256xf32, #tpu.memory_space<vmem>>) attributes {dimension_semantics = [#tpu.dimension_semantics<parallel>], iteration_bounds = array<i64: 2>, scalar_prefetch = 0 : i64, scratch_operands = 0 : i64, tpu.core_type = #tpu.core_type<tc>, window_params = [{transform_indices = @transform_0, window_bounds = array<i64: 1, 4, 128>}, {transform_indices = @transform_1, window_bounds = array<i64: 1, 4, 128>}, {transform_indices = @transform_2, window_bounds = array<i64: 1, 4, 128>}, {pipeline_mode = #tpu.pipeline_mode<synchronous>, transform_indices = @transform_3, window_bounds = array<i64: 128, 256>}, {pipeline_mode = #tpu.pipeline_mode<synchronous>, transform_indices = @transform_4, window_bounds = array<i64: 256, 4>}, {pipeline_mode = #tpu.pipeline_mode<synchronous>, transform_indices = @transform_5, window_bounds = array<i64: 4, 256>}, {pipeline_mode = #tpu.pipeline_mode<synchronous>, transform_indices = @transform_6, window_bounds = array<i64: 1, 256>}, {pipeline_mode = #tpu.pipeline_mode<synchronous>, transform_indices = @transform_7, window_bounds = array<i64: 1, 256>}, {transform_indices = @transform_8, window_bounds = array<i64: 1, 4, 128>}, {transform_indices = @transform_9, window_bounds = array<i64: 1, 4, 128>}, {transform_indices = @transform_10, window_bounds = array<i64: 1, 4, 256>}]} {
    %c0 = arith.constant 0 : index
    %c0_0 = arith.constant 0 : index
    %c0_1 = arith.constant 0 : index
    %0 = vector.load %arg1[%c0, %c0_0, %c0_1] : memref<1x4x128xf32, #tpu.memory_space<vmem>>, vector<1x4x128xf32>
    %1 = vector.shape_cast %0 : vector<1x4x128xf32> to vector<4x128xf32>
    %c0_2 = arith.constant 0 : index
    %c0_3 = arith.constant 0 : index
    %c0_4 = arith.constant 0 : index
    %2 = vector.load %arg2[%c0_2, %c0_3, %c0_4] : memref<1x4x128xf32, #tpu.memory_space<vmem>>, vector<1x4x128xf32>
    %3 = vector.shape_cast %2 : vector<1x4x128xf32> to vector<4x128xf32>
    %4 = arith.addf %1, %3 : vector<4x128xf32>
    %5 = arith.negf %4 : vector<4x128xf32>
    %6 = math.exp %5 : vector<4x128xf32>
    %cst = arith.constant 1.000000e+00 : f32
    %7 = vector.broadcast %cst : f32 to vector<4x128xf32>
    %8 = arith.addf %7, %6 : vector<4x128xf32>
    %9 = arith.divf %7, %8 : vector<4x128xf32>
    %10 = math.tanh %4 : vector<4x128xf32>
    %c0_5 = arith.constant 0 : index
    %c0_6 = arith.constant 0 : index
    %c0_7 = arith.constant 0 : index
    %11 = vector.load %arg3[%c0_5, %c0_6, %c0_7] : memref<1x4x128xf32, #tpu.memory_space<vmem>>, vector<1x4x128xf32>
    %12 = vector.shape_cast %11 : vector<1x4x128xf32> to vector<4x128xf32>
    %13 = arith.addf %12, %10 : vector<4x128xf32>
    %14 = arith.mulf %9, %13 : vector<4x128xf32>
    %15 = math.tanh %14 : vector<4x128xf32>
    %16 = arith.mulf %9, %15 : vector<4x128xf32>
    %c0_8 = arith.constant 0 : index
    %c0_9 = arith.constant 0 : index
    %c0_10 = arith.constant 0 : index
    %17 = vector.load %arg9[%c0_8, %c0_9, %c0_10] : memref<1x4x128xf32, #tpu.memory_space<vmem>>, vector<1x4x128xf32>
    %18 = vector.shape_cast %17 : vector<1x4x128xf32> to vector<4x128xf32>
    %19 = vector.shape_cast %16 : vector<4x128xf32> to vector<1x4x128xf32>
    tpu.vector_store %arg9[%c0_8, %c0_9, %c0_10], %19 {strides = array<i32>} : memref<1x4x128xf32, #tpu.memory_space<vmem>>, vector<1x4x128xf32>,
    %c0_11 = arith.constant 0 : index
    %c0_12 = arith.constant 0 : index
    %c0_13 = arith.constant 0 : index
    %20 = vector.load %arg10[%c0_11, %c0_12, %c0_13] : memref<1x4x128xf32, #tpu.memory_space<vmem>>, vector<1x4x128xf32>
    %21 = vector.shape_cast %20 : vector<1x4x128xf32> to vector<4x128xf32>
    %22 = vector.shape_cast %14 : vector<4x128xf32> to vector<1x4x128xf32>
    tpu.vector_store %arg10[%c0_11, %c0_12, %c0_13], %22 {strides = array<i32>} : memref<1x4x128xf32, #tpu.memory_space<vmem>>, vector<1x4x128xf32>,
    %23 = arith.truncf %16 : vector<4x128xf32> to vector<4x128xbf16>
    %c0_14 = arith.constant 0 : index
    %c0_15 = arith.constant 0 : index
    %24 = vector.load %arg4[%c0_14, %c0_15] : memref<128x256xbf16, #tpu.memory_space<vmem>>, vector<128x256xbf16>
    %cst_16 = arith.constant dense<0.000000e+00> : vector<4x256xf32>
    %25 = tpu.matmul %23, %24, %cst_16 {dimension_numbers = #tpu.dot_dimension_numbers<[1], [0], [0], [1], [0, 0, 1, 1], [], []>} : vector<4x128xbf16>, vector<128x256xbf16>, vector<4x256xf32> -> vector<4x256xf32>
    %c0_17 = arith.constant 0 : index
    %c0_18 = arith.constant 0 : index
    %26 = vector.load %arg5[%c0_17, %c0_18] : memref<256x4xf32, #tpu.memory_space<vmem>>, vector<256x4xf32>
    %cst_19 = arith.constant dense<0.000000e+00> : vector<4x4xf32>
    %27 = tpu.matmul %25, %26, %cst_19 {dimension_numbers = #tpu.dot_dimension_numbers<[1], [0], [0], [1], [0, 0, 1, 1], [], []>} : vector<4x256xf32>, vector<256x4xf32>, vector<4x4xf32> -> vector<4x4xf32>
    %cst_20 = arith.constant 1.562500e-02 : f32
    %28 = vector.broadcast %cst_20 : f32 to vector<4x4xf32>
    %29 = arith.mulf %27, %28 : vector<4x4xf32>
    %c0_21 = arith.constant 0 : index
    %c0_22 = arith.constant 0 : index
    %30 = vector.load %arg6[%c0_21, %c0_22] : memref<4x256xf32, #tpu.memory_space<vmem>>, vector<4x256xf32>
    %cst_23 = arith.constant dense<0.000000e+00> : vector<4x256xf32>
    %31 = tpu.matmul %29, %30, %cst_23 {dimension_numbers = #tpu.dot_dimension_numbers<[1], [0], [0], [1], [0, 0, 1, 1], [], []>} : vector<4x4xf32>, vector<4x256xf32>, vector<4x256xf32> -> vector<4x256xf32>
    %32 = arith.subf %25, %31 : vector<4x256xf32>
    %33 = arith.mulf %32, %32 : vector<4x256xf32>
    %c0_24 = arith.constant 0 : index
    %c0_25 = arith.constant 0 : index
    %34 = vector.load %arg5[%c0_24, %c0_25] : memref<256x4xf32, #tpu.memory_space<vmem>>, vector<256x4xf32>
    %cst_26 = arith.constant dense<0.000000e+00> : vector<4x4xf32>
    %35 = tpu.matmul %33, %34, %cst_26 {dimension_numbers = #tpu.dot_dimension_numbers<[1], [0], [0], [1], [0, 0, 1, 1], [], []>} : vector<4x256xf32>, vector<256x4xf32>, vector<4x4xf32> -> vector<4x4xf32>
    %cst_27 = arith.constant 1.562500e-02 : f32
    %36 = vector.broadcast %cst_27 : f32 to vector<4x4xf32>
    %37 = arith.mulf %35, %36 : vector<4x4xf32>
    %c0_28 = arith.constant 0 : index
    %c0_29 = arith.constant 0 : index
    %38 = vector.load %arg6[%c0_28, %c0_29] : memref<4x256xf32, #tpu.memory_space<vmem>>, vector<4x256xf32>
    %cst_30 = arith.constant dense<0.000000e+00> : vector<4x256xf32>
    %39 = tpu.matmul %37, %38, %cst_30 {dimension_numbers = #tpu.dot_dimension_numbers<[1], [0], [0], [1], [0, 0, 1, 1], [], []>} : vector<4x4xf32>, vector<4x256xf32>, vector<4x256xf32> -> vector<4x256xf32>
    %cst_31 = arith.constant 9.99999974E-6 : f32
    %40 = vector.broadcast %cst_31 : f32 to vector<4x256xf32>
    %41 = arith.addf %39, %40 : vector<4x256xf32>
    %42 = math.rsqrt %41 : vector<4x256xf32>
    %43 = arith.mulf %32, %42 : vector<4x256xf32>
    %c0_32 = arith.constant 0 : index
    %c0_33 = arith.constant 0 : index
    %44 = vector.load %arg7[%c0_32, %c0_33] : memref<1x256xf32, #tpu.memory_space<vmem>>, vector<1x256xf32>
    %45 = vector.broadcast %44 : vector<1x256xf32> to vector<4x256xf32>
    %46 = arith.mulf %43, %45 : vector<4x256xf32>
    %c0_34 = arith.constant 0 : index
    %c0_35 = arith.constant 0 : index
    %47 = vector.load %arg8[%c0_34, %c0_35] : memref<1x256xf32, #tpu.memory_space<vmem>>, vector<1x256xf32>
    %48 = vector.broadcast %47 : vector<1x256xf32> to vector<4x256xf32>
    %49 = arith.addf %46, %48 : vector<4x256xf32>
    %c0_36 = arith.constant 0 : index
    %c0_37 = arith.constant 0 : index
    %c0_38 = arith.constant 0 : index
    %50 = vector.load %arg11[%c0_36, %c0_37, %c0_38] : memref<1x4x256xf32, #tpu.memory_space<vmem>>, vector<1x4x256xf32>
    %51 = vector.shape_cast %50 : vector<1x4x256xf32> to vector<4x256xf32>
    %52 = vector.shape_cast %49 : vector<4x256xf32> to vector<1x4x256xf32>
    tpu.vector_store %arg11[%c0_36, %c0_37, %c0_38], %52 {strides = array<i32>} : memref<1x4x256xf32, #tpu.memory_space<vmem>>, vector<1x4x256xf32>,
    return
  }
  func.func @transform_0(%arg0: i32) -> (i32, i32, i32) {
    %c0_i32 = arith.constant 0 : i32
    %c0_i32_0 = arith.constant 0 : i32
    %c0_i32_1 = arith.constant 0 : i32
    return %arg0, %c0_i32, %c0_i32_0 : i32, i32, i32
  }
  func.func @transform_1(%arg0: i32) -> (i32, i32, i32) {
    %c0_i32 = arith.constant 0 : i32
    %c0_i32_0 = arith.constant 0 : i32
    %c0_i32_1 = arith.constant 0 : i32
    return %arg0, %c0_i32, %c0_i32_0 : i32, i32, i32
  }
  func.func @transform_2(%arg0: i32) -> (i32, i32, i32) {
    %c0_i32 = arith.constant 0 : i32
    %c0_i32_0 = arith.constant 0 : i32
    %c0_i32_1 = arith.constant 0 : i32
    return %arg0, %c0_i32, %c0_i32_0 : i32, i32, i32
  }
  func.func @transform_3(%arg0: i32) -> (i32, i32) {
    %c0_i32 = arith.constant 0 : i32
    %c0_i32_0 = arith.constant 0 : i32
    %c0_i32_1 = arith.constant 0 : i32
    return %c0_i32, %c0_i32_0 : i32, i32
  }
  func.func @transform_4(%arg0: i32) -> (i32, i32) {
    %c0_i32 = arith.constant 0 : i32
    %c0_i32_0 = arith.constant 0 : i32
    %c0_i32_1 = arith.constant 0 : i32
    return %c0_i32, %c0_i32_0 : i32, i32
  }
  func.func @transform_5(%arg0: i32) -> (i32, i32) {
    %c0_i32 = arith.constant 0 : i32
    %c0_i32_0 = arith.constant 0 : i32
    %c0_i32_1 = arith.constant 0 : i32
    return %c0_i32, %c0_i32_0 : i32, i32
  }
  func.func @transform_6(%arg0: i32) -> (i32, i32) {
    %c0_i32 = arith.constant 0 : i32
    %c0_i32_0 = arith.constant 0 : i32
    %c0_i32_1 = arith.constant 0 : i32
    return %c0_i32, %c0_i32_0 : i32, i32
  }
  func.func @transform_7(%arg0: i32) -> (i32, i32) {
    %c0_i32 = arith.constant 0 : i32
    %c0_i32_0 = arith.constant 0 : i32
    %c0_i32_1 = arith.constant 0 : i32
    return %c0_i32, %c0_i32_0 : i32, i32
  }
  func.func @transform_8(%arg0: i32) -> (i32, i32, i32) {
    %c0_i32 = arith.constant 0 : i32
    %c0_i32_0 = arith.constant 0 : i32
    %c0_i32_1 = arith.constant 0 : i32
    return %arg0, %c0_i32, %c0_i32_0 : i32, i32, i32
  }
  func.func @transform_9(%arg0: i32) -> (i32, i32, i32) {
    %c0_i32 = arith.constant 0 : i32
    %c0_i32_0 = arith.constant 0 : i32
    %c0_i32_1 = arith.constant 0 : i32
    return %arg0, %c0_i32, %c0_i32_0 : i32, i32, i32
  }
  func.func @transform_10(%arg0: i32) -> (i32, i32, i32) {
    %c0_i32 = arith.constant 0 : i32
    %c0_i32_0 = arith.constant 0 : i32
    %c0_i32_1 = arith.constant 0 : i32
    return %arg0, %c0_i32, %c0_i32_0 : i32, i32, i32
  }
}

module attributes {stable_mosaic.version = 11 : i64} {
  func.func @_lstm_expand_ln_kernel(%arg0: i32, %arg1: memref<1x16x64xf32, #tpu.memory_space<vmem>>, %arg2: memref<1x16x64xf32, #tpu.memory_space<vmem>>, %arg3: memref<1x16x64xf32, #tpu.memory_space<vmem>>, %arg4: memref<64x128xbf16, #tpu.memory_space<vmem>>, %arg5: memref<128x4xf32, #tpu.memory_space<vmem>>, %arg6: memref<4x128xf32, #tpu.memory_space<vmem>>, %arg7: memref<1x128xf32, #tpu.memory_space<vmem>>, %arg8: memref<1x128xf32, #tpu.memory_space<vmem>>, %arg9: memref<1x16x64xf32, #tpu.memory_space<vmem>>, %arg10: memref<1x16x64xf32, #tpu.memory_space<vmem>>, %arg11: memref<1x16x128xf32, #tpu.memory_space<vmem>>) attributes {dimension_semantics = [#tpu.dimension_semantics<parallel>], iteration_bounds = array<i64: 2>, scalar_prefetch = 0 : i64, scratch_operands = 0 : i64, tpu.core_type = #tpu.core_type<tc>, window_params = [{transform_indices = @transform_0, window_bounds = array<i64: 1, 16, 64>}, {transform_indices = @transform_1, window_bounds = array<i64: 1, 16, 64>}, {transform_indices = @transform_2, window_bounds = array<i64: 1, 16, 64>}, {pipeline_mode = #tpu.pipeline_mode<synchronous>, transform_indices = @transform_3, window_bounds = array<i64: 64, 128>}, {pipeline_mode = #tpu.pipeline_mode<synchronous>, transform_indices = @transform_4, window_bounds = array<i64: 128, 4>}, {pipeline_mode = #tpu.pipeline_mode<synchronous>, transform_indices = @transform_5, window_bounds = array<i64: 4, 128>}, {pipeline_mode = #tpu.pipeline_mode<synchronous>, transform_indices = @transform_6, window_bounds = array<i64: 1, 128>}, {pipeline_mode = #tpu.pipeline_mode<synchronous>, transform_indices = @transform_7, window_bounds = array<i64: 1, 128>}, {transform_indices = @transform_8, window_bounds = array<i64: 1, 16, 64>}, {transform_indices = @transform_9, window_bounds = array<i64: 1, 16, 64>}, {transform_indices = @transform_10, window_bounds = array<i64: 1, 16, 128>}]} {
    %c0 = arith.constant 0 : index
    %c0_0 = arith.constant 0 : index
    %c0_1 = arith.constant 0 : index
    %0 = vector.load %arg1[%c0, %c0_0, %c0_1] : memref<1x16x64xf32, #tpu.memory_space<vmem>>, vector<1x16x64xf32>
    %1 = vector.shape_cast %0 : vector<1x16x64xf32> to vector<16x64xf32>
    %c0_2 = arith.constant 0 : index
    %c0_3 = arith.constant 0 : index
    %c0_4 = arith.constant 0 : index
    %2 = vector.load %arg2[%c0_2, %c0_3, %c0_4] : memref<1x16x64xf32, #tpu.memory_space<vmem>>, vector<1x16x64xf32>
    %3 = vector.shape_cast %2 : vector<1x16x64xf32> to vector<16x64xf32>
    %4 = arith.addf %1, %3 : vector<16x64xf32>
    %5 = arith.negf %4 : vector<16x64xf32>
    %6 = math.exp %5 : vector<16x64xf32>
    %cst = arith.constant 1.000000e+00 : f32
    %7 = vector.broadcast %cst : f32 to vector<16x64xf32>
    %8 = arith.addf %7, %6 : vector<16x64xf32>
    %9 = arith.divf %7, %8 : vector<16x64xf32>
    %10 = math.tanh %4 : vector<16x64xf32>
    %c0_5 = arith.constant 0 : index
    %c0_6 = arith.constant 0 : index
    %c0_7 = arith.constant 0 : index
    %11 = vector.load %arg3[%c0_5, %c0_6, %c0_7] : memref<1x16x64xf32, #tpu.memory_space<vmem>>, vector<1x16x64xf32>
    %12 = vector.shape_cast %11 : vector<1x16x64xf32> to vector<16x64xf32>
    %13 = arith.addf %12, %10 : vector<16x64xf32>
    %14 = arith.mulf %9, %13 : vector<16x64xf32>
    %15 = math.tanh %14 : vector<16x64xf32>
    %16 = arith.mulf %9, %15 : vector<16x64xf32>
    %c0_8 = arith.constant 0 : index
    %c0_9 = arith.constant 0 : index
    %c0_10 = arith.constant 0 : index
    %17 = vector.load %arg9[%c0_8, %c0_9, %c0_10] : memref<1x16x64xf32, #tpu.memory_space<vmem>>, vector<1x16x64xf32>
    %18 = vector.shape_cast %17 : vector<1x16x64xf32> to vector<16x64xf32>
    %19 = vector.shape_cast %16 : vector<16x64xf32> to vector<1x16x64xf32>
    tpu.vector_store %arg9[%c0_8, %c0_9, %c0_10], %19 {strides = array<i32>} : memref<1x16x64xf32, #tpu.memory_space<vmem>>, vector<1x16x64xf32>,
    %c0_11 = arith.constant 0 : index
    %c0_12 = arith.constant 0 : index
    %c0_13 = arith.constant 0 : index
    %20 = vector.load %arg10[%c0_11, %c0_12, %c0_13] : memref<1x16x64xf32, #tpu.memory_space<vmem>>, vector<1x16x64xf32>
    %21 = vector.shape_cast %20 : vector<1x16x64xf32> to vector<16x64xf32>
    %22 = vector.shape_cast %14 : vector<16x64xf32> to vector<1x16x64xf32>
    tpu.vector_store %arg10[%c0_11, %c0_12, %c0_13], %22 {strides = array<i32>} : memref<1x16x64xf32, #tpu.memory_space<vmem>>, vector<1x16x64xf32>,
    %23 = arith.truncf %16 : vector<16x64xf32> to vector<16x64xbf16>
    %c0_14 = arith.constant 0 : index
    %c0_15 = arith.constant 0 : index
    %24 = vector.load %arg4[%c0_14, %c0_15] : memref<64x128xbf16, #tpu.memory_space<vmem>>, vector<64x128xbf16>
    %cst_16 = arith.constant dense<0.000000e+00> : vector<16x128xf32>
    %25 = tpu.matmul %23, %24, %cst_16 {dimension_numbers = #tpu.dot_dimension_numbers<[1], [0], [0], [1], [0, 0, 1, 1], [], []>} : vector<16x64xbf16>, vector<64x128xbf16>, vector<16x128xf32> -> vector<16x128xf32>
    %c0_17 = arith.constant 0 : index
    %c0_18 = arith.constant 0 : index
    %26 = vector.load %arg5[%c0_17, %c0_18] : memref<128x4xf32, #tpu.memory_space<vmem>>, vector<128x4xf32>
    %cst_19 = arith.constant dense<0.000000e+00> : vector<16x4xf32>
    %27 = tpu.matmul %25, %26, %cst_19 {dimension_numbers = #tpu.dot_dimension_numbers<[1], [0], [0], [1], [0, 0, 1, 1], [], []>} : vector<16x128xf32>, vector<128x4xf32>, vector<16x4xf32> -> vector<16x4xf32>
    %cst_20 = arith.constant 3.125000e-02 : f32
    %28 = vector.broadcast %cst_20 : f32 to vector<16x4xf32>
    %29 = arith.mulf %27, %28 : vector<16x4xf32>
    %c0_21 = arith.constant 0 : index
    %c0_22 = arith.constant 0 : index
    %30 = vector.load %arg6[%c0_21, %c0_22] : memref<4x128xf32, #tpu.memory_space<vmem>>, vector<4x128xf32>
    %cst_23 = arith.constant dense<0.000000e+00> : vector<16x128xf32>
    %31 = tpu.matmul %29, %30, %cst_23 {dimension_numbers = #tpu.dot_dimension_numbers<[1], [0], [0], [1], [0, 0, 1, 1], [], []>} : vector<16x4xf32>, vector<4x128xf32>, vector<16x128xf32> -> vector<16x128xf32>
    %32 = arith.subf %25, %31 : vector<16x128xf32>
    %33 = arith.mulf %32, %32 : vector<16x128xf32>
    %c0_24 = arith.constant 0 : index
    %c0_25 = arith.constant 0 : index
    %34 = vector.load %arg5[%c0_24, %c0_25] : memref<128x4xf32, #tpu.memory_space<vmem>>, vector<128x4xf32>
    %cst_26 = arith.constant dense<0.000000e+00> : vector<16x4xf32>
    %35 = tpu.matmul %33, %34, %cst_26 {dimension_numbers = #tpu.dot_dimension_numbers<[1], [0], [0], [1], [0, 0, 1, 1], [], []>} : vector<16x128xf32>, vector<128x4xf32>, vector<16x4xf32> -> vector<16x4xf32>
    %cst_27 = arith.constant 3.125000e-02 : f32
    %36 = vector.broadcast %cst_27 : f32 to vector<16x4xf32>
    %37 = arith.mulf %35, %36 : vector<16x4xf32>
    %c0_28 = arith.constant 0 : index
    %c0_29 = arith.constant 0 : index
    %38 = vector.load %arg6[%c0_28, %c0_29] : memref<4x128xf32, #tpu.memory_space<vmem>>, vector<4x128xf32>
    %cst_30 = arith.constant dense<0.000000e+00> : vector<16x128xf32>
    %39 = tpu.matmul %37, %38, %cst_30 {dimension_numbers = #tpu.dot_dimension_numbers<[1], [0], [0], [1], [0, 0, 1, 1], [], []>} : vector<16x4xf32>, vector<4x128xf32>, vector<16x128xf32> -> vector<16x128xf32>
    %cst_31 = arith.constant 9.99999974E-6 : f32
    %40 = vector.broadcast %cst_31 : f32 to vector<16x128xf32>
    %41 = arith.addf %39, %40 : vector<16x128xf32>
    %42 = math.rsqrt %41 : vector<16x128xf32>
    %43 = arith.mulf %32, %42 : vector<16x128xf32>
    %c0_32 = arith.constant 0 : index
    %c0_33 = arith.constant 0 : index
    %44 = vector.load %arg7[%c0_32, %c0_33] : memref<1x128xf32, #tpu.memory_space<vmem>>, vector<1x128xf32>
    %45 = vector.broadcast %44 : vector<1x128xf32> to vector<16x128xf32>
    %46 = arith.mulf %43, %45 : vector<16x128xf32>
    %c0_34 = arith.constant 0 : index
    %c0_35 = arith.constant 0 : index
    %47 = vector.load %arg8[%c0_34, %c0_35] : memref<1x128xf32, #tpu.memory_space<vmem>>, vector<1x128xf32>
    %48 = vector.broadcast %47 : vector<1x128xf32> to vector<16x128xf32>
    %49 = arith.addf %46, %48 : vector<16x128xf32>
    %c0_36 = arith.constant 0 : index
    %c0_37 = arith.constant 0 : index
    %c0_38 = arith.constant 0 : index
    %50 = vector.load %arg11[%c0_36, %c0_37, %c0_38] : memref<1x16x128xf32, #tpu.memory_space<vmem>>, vector<1x16x128xf32>
    %51 = vector.shape_cast %50 : vector<1x16x128xf32> to vector<16x128xf32>
    %52 = vector.shape_cast %49 : vector<16x128xf32> to vector<1x16x128xf32>
    tpu.vector_store %arg11[%c0_36, %c0_37, %c0_38], %52 {strides = array<i32>} : memref<1x16x128xf32, #tpu.memory_space<vmem>>, vector<1x16x128xf32>,
    return
  }
  func.func @transform_0(%arg0: i32) -> (i32, i32, i32) {
    %c0_i32 = arith.constant 0 : i32
    %c0_i32_0 = arith.constant 0 : i32
    %c0_i32_1 = arith.constant 0 : i32
    return %arg0, %c0_i32, %c0_i32_0 : i32, i32, i32
  }
  func.func @transform_1(%arg0: i32) -> (i32, i32, i32) {
    %c0_i32 = arith.constant 0 : i32
    %c0_i32_0 = arith.constant 0 : i32
    %c0_i32_1 = arith.constant 0 : i32
    return %arg0, %c0_i32, %c0_i32_0 : i32, i32, i32
  }
  func.func @transform_2(%arg0: i32) -> (i32, i32, i32) {
    %c0_i32 = arith.constant 0 : i32
    %c0_i32_0 = arith.constant 0 : i32
    %c0_i32_1 = arith.constant 0 : i32
    return %arg0, %c0_i32, %c0_i32_0 : i32, i32, i32
  }
  func.func @transform_3(%arg0: i32) -> (i32, i32) {
    %c0_i32 = arith.constant 0 : i32
    %c0_i32_0 = arith.constant 0 : i32
    %c0_i32_1 = arith.constant 0 : i32
    return %c0_i32, %c0_i32_0 : i32, i32
  }
  func.func @transform_4(%arg0: i32) -> (i32, i32) {
    %c0_i32 = arith.constant 0 : i32
    %c0_i32_0 = arith.constant 0 : i32
    %c0_i32_1 = arith.constant 0 : i32
    return %c0_i32, %c0_i32_0 : i32, i32
  }
  func.func @transform_5(%arg0: i32) -> (i32, i32) {
    %c0_i32 = arith.constant 0 : i32
    %c0_i32_0 = arith.constant 0 : i32
    %c0_i32_1 = arith.constant 0 : i32
    return %c0_i32, %c0_i32_0 : i32, i32
  }
  func.func @transform_6(%arg0: i32) -> (i32, i32) {
    %c0_i32 = arith.constant 0 : i32
    %c0_i32_0 = arith.constant 0 : i32
    %c0_i32_1 = arith.constant 0 : i32
    return %c0_i32, %c0_i32_0 : i32, i32
  }
  func.func @transform_7(%arg0: i32) -> (i32, i32) {
    %c0_i32 = arith.constant 0 : i32
    %c0_i32_0 = arith.constant 0 : i32
    %c0_i32_1 = arith.constant 0 : i32
    return %c0_i32, %c0_i32_0 : i32, i32
  }
  func.func @transform_8(%arg0: i32) -> (i32, i32, i32) {
    %c0_i32 = arith.constant 0 : i32
    %c0_i32_0 = arith.constant 0 : i32
    %c0_i32_1 = arith.constant 0 : i32
    return %arg0, %c0_i32, %c0_i32_0 : i32, i32, i32
  }
  func.func @transform_9(%arg0: i32) -> (i32, i32, i32) {
    %c0_i32 = arith.constant 0 : i32
    %c0_i32_0 = arith.constant 0 : i32
    %c0_i32_1 = arith.constant 0 : i32
    return %arg0, %c0_i32, %c0_i32_0 : i32, i32, i32
  }
  func.func @transform_10(%arg0: i32) -> (i32, i32, i32) {
    %c0_i32 = arith.constant 0 : i32
    %c0_i32_0 = arith.constant 0 : i32
    %c0_i32_1 = arith.constant 0 : i32
    return %arg0, %c0_i32, %c0_i32_0 : i32, i32, i32
  }
}

module attributes {stable_mosaic.version = 11 : i64} {
  func.func @_deconv_gn_lrelu_kernel(%arg0: i32, %arg1: memref<1x64x128xbf16, #tpu.memory_space<vmem>>, %arg2: memref<128x128xbf16, #tpu.memory_space<vmem>>, %arg3: memref<1x128xf32, #tpu.memory_space<vmem>>, %arg4: memref<128x16xf32, #tpu.memory_space<vmem>>, %arg5: memref<16x128xf32, #tpu.memory_space<vmem>>, %arg6: memref<1x128xf32, #tpu.memory_space<vmem>>, %arg7: memref<1x128xf32, #tpu.memory_space<vmem>>, %arg8: memref<1x64x128xf32, #tpu.memory_space<vmem>>) attributes {dimension_semantics = [#tpu.dimension_semantics<parallel>], iteration_bounds = array<i64: 2>, scalar_prefetch = 0 : i64, scratch_operands = 0 : i64, tpu.core_type = #tpu.core_type<tc>, window_params = [{transform_indices = @transform_0, window_bounds = array<i64: 1, 64, 128>}, {pipeline_mode = #tpu.pipeline_mode<synchronous>, transform_indices = @transform_1, window_bounds = array<i64: 128, 128>}, {pipeline_mode = #tpu.pipeline_mode<synchronous>, transform_indices = @transform_2, window_bounds = array<i64: 1, 128>}, {pipeline_mode = #tpu.pipeline_mode<synchronous>, transform_indices = @transform_3, window_bounds = array<i64: 128, 16>}, {pipeline_mode = #tpu.pipeline_mode<synchronous>, transform_indices = @transform_4, window_bounds = array<i64: 16, 128>}, {pipeline_mode = #tpu.pipeline_mode<synchronous>, transform_indices = @transform_5, window_bounds = array<i64: 1, 128>}, {pipeline_mode = #tpu.pipeline_mode<synchronous>, transform_indices = @transform_6, window_bounds = array<i64: 1, 128>}, {transform_indices = @transform_7, window_bounds = array<i64: 1, 64, 128>}]} {
    %c0 = arith.constant 0 : index
    %c0_0 = arith.constant 0 : index
    %c0_1 = arith.constant 0 : index
    %0 = vector.load %arg1[%c0, %c0_0, %c0_1] : memref<1x64x128xbf16, #tpu.memory_space<vmem>>, vector<1x64x128xbf16>
    %1 = vector.shape_cast %0 : vector<1x64x128xbf16> to vector<64x128xbf16>
    %c0_2 = arith.constant 0 : index
    %c0_3 = arith.constant 0 : index
    %2 = vector.load %arg2[%c0_2, %c0_3] : memref<128x128xbf16, #tpu.memory_space<vmem>>, vector<128x128xbf16>
    %cst = arith.constant dense<0.000000e+00> : vector<64x128xf32>
    %3 = tpu.matmul %1, %2, %cst {dimension_numbers = #tpu.dot_dimension_numbers<[1], [0], [0], [1], [0, 0, 1, 1], [], []>} : vector<64x128xbf16>, vector<128x128xbf16>, vector<64x128xf32> -> vector<64x128xf32>
    %c0_4 = arith.constant 0 : index
    %c0_5 = arith.constant 0 : index
    %4 = vector.load %arg3[%c0_4, %c0_5] : memref<1x128xf32, #tpu.memory_space<vmem>>, vector<1x128xf32>
    %5 = vector.broadcast %4 : vector<1x128xf32> to vector<64x128xf32>
    %6 = arith.addf %3, %5 : vector<64x128xf32>
    %cst_6 = arith.constant dense<0.000000e+00> : vector<128xf32>
    %7 = vector.multi_reduction <add>, %6, %cst_6 [0] : vector<64x128xf32> to vector<128xf32>
    %8 = vector.shape_cast %7 : vector<128xf32> to vector<1x128xf32>
    %c0_7 = arith.constant 0 : index
    %c0_8 = arith.constant 0 : index
    %9 = vector.load %arg4[%c0_7, %c0_8] : memref<128x16xf32, #tpu.memory_space<vmem>>, vector<128x16xf32>
    %cst_9 = arith.constant dense<0.000000e+00> : vector<1x16xf32>
    %10 = tpu.matmul %8, %9, %cst_9 {dimension_numbers = #tpu.dot_dimension_numbers<[1], [0], [0], [1], [0, 0, 1, 1], [], []>} : vector<1x128xf32>, vector<128x16xf32>, vector<1x16xf32> -> vector<1x16xf32>
    %cst_10 = arith.constant 0.001953125 : f32
    %11 = vector.broadcast %cst_10 : f32 to vector<1x16xf32>
    %12 = arith.mulf %10, %11 : vector<1x16xf32>
    %c0_11 = arith.constant 0 : index
    %c0_12 = arith.constant 0 : index
    %13 = vector.load %arg5[%c0_11, %c0_12] : memref<16x128xf32, #tpu.memory_space<vmem>>, vector<16x128xf32>
    %cst_13 = arith.constant dense<0.000000e+00> : vector<1x128xf32>
    %14 = tpu.matmul %12, %13, %cst_13 {dimension_numbers = #tpu.dot_dimension_numbers<[1], [0], [0], [1], [0, 0, 1, 1], [], []>} : vector<1x16xf32>, vector<16x128xf32>, vector<1x128xf32> -> vector<1x128xf32>
    %15 = vector.broadcast %14 : vector<1x128xf32> to vector<64x128xf32>
    %16 = arith.subf %6, %15 : vector<64x128xf32>
    %17 = arith.mulf %16, %16 : vector<64x128xf32>
    %cst_14 = arith.constant dense<0.000000e+00> : vector<128xf32>
    %18 = vector.multi_reduction <add>, %17, %cst_14 [0] : vector<64x128xf32> to vector<128xf32>
    %19 = vector.shape_cast %18 : vector<128xf32> to vector<1x128xf32>
    %c0_15 = arith.constant 0 : index
    %c0_16 = arith.constant 0 : index
    %20 = vector.load %arg4[%c0_15, %c0_16] : memref<128x16xf32, #tpu.memory_space<vmem>>, vector<128x16xf32>
    %cst_17 = arith.constant dense<0.000000e+00> : vector<1x16xf32>
    %21 = tpu.matmul %19, %20, %cst_17 {dimension_numbers = #tpu.dot_dimension_numbers<[1], [0], [0], [1], [0, 0, 1, 1], [], []>} : vector<1x128xf32>, vector<128x16xf32>, vector<1x16xf32> -> vector<1x16xf32>
    %cst_18 = arith.constant 0.001953125 : f32
    %22 = vector.broadcast %cst_18 : f32 to vector<1x16xf32>
    %23 = arith.mulf %21, %22 : vector<1x16xf32>
    %cst_19 = arith.constant 9.99999974E-6 : f32
    %24 = vector.broadcast %cst_19 : f32 to vector<1x16xf32>
    %25 = arith.addf %23, %24 : vector<1x16xf32>
    %26 = math.rsqrt %25 : vector<1x16xf32>
    %c0_20 = arith.constant 0 : index
    %c0_21 = arith.constant 0 : index
    %27 = vector.load %arg5[%c0_20, %c0_21] : memref<16x128xf32, #tpu.memory_space<vmem>>, vector<16x128xf32>
    %cst_22 = arith.constant dense<0.000000e+00> : vector<1x128xf32>
    %28 = tpu.matmul %26, %27, %cst_22 {dimension_numbers = #tpu.dot_dimension_numbers<[1], [0], [0], [1], [0, 0, 1, 1], [], []>} : vector<1x16xf32>, vector<16x128xf32>, vector<1x128xf32> -> vector<1x128xf32>
    %29 = vector.broadcast %28 : vector<1x128xf32> to vector<64x128xf32>
    %30 = arith.mulf %16, %29 : vector<64x128xf32>
    %c0_23 = arith.constant 0 : index
    %c0_24 = arith.constant 0 : index
    %31 = vector.load %arg6[%c0_23, %c0_24] : memref<1x128xf32, #tpu.memory_space<vmem>>, vector<1x128xf32>
    %32 = vector.broadcast %31 : vector<1x128xf32> to vector<64x128xf32>
    %33 = arith.mulf %30, %32 : vector<64x128xf32>
    %c0_25 = arith.constant 0 : index
    %c0_26 = arith.constant 0 : index
    %34 = vector.load %arg7[%c0_25, %c0_26] : memref<1x128xf32, #tpu.memory_space<vmem>>, vector<1x128xf32>
    %35 = vector.broadcast %34 : vector<1x128xf32> to vector<64x128xf32>
    %36 = arith.addf %33, %35 : vector<64x128xf32>
    %cst_27 = arith.constant 0.000000e+00 : f32
    %37 = vector.broadcast %cst_27 : f32 to vector<64x128xf32>
    %38 = arith.cmpf ogt, %36, %37 : vector<64x128xf32>
    %cst_28 = arith.constant 2.000000e-01 : f32
    %39 = vector.broadcast %cst_28 : f32 to vector<64x128xf32>
    %40 = arith.mulf %39, %36 : vector<64x128xf32>
    %41 = arith.select %38, %36, %40 : vector<64x128xi1>, vector<64x128xf32>
    %c0_29 = arith.constant 0 : index
    %c0_30 = arith.constant 0 : index
    %c0_31 = arith.constant 0 : index
    %42 = vector.load %arg8[%c0_29, %c0_30, %c0_31] : memref<1x64x128xf32, #tpu.memory_space<vmem>>, vector<1x64x128xf32>
    %43 = vector.shape_cast %42 : vector<1x64x128xf32> to vector<64x128xf32>
    %44 = vector.shape_cast %41 : vector<64x128xf32> to vector<1x64x128xf32>
    tpu.vector_store %arg8[%c0_29, %c0_30, %c0_31], %44 {strides = array<i32>} : memref<1x64x128xf32, #tpu.memory_space<vmem>>, vector<1x64x128xf32>,
    return
  }
  func.func @transform_0(%arg0: i32) -> (i32, i32, i32) {
    %c0_i32 = arith.constant 0 : i32
    %c0_i32_0 = arith.constant 0 : i32
    %c0_i32_1 = arith.constant 0 : i32
    return %arg0, %c0_i32, %c0_i32_0 : i32, i32, i32
  }
  func.func @transform_1(%arg0: i32) -> (i32, i32) {
    %c0_i32 = arith.constant 0 : i32
    %c0_i32_0 = arith.constant 0 : i32
    %c0_i32_1 = arith.constant 0 : i32
    return %c0_i32, %c0_i32_0 : i32, i32
  }
  func.func @transform_2(%arg0: i32) -> (i32, i32) {
    %c0_i32 = arith.constant 0 : i32
    %c0_i32_0 = arith.constant 0 : i32
    %c0_i32_1 = arith.constant 0 : i32
    return %c0_i32, %c0_i32_0 : i32, i32
  }
  func.func @transform_3(%arg0: i32) -> (i32, i32) {
    %c0_i32 = arith.constant 0 : i32
    %c0_i32_0 = arith.constant 0 : i32
    %c0_i32_1 = arith.constant 0 : i32
    return %c0_i32, %c0_i32_0 : i32, i32
  }
  func.func @transform_4(%arg0: i32) -> (i32, i32) {
    %c0_i32 = arith.constant 0 : i32
    %c0_i32_0 = arith.constant 0 : i32
    %c0_i32_1 = arith.constant 0 : i32
    return %c0_i32, %c0_i32_0 : i32, i32
  }
  func.func @transform_5(%arg0: i32) -> (i32, i32) {
    %c0_i32 = arith.constant 0 : i32
    %c0_i32_0 = arith.constant 0 : i32
    %c0_i32_1 = arith.constant 0 : i32
    return %c0_i32, %c0_i32_0 : i32, i32
  }
  func.func @transform_6(%arg0: i32) -> (i32, i32) {
    %c0_i32 = arith.constant 0 : i32
    %c0_i32_0 = arith.constant 0 : i32
    %c0_i32_1 = arith.constant 0 : i32
    return %c0_i32, %c0_i32_0 : i32, i32
  }
  func.func @transform_7(%arg0: i32) -> (i32, i32, i32) {
    %c0_i32 = arith.constant 0 : i32
    %c0_i32_0 = arith.constant 0 : i32
    %c0_i32_1 = arith.constant 0 : i32
    return %arg0, %c0_i32, %c0_i32_0 : i32, i32, i32
  }
}

module attributes {stable_mosaic.version = 11 : i64} {
  func.func @_deconv_sigmoid_kernel(%arg0: i32, %arg1: memref<1x256x128xbf16, #tpu.memory_space<vmem>>, %arg2: memref<128x16xbf16, #tpu.memory_space<vmem>>, %arg3: memref<1x16xf32, #tpu.memory_space<vmem>>, %arg4: memref<1x256x16xf32, #tpu.memory_space<vmem>>) attributes {dimension_semantics = [#tpu.dimension_semantics<parallel>], iteration_bounds = array<i64: 2>, scalar_prefetch = 0 : i64, scratch_operands = 0 : i64, tpu.core_type = #tpu.core_type<tc>, window_params = [{transform_indices = @transform_0, window_bounds = array<i64: 1, 256, 128>}, {pipeline_mode = #tpu.pipeline_mode<synchronous>, transform_indices = @transform_1, window_bounds = array<i64: 128, 16>}, {pipeline_mode = #tpu.pipeline_mode<synchronous>, transform_indices = @transform_2, window_bounds = array<i64: 1, 16>}, {transform_indices = @transform_3, window_bounds = array<i64: 1, 256, 16>}]} {
    %c0 = arith.constant 0 : index
    %c0_0 = arith.constant 0 : index
    %c0_1 = arith.constant 0 : index
    %0 = vector.load %arg1[%c0, %c0_0, %c0_1] : memref<1x256x128xbf16, #tpu.memory_space<vmem>>, vector<1x256x128xbf16>
    %1 = vector.shape_cast %0 : vector<1x256x128xbf16> to vector<256x128xbf16>
    %c0_2 = arith.constant 0 : index
    %c0_3 = arith.constant 0 : index
    %2 = vector.load %arg2[%c0_2, %c0_3] : memref<128x16xbf16, #tpu.memory_space<vmem>>, vector<128x16xbf16>
    %cst = arith.constant dense<0.000000e+00> : vector<256x16xf32>
    %3 = tpu.matmul %1, %2, %cst {dimension_numbers = #tpu.dot_dimension_numbers<[1], [0], [0], [1], [0, 0, 1, 1], [], []>} : vector<256x128xbf16>, vector<128x16xbf16>, vector<256x16xf32> -> vector<256x16xf32>
    %c0_4 = arith.constant 0 : index
    %c0_5 = arith.constant 0 : index
    %4 = vector.load %arg3[%c0_4, %c0_5] : memref<1x16xf32, #tpu.memory_space<vmem>>, vector<1x16xf32>
    %5 = vector.broadcast %4 : vector<1x16xf32> to vector<256x16xf32>
    %6 = arith.addf %3, %5 : vector<256x16xf32>
    %7 = arith.negf %6 : vector<256x16xf32>
    %8 = math.exp %7 : vector<256x16xf32>
    %cst_6 = arith.constant 1.000000e+00 : f32
    %9 = vector.broadcast %cst_6 : f32 to vector<256x16xf32>
    %10 = arith.addf %9, %8 : vector<256x16xf32>
    %11 = arith.divf %9, %10 : vector<256x16xf32>
    %c0_7 = arith.constant 0 : index
    %c0_8 = arith.constant 0 : index
    %c0_9 = arith.constant 0 : index
    %12 = vector.load %arg4[%c0_7, %c0_8, %c0_9] : memref<1x256x16xf32, #tpu.memory_space<vmem>>, vector<1x256x16xf32>
    %13 = vector.shape_cast %12 : vector<1x256x16xf32> to vector<256x16xf32>
    %14 = vector.shape_cast %11 : vector<256x16xf32> to vector<1x256x16xf32>
    tpu.vector_store %arg4[%c0_7, %c0_8, %c0_9], %14 {strides = array<i32>} : memref<1x256x16xf32, #tpu.memory_space<vmem>>, vector<1x256x16xf32>,
    return
  }
  func.func @transform_0(%arg0: i32) -> (i32, i32, i32) {
    %c0_i32 = arith.constant 0 : i32
    %c0_i32_0 = arith.constant 0 : i32
    %c0_i32_1 = arith.constant 0 : i32
    return %arg0, %c0_i32, %c0_i32_0 : i32, i32, i32
  }
  func.func @transform_1(%arg0: i32) -> (i32, i32) {
    %c0_i32 = arith.constant 0 : i32
    %c0_i32_0 = arith.constant 0 : i32
    %c0_i32_1 = arith.constant 0 : i32
    return %c0_i32, %c0_i32_0 : i32, i32
  }
  func.func @transform_2(%arg0: i32) -> (i32, i32) {
    %c0_i32 = arith.constant 0 : i32
    %c0_i32_0 = arith.constant 0 : i32
    %c0_i32_1 = arith.constant 0 : i32
    return %c0_i32, %c0_i32_0 : i32, i32
  }
  func.func @transform_3(%arg0: i32) -> (i32, i32, i32) {
    %c0_i32 = arith.constant 0 : i32
    %c0_i32_0 = arith.constant 0 : i32
    %c0_i32_1 = arith.constant 0 : i32
    return %arg0, %c0_i32, %c0_i32_0 : i32, i32, i32
  }
}

</mosaic_0001>

<llo_original>
// kernel: tile.78
$region0: #{tile.78}
  #allocation0 [shape = 's32[1]{0}', space=sflag, size = 0x4, scoped, tag = 'scoped memory for tile.78']
  %s0 = inlined_call_operand.vmem [shape: f32[4], index: 0, kind: input, shape index: {}]
  %s1 = inlined_call_operand.vmem [shape: f32[4,4], index: 1, kind: output, shape index: {}]
  // Predicated region
  $region2: #{tile.78} parent=0 // pred_check
    _
  $region3: #{tile.78} parent=0 // pred_check_branch
    %3 = sbr.rel (0) target = $region5
  $region4: #{tile.78} parent=0 // pred_region
    _
  $region5: #{tile.78} parent=0 // pred_fallthru
    _
  %v4 = vld [vmem:[%s0] ss:$0 sm:$0xff]
  %5 = vst [vmem:[%s1] sm:$0xf] %v4

// kernel: tile.63
$region0: #{tile.63}
  #allocation0 [shape = 's32[1]{0}', space=sflag, size = 0x4, scoped, tag = 'scoped memory for tile.63']
  %s0 = inlined_call_operand.vmem [shape: f32[32], index: 0, kind: input, shape index: {}]
  %s1 = inlined_call_operand.vmem [shape: f32[4,32], index: 1, kind: output, shape index: {}]
  // Predicated region
  $region2: #{tile.63} parent=0 // pred_check
    _
  $region3: #{tile.63} parent=0 // pred_check_branch
    %3 = sbr.rel (0) target = $region5
  $region4: #{tile.63} parent=0 // pred_region
    _
  $region5: #{tile.63} parent=0 // pred_fallthru
    _
  %v4 = vld [vmem:[%s0] ss:$0 sm:$0xff]
  %5 = vst [vmem:[%s1] sm:$0xf] %v4

// kernel: tile.64
$region0: #{tile.64}
  %s0 = inlined_call_operand.vmem [shape: f32[4,32], index: 0, kind: input, shape index: {}]
  %s1 = inlined_call_operand.vmem [shape: f32[1,128], index: 1, kind: output, shape index: {}]
  $region1: #{tile.64} parent=0
    #allocation0 [shape = 'u8[4096]{0}', space=vmem, size = 0x1000, scoped, tag = 'scoped mem for output reshape']
    #allocation1 [shape = 'u8[4096]{0}', space=vmem, size = 0x1000, scoped, tag = 'scoped mem for input reshape']
    %s3 = ssub.s32 16, 1
    %v4 = vld [vmem:[%s0] sm:%s3]
    %5 = vst [vmem:[#allocation1] sm:%s3] %v4
    %v6 = vld [vmem:[#allocation1] sm:$0x1]
    %vm7 = vcmask 261120
    %8 = vst.msk [vmem:[#allocation0] sm:$0x1] %vm7, %v6
    %s9 = scalar_lea.vmem [#allocation1], 3
    %v10 = vld [vmem:[%s9] sm:$0x1]
    %11 = vrot.lane.b32.xlu0 %v10, 96
    %v12 = vpop.permute.xlu0 %11
    %vm13 = vcmask 1048320
    %14 = vst.msk [vmem:[#allocation0] sm:$0x1] %vm13, %v12
    %s15 = scalar_lea.vmem [#allocation1], 2
    %v16 = vld [vmem:[%s15] sm:$0x1]
    %17 = vrot.lane.b32.xlu0 %v16, 64
    %v18 = vpop.permute.xlu0 %17
    %vm19 = vcmask 785920
    %20 = vst.msk [vmem:[#allocation0] sm:$0x1] %vm19, %v18
    %s21 = scalar_lea.vmem [#allocation1], 1
    %v22 = vld [vmem:[%s21] sm:$0x1]
    %23 = vrot.lane.b32.xlu0 %v22, 32
    %v24 = vpop.permute.xlu0 %23
    %vm25 = vcmask 523520
    %26 = vst.msk [vmem:[#allocation0] sm:$0x1] %vm25, %v24
    %s28 = ssub.s32 2, 1
    %v29 = vld [vmem:[#allocation0] sm:%s28]
    %s31 = ssub.s32 2, 1
    %32 = vst [vmem:[%s1] sm:%s31] %v29

// kernel: tile.79
$region0: #{tile.79}
  %s0 = inlined_call_operand.vmem [shape: f32[4,4], index: 0, kind: input, shape index: {}]
  %s1 = inlined_call_operand.vmem [shape: f32[1,16], index: 1, kind: output, shape index: {}]
  $region1: #{tile.79} parent=0
    #allocation0 [shape = 'u8[4096]{0}', space=vmem, size = 0x1000, scoped, tag = 'scoped mem for output reshape']
    #allocation1 [shape = 'u8[4096]{0}', space=vmem, size = 0x1000, scoped, tag = 'scoped mem for input reshape']
    %s3 = ssub.s32 16, 1
    %v4 = vld [vmem:[%s0] sm:%s3]
    %5 = vst [vmem:[#allocation1] sm:%s3] %v4
    %v6 = vld [vmem:[#allocation1] sm:$0x1]
    %vm7 = vcmask 31744
    %8 = vst.msk [vmem:[#allocation0] sm:$0x1] %vm7, %v6
    %s9 = scalar_lea.vmem [#allocation1], 3
    %v10 = vld [vmem:[%s9] sm:$0x1]
    %11 = vrot.lane.b32.xlu0 %v10, 12
    %v12 = vpop.permute.xlu0 %11
    %vm13 = vcmask 130144
    %14 = vst.msk [vmem:[#allocation0] sm:$0x1] %vm13, %v12
    %s15 = scalar_lea.vmem [#allocation1], 2
    %v16 = vld [vmem:[%s15] sm:$0x1]
    %17 = vrot.lane.b32.xlu0 %v16, 8
    %v18 = vpop.permute.xlu0 %17
    %vm19 = vcmask 97344
    %20 = vst.msk [vmem:[#allocation0] sm:$0x1] %vm19, %v18
    %s21 = scalar_lea.vmem [#allocation1], 1
    %v22 = vld [vmem:[%s21] sm:$0x1]
    %23 = vrot.lane.b32.xlu0 %v22, 4
    %v24 = vpop.permute.xlu0 %23
    %vm25 = vcmask 64544
    %26 = vst.msk [vmem:[#allocation0] sm:$0x1] %vm25, %v24
    %s28 = ssub.s32 2, 1
    %v29 = vld [vmem:[#allocation0] sm:%s28]
    %s31 = ssub.s32 2, 1
    %32 = vst [vmem:[%s1] sm:%s31] %v29

// kernel: tile.48
$region0: #{tile.48}
  #allocation0 [shape = 's32[1]{0}', space=sflag, size = 0x4, scoped, tag = 'scoped memory for tile.48']
  %s0 = inlined_call_operand.vmem [shape: f32[64], index: 0, kind: input, shape index: {}]
  %s1 = inlined_call_operand.vmem [shape: f32[4,64], index: 1, kind: output, shape index: {}]
  // Predicated region
  $region2: #{tile.48} parent=0 // pred_check
    _
  $region3: #{tile.48} parent=0 // pred_check_branch
    %3 = sbr.rel (0) target = $region5
  $region4: #{tile.48} parent=0 // pred_region
    _
  $region5: #{tile.48} parent=0 // pred_fallthru
    _
  %v4 = vld [vmem:[%s0] ss:$0 sm:$0xff]
  %5 = vst [vmem:[%s1] sm:$0xf] %v4

// kernel: tile.49
$region0: #{tile.49}
  %s0 = inlined_call_operand.vmem [shape: f32[4,64], index: 0, kind: input, shape index: {}]
  %s1 = inlined_call_operand.vmem [shape: f32[1,256], index: 1, kind: output, shape index: {}]
  $region1: #{tile.49} parent=0
    #allocation0 [shape = 'u8[8192]{0}', space=vmem, size = 0x2000, scoped, tag = 'scoped mem for output reshape']
    #allocation1 [shape = 'u8[4096]{0}', space=vmem, size = 0x1000, scoped, tag = 'scoped mem for input reshape']
    %s3 = ssub.s32 16, 1
    %v4 = vld [vmem:[%s0] sm:%s3]
    %5 = vst [vmem:[#allocation1] sm:%s3] %v4
    %s6 = smov 3
    %v7 = vld [vmem:[#allocation1] ss:$2 sm:%s6]
    %vm8 = vcmask 523264
    %9 = vst.msk [vmem:[#allocation0] ss:$8 sm:$0x3] %vm8, %v7
    %s10 = scalar_lea.vmem [#allocation1], 1
    %s11 = smov 3
    %v12 = vld [vmem:[%s10] ss:$2 sm:%s11]
    %13 = vrot.lane.b32.xlu0 %v12, 64
    %v14 = vpop.permute.xlu0 %13
    %vm15 = vcmask 1048064
    %16 = vst.msk [vmem:[#allocation0] ss:$8 sm:$0x3] %vm15, %v14
    %s18 = ssub.s32 2, 1
    %v19 = vld [vmem:[#allocation0] sm:%s18]
    %s21 = ssub.s32 2, 1
    %22 = vst [vmem:[%s1] sm:%s21] %v19
    %s23 = scalar_lea.vmem [#allocation0], 8
    %v24 = vld [vmem:[%s23] sm:%s18]
    %s26 = ssub.s32 2, 1
    %s27 = scalar_lea.vmem %s1, 1
    %28 = vst [vmem:[%s27] sm:%s26] %v24

// kernel: upsample_forward.5
$region0: #{upsample_forward.5}
  #allocation0 [shape = 'u32[]', space=smem, size = 0x4, offset = 0x4, fixed_abs, tag = 'smem constant byte address 0x4 - core index']
  #allocation1 [shape = 'u32[72,128]{1,0:T(1,128)}', space=vmem, size = 0x9000, scoped, tag = 'internal scratch']
  %s0 = inlined_call_operand.vmem [shape: f32[2,16,64], index: 0, kind: input, shape index: {}]
  %s1 = inlined_call_operand.vmem [shape: f32[2,16,64], index: 1, kind: input, shape index: {}]
  %s2 = inlined_call_operand.vmem [shape: f32[2,16,64], index: 2, kind: input, shape index: {}]
  %s3 = inlined_call_operand.vmem [shape: bf16[64,128], index: 3, kind: input, shape index: {}]
  %s4 = inlined_call_operand.vmem [shape: f32[128,4], index: 4, kind: input, shape index: {}]
  %s5 = inlined_call_operand.vmem [shape: f32[4,128], index: 5, kind: input, shape index: {}]
  %s6 = inlined_call_operand.vmem [shape: f32[1,128], index: 6, kind: input, shape index: {}]
  %s7 = inlined_call_operand.vmem [shape: f32[1,128], index: 7, kind: input, shape index: {}]
  %s8 = inlined_call_operand.hbm [shape: f32[2,16,64], index: 8, kind: output, shape index: {0}]
  %s9 = inlined_call_operand.hbm [shape: f32[2,16,64], index: 9, kind: output, shape index: {1}]
  %s10 = inlined_call_operand.vmem [shape: f32[2,16,128], index: 10, kind: output, shape index: {2}]
  %11 = xla_tuple %s8, %s9, %s10
  %s12 = sld [smem:[#allocation0]]
  $region81: #{upsample_forward.5} parent=0
    _
  %s14 = ssub.s32 1, %s12
  %s15 = scalar_select 0, %s14, %s12
  $region1: #{upsample_forward.5} parent=0
    #allocation2 [shape = 'u8[16384]{0}', space=vmem, size = 0x4000, scoped, tag = 'output window, operand 0']
    #allocation3 [shape = 's32[2]{0}', space=sflag, size = 0x8, scoped, tag = 'scoped memory for upsample_forward.5']
    #allocation4 [shape = 'u8[16384]{0}', space=vmem, size = 0x4000, scoped, tag = 'output window, operand 1']
    #allocation5 [shape = 's32[2]{0}', space=sflag, size = 0x8, scoped, tag = 'scoped memory for upsample_forward.5']
    %16 = vsyncpa [#allocation3], 0
    %s17 = scalar_lea.sflag [#allocation3], 1
    %18 = vsyncpa %s17, 0
    %19 = vsyncpa [#allocation5], 0
    %s20 = scalar_lea.sflag [#allocation5], 1
    %21 = vsyncpa %s20, 0
    loop: start=0, step=1, limit=4
    $region2: #{upsample_forward.5} parent=1 // loop_pre_header
      _
    $region3: #{upsample_forward.5} parent=1 // loop_header
      %s23 = sphi 0, %s27
      %p24 = scmp.ge.s32.totalorder %s23, 4
      %s33 = sphi 0, %s35
      %s36 = sphi 0, %s33
      %s37 = sphi 0, %s36
      %s53 = sphi 0, %s37
      %s59 = sphi 0, %s61
      %s62 = sphi 0, %s59
      %s63 = sphi 0, %s62
      %s79 = sphi 0, %s63
      %s85 = sphi 0, %s87
      %s88 = sphi 0, %s85
      %s89 = sphi 0, %s88
      %s105 = sphi 0, %s89
      %s109 = sphi 0, %s109
      %s111 = sphi 0, %s109
      %s112 = sphi 0, %s111
      %s126 = sphi 0, %s112
      %s130 = sphi 0, %s130
      %s132 = sphi 0, %s130
      %s133 = sphi 0, %s132
      %s147 = sphi 0, %s133
      %s151 = sphi 0, %s151
      %s153 = sphi 0, %s151
      %s154 = sphi 0, %s153
      %s168 = sphi 0, %s154
      %s172 = sphi 0, %s172
      %s174 = sphi 0, %s172
      %s175 = sphi 0, %s174
      %s189 = sphi 0, %s175
      %s193 = sphi 0, %s193
      %s195 = sphi 0, %s193
      %s196 = sphi 0, %s195
      %s210 = sphi 0, %s196
      %s216 = sphi 0, %s218
      %s219 = sphi 0, %s216
      %s220 = sphi 0, %s219
      %s236 = sphi 0, %s220
      %s242 = sphi 0, %s244
      %s245 = sphi 0, %s242
      %s246 = sphi 0, %s245
      %s262 = sphi 0, %s246
      %s268 = sphi 0, %s270
      %s271 = sphi 0, %s268
      %s272 = sphi 0, %s271
      %s288 = sphi 0, %s272
    $region4: #{upsample_forward.5} parent=1 // loop_header_branch
      %26 = sbr.rel (%p24) target = $region8
    $region5: #{upsample_forward.5} parent=1 // loop_body
      %s28 = ssub.s32 %s23, 1
      %s29 = ssub.s32 %s23, 2
      %s30 = sadd.s32 %s23, 1
      %s31 = ssub.s32 %s23, %s30
      %p32 = scmp.eq.s32.totalorder %s31, 0
      %s34 = sadd.s32 %s33, 1
      %s35 = scalar_select %p32, %s33, %s34
      %p38 = pneg %p32
      %p39 = scmp.eq.s32.totalorder %s23, 1
      %p40 = por %p38, %p39
      %p41 = scmp.ne.s32.totalorder %s33, %s36
      %p42 = scmp.eq.s32.totalorder %s23, 0
      %p43 = por %p41, %p42
      %p44 = scmp.ne.s32.totalorder %s33, %s36
      %p45 = scmp.eq.s32.totalorder %s28, 1
      %p46 = por %p44, %p45
      %p47 = scmp.ne.s32.totalorder %s36, %s37
      %p48 = scmp.eq.s32.totalorder %s28, 0
      %p49 = por %p47, %p48
      %p50 = scmp.ne.s32.totalorder %s36, %s37
      %p51 = scmp.eq.s32.totalorder %s29, 1
      %p52 = por %p50, %p51
      %p54 = scmp.ne.s32.totalorder %s37, %s53
      %p55 = scmp.eq.s32.totalorder %s29, 0
      %p56 = por %p54, %p55
      %s57 = ssub.s32 %s23, %s30
      %p58 = scmp.eq.s32.totalorder %s57, 0
      %s60 = sadd.s32 %s59, 1
      %s61 = scalar_select %p58, %s59, %s60
      %p64 = pneg %p58
      %p65 = scmp.eq.s32.totalorder %s23, 1
      %p66 = por %p64, %p65
      %p67 = scmp.ne.s32.totalorder %s59, %s62
      %p68 = scmp.eq.s32.totalorder %s23, 0
      %p69 = por %p67, %p68
      %p70 = scmp.ne.s32.totalorder %s59, %s62
      %p71 = scmp.eq.s32.totalorder %s28, 1
      %p72 = por %p70, %p71
      %p73 = scmp.ne.s32.totalorder %s62, %s63
      %p74 = scmp.eq.s32.totalorder %s28, 0
      %p75 = por %p73, %p74
      %p76 = scmp.ne.s32.totalorder %s62, %s63
      %p77 = scmp.eq.s32.totalorder %s29, 1
      %p78 = por %p76, %p77
      %p80 = scmp.ne.s32.totalorder %s63, %s79
      %p81 = scmp.eq.s32.totalorder %s29, 0
      %p82 = por %p80, %p81
      %s83 = ssub.s32 %s23, %s30
      %p84 = scmp.eq.s32.totalorder %s83, 0
      %s86 = sadd.s32 %s85, 1
      %s87 = scalar_select %p84, %s85, %s86
      %p90 = pneg %p84
      %p91 = scmp.eq.s32.totalorder %s23, 1
      %p92 = por %p90, %p91
      %p93 = scmp.ne.s32.totalorder %s85, %s88
      %p94 = scmp.eq.s32.totalorder %s23, 0
      %p95 = por %p93, %p94
      %p96 = scmp.ne.s32.totalorder %s85, %s88
      %p97 = scmp.eq.s32.totalorder %s28, 1
      %p98 = por %p96, %p97
      %p99 = scmp.ne.s32.totalorder %s88, %s89
      %p100 = scmp.eq.s32.totalorder %s28, 0
      %p101 = por %p99, %p100
      %p102 = scmp.ne.s32.totalorder %s88, %s89
      %p103 = scmp.eq.s32.totalorder %s29, 1
      %p104 = por %p102, %p103
      %p106 = scmp.ne.s32.totalorder %s89, %s105
      %p107 = scmp.eq.s32.totalorder %s29, 0
      %p108 = por %p106, %p107
      %s110 = sadd.s32 %s109, 1
      %p113 = scmp.eq.s32.totalorder %s23, 1
      %p114 = scmp.ne.s32.totalorder %s109, %s111
      %p115 = scmp.eq.s32.totalorder %s23, 0
      %p116 = por %p114, %p115
      %p117 = scmp.ne.s32.totalorder %s109, %s111
      %p118 = scmp.eq.s32.totalorder %s28, 1
      %p119 = por %p117, %p118
      %p120 = scmp.ne.s32.totalorder %s111, %s112
      %p121 = scmp.eq.s32.totalorder %s28, 0
      %p122 = por %p120, %p121
      %p123 = scmp.ne.s32.totalorder %s111, %s112
      %p124 = scmp.eq.s32.totalorder %s29, 1
      %p125 = por %p123, %p124
      %p127 = scmp.ne.s32.totalorder %s112, %s126
      %p128 = scmp.eq.s32.totalorder %s29, 0
      %p129 = por %p127, %p128
      %s131 = sadd.s32 %s130, 1
      %p134 = scmp.eq.s32.totalorder %s23, 1
      %p135 = scmp.ne.s32.totalorder %s130, %s132
      %p136 = scmp.eq.s32.totalorder %s23, 0
      %p137 = por %p135, %p136
      %p138 = scmp.ne.s32.totalorder %s130, %s132
      %p139 = scmp.eq.s32.totalorder %s28, 1
      %p140 = por %p138, %p139
      %p141 = scmp.ne.s32.totalorder %s132, %s133
      %p142 = scmp.eq.s32.totalorder %s28, 0
      %p143 = por %p141, %p142
      %p144 = scmp.ne.s32.totalorder %s132, %s133
      %p145 = scmp.eq.s32.totalorder %s29, 1
      %p146 = por %p144, %p145
      %p148 = scmp.ne.s32.totalorder %s133, %s147
      %p149 = scmp.eq.s32.totalorder %s29, 0
      %p150 = por %p148, %p149
      %s152 = sadd.s32 %s151, 1
      %p155 = scmp.eq.s32.totalorder %s23, 1
      %p156 = scmp.ne.s32.totalorder %s151, %s153
      %p157 = scmp.eq.s32.totalorder %s23, 0
      %p158 = por %p156, %p157
      %p159 = scmp.ne.s32.totalorder %s151, %s153
      %p160 = scmp.eq.s32.totalorder %s28, 1
      %p161 = por %p159, %p160
      %p162 = scmp.ne.s32.totalorder %s153, %s154
      %p163 = scmp.eq.s32.totalorder %s28, 0
      %p164 = por %p162, %p163
      %p165 = scmp.ne.s32.totalorder %s153, %s154
      %p166 = scmp.eq.s32.totalorder %s29, 1
      %p167 = por %p165, %p166
      %p169 = scmp.ne.s32.totalorder %s154, %s168
      %p170 = scmp.eq.s32.totalorder %s29, 0
      %p171 = por %p169, %p170
      %s173 = sadd.s32 %s172, 1
      %p176 = scmp.eq.s32.totalorder %s23, 1
      %p177 = scmp.ne.s32.totalorder %s172, %s174
      %p178 = scmp.eq.s32.totalorder %s23, 0
      %p179 = por %p177, %p178
      %p180 = scmp.ne.s32.totalorder %s172, %s174
      %p181 = scmp.eq.s32.totalorder %s28, 1
      %p182 = por %p180, %p181
      %p183 = scmp.ne.s32.totalorder %s174, %s175
      %p184 = scmp.eq.s32.totalorder %s28, 0
      %p185 = por %p183, %p184
      %p186 = scmp.ne.s32.totalorder %s174, %s175
      %p187 = scmp.eq.s32.totalorder %s29, 1
      %p188 = por %p186, %p187
      %p190 = scmp.ne.s32.totalorder %s175, %s189
      %p191 = scmp.eq.s32.totalorder %s29, 0
      %p192 = por %p190, %p191
      %s194 = sadd.s32 %s193, 1
      %p197 = scmp.eq.s32.totalorder %s23, 1
      %p198 = scmp.ne.s32.totalorder %s193, %s195
      %p199 = scmp.eq.s32.totalorder %s23, 0
      %p200 = por %p198, %p199
      %p201 = scmp.ne.s32.totalorder %s193, %s195
      %p202 = scmp.eq.s32.totalorder %s28, 1
      %p203 = por %p201, %p202
      %p204 = scmp.ne.s32.totalorder %s195, %s196
      %p205 = scmp.eq.s32.totalorder %s28, 0
      %p206 = por %p204, %p205
      %p207 = scmp.ne.s32.totalorder %s195, %s196
      %p208 = scmp.eq.s32.totalorder %s29, 1
      %p209 = por %p207, %p208
      %p211 = scmp.ne.s32.totalorder %s196, %s210
      %p212 = scmp.eq.s32.totalorder %s29, 0
      %p213 = por %p211, %p212
      %s214 = ssub.s32 %s23, %s30
      %p215 = scmp.eq.s32.totalorder %s214, 0
      %s217 = sadd.s32 %s216, 1
      %s218 = scalar_select %p215, %s216, %s217
      %p221 = pneg %p215
      %p222 = scmp.eq.s32.totalorder %s23, 1
      %p223 = por %p221, %p222
      %p224 = scmp.ne.s32.totalorder %s216, %s219
      %p225 = scmp.eq.s32.totalorder %s23, 0
      %p226 = por %p224, %p225
      %p227 = scmp.ne.s32.totalorder %s216, %s219
      %p228 = scmp.eq.s32.totalorder %s28, 1
      %p229 = por %p227, %p228
      %p230 = scmp.ne.s32.totalorder %s219, %s220
      %p231 = scmp.eq.s32.totalorder %s28, 0
      %p232 = por %p230, %p231
      %p233 = scmp.ne.s32.totalorder %s219, %s220
      %p234 = scmp.eq.s32.totalorder %s29, 1
      %p235 = por %p233, %p234
      %p237 = scmp.ne.s32.totalorder %s220, %s236
      %p238 = scmp.eq.s32.totalorder %s29, 0
      %p239 = por %p237, %p238
      %s240 = ssub.s32 %s23, %s30
      %p241 = scmp.eq.s32.totalorder %s240, 0
      %s243 = sadd.s32 %s242, 1
      %s244 = scalar_select %p241, %s242, %s243
      %p247 = pneg %p241
      %p248 = scmp.eq.s32.totalorder %s23, 1
      %p249 = por %p247, %p248
      %p250 = scmp.ne.s32.totalorder %s242, %s245
      %p251 = scmp.eq.s32.totalorder %s23, 0
      %p252 = por %p250, %p251
      %p253 = scmp.ne.s32.totalorder %s242, %s245
      %p254 = scmp.eq.s32.totalorder %s28, 1
      %p255 = por %p253, %p254
      %p256 = scmp.ne.s32.totalorder %s245, %s246
      %p257 = scmp.eq.s32.totalorder %s28, 0
      %p258 = por %p256, %p257
      %p259 = scmp.ne.s32.totalorder %s245, %s246
      %p260 = scmp.eq.s32.totalorder %s29, 1
      %p261 = por %p259, %p260
      %p263 = scmp.ne.s32.totalorder %s246, %s262
      %p264 = scmp.eq.s32.totalorder %s29, 0
      %p265 = por %p263, %p264
      %s266 = ssub.s32 %s23, %s30
      %p267 = scmp.eq.s32.totalorder %s266, 0
      %s269 = sadd.s32 %s268, 1
      %s270 = scalar_select %p267, %s268, %s269
      %p273 = pneg %p267
      %p274 = scmp.eq.s32.totalorder %s23, 1
      %p275 = por %p273, %p274
      %p276 = scmp.ne.s32.totalorder %s268, %s271
      %p277 = scmp.eq.s32.totalorder %s23, 0
      %p278 = por %p276, %p277
      %p279 = scmp.ne.s32.totalorder %s268, %s271
      %p280 = scmp.eq.s32.totalorder %s28, 1
      %p281 = por %p279, %p280
      %p282 = scmp.ne.s32.totalorder %s271, %s272
      %p283 = scmp.eq.s32.totalorder %s28, 0
      %p284 = por %p282, %p283
      %p285 = scmp.ne.s32.totalorder %s271, %s272
      %p286 = scmp.eq.s32.totalorder %s29, 1
      %p287 = por %p285, %p286
      %p289 = scmp.ne.s32.totalorder %s272, %s288
      %p290 = scmp.eq.s32.totalorder %s29, 0
      %p291 = por %p289, %p290
      %p292 = scmp.le.s32.totalorder 1, %s23
      %p293 = scmp.lt.s32.totalorder %s23, 3
      %p294 = pnand %p292, %p293
      %p295 = pneg %p294
      // Predicated region
      $region9: #{upsample_forward.5} parent=5 // pred_check
        _
      $region10: #{upsample_forward.5} parent=5 // pred_check_branch
        %297 = sbr.rel (%p294) target = $region12
      $region11: #{upsample_forward.5} parent=5 // pred_region
        %s298 = ssub.s32 %s23, 1
        // Predicated region
        $region13: #{upsample_forward.5} parent=11 // pred_check
          %p299 = pneg %p122
        $region14: #{upsample_forward.5} parent=11 // pred_check_branch
          %301 = sbr.rel (%p299) target = $region16
        $region15: #{upsample_forward.5} parent=11 // pred_region
          _
        $region16: #{upsample_forward.5} parent=11 // pred_fallthru
          _
        // Predicated region
        $region17: #{upsample_forward.5} parent=11 // pred_check
          %p302 = pneg %p143
        $region18: #{upsample_forward.5} parent=11 // pred_check_branch
          %304 = sbr.rel (%p302) target = $region20
        $region19: #{upsample_forward.5} parent=11 // pred_region
          _
        $region20: #{upsample_forward.5} parent=11 // pred_fallthru
          _
        // Predicated region
        $region21: #{upsample_forward.5} parent=11 // pred_check
          %p305 = pneg %p164
        $region22: #{upsample_forward.5} parent=11 // pred_check_branch
          %307 = sbr.rel (%p305) target = $region24
        $region23: #{upsample_forward.5} parent=11 // pred_region
          _
        $region24: #{upsample_forward.5} parent=11 // pred_fallthru
          _
        // Predicated region
        $region25: #{upsample_forward.5} parent=11 // pred_check
          %p308 = pneg %p185
        $region26: #{upsample_forward.5} parent=11 // pred_check_branch
          %310 = sbr.rel (%p308) target = $region28
        $region27: #{upsample_forward.5} parent=11 // pred_region
          _
        $region28: #{upsample_forward.5} parent=11 // pred_fallthru
          _
        // Predicated region
        $region29: #{upsample_forward.5} parent=11 // pred_check
          %p311 = pneg %p206
        $region30: #{upsample_forward.5} parent=11 // pred_check_branch
          %313 = sbr.rel (%p311) target = $region32
        $region31: #{upsample_forward.5} parent=11 // pred_region
          _
        $region32: #{upsample_forward.5} parent=11 // pred_fallthru
          _
      $region12: #{upsample_forward.5} parent=5 // pred_fallthru
        _
      %p314 = scmp.lt.s32.totalorder %s23, 2
      // Predicated region
      $region33: #{upsample_forward.5} parent=5 // pred_check
        %p315 = pneg %p314
      $region34: #{upsample_forward.5} parent=5 // pred_check_branch
        %317 = sbr.rel (%p315) target = $region36
      $region35: #{upsample_forward.5} parent=5 // pred_region
        // Predicated region
        $region37: #{upsample_forward.5} parent=35 // pred_check
          %p318 = pneg %p43
        $region38: #{upsample_forward.5} parent=35 // pred_check_branch
          %320 = sbr.rel (%p318) target = $region40
        $region39: #{upsample_forward.5} parent=35 // pred_region
          %p321 = scmp.lt.s32.totalorder %s23, 1
          %s322 = scalar_select %p321, %s23, 1
          %s323 = smul.addr %s322, 2
          %s324 = smul.addr %s323, 8
          %s325 = scalar_lea.vmem %s0, %s324
        $region40: #{upsample_forward.5} parent=35 // pred_fallthru
          _
        // Predicated region
        $region41: #{upsample_forward.5} parent=35 // pred_check
          %p326 = pneg %p69
        $region42: #{upsample_forward.5} parent=35 // pred_check_branch
          %328 = sbr.rel (%p326) target = $region44
        $region43: #{upsample_forward.5} parent=35 // pred_region
          %p329 = scmp.lt.s32.totalorder %s23, 1
          %s330 = scalar_select %p329, %s23, 1
          %s331 = smul.addr %s330, 2
          %s332 = smul.addr %s331, 8
          %s333 = scalar_lea.vmem %s1, %s332
        $region44: #{upsample_forward.5} parent=35 // pred_fallthru
          _
        // Predicated region
        $region45: #{upsample_forward.5} parent=35 // pred_check
          %p334 = pneg %p95
        $region46: #{upsample_forward.5} parent=35 // pred_check_branch
          %336 = sbr.rel (%p334) target = $region48
        $region47: #{upsample_forward.5} parent=35 // pred_region
          %p337 = scmp.lt.s32.totalorder %s23, 1
          %s338 = scalar_select %p337, %s23, 1
          %s339 = smul.addr %s338, 2
          %s340 = smul.addr %s339, 8
          %s341 = scalar_lea.vmem %s2, %s340
        $region48: #{upsample_forward.5} parent=35 // pred_fallthru
          _
      $region36: #{upsample_forward.5} parent=5 // pred_fallthru
        _
      %p342 = scmp.le.s32.totalorder 1, %s23
      %p343 = scmp.lt.s32.totalorder %s23, 3
      %p344 = pnand %p342, %p343
      %p345 = pneg %p344
      // Predicated region
      $region49: #{upsample_forward.5} parent=5 // pred_check
        _
      $region50: #{upsample_forward.5} parent=5 // pred_check_branch
        %347 = sbr.rel (%p344) target = $region52
      $region51: #{upsample_forward.5} parent=5 // pred_region
        %s348 = ssub.s32 %s23, 1
        %p349 = scmp.lt.s32.totalorder %s28, 1
        %s350 = scalar_select %p349, %s28, 1
        %s351 = smul.addr %s350, 2
        %s352 = smul.addr %s351, 8
        %s353 = scalar_lea.vmem %s0, %s352
        %p354 = pneg %p49
        %p355 = pneg %p46
        %p356 = scmp.lt.s32.totalorder %s28, 1
        %s357 = scalar_select %p356, %s28, 1
        %s358 = smul.addr %s357, 2
        %s359 = smul.addr %s358, 8
        %s360 = scalar_lea.vmem %s1, %s359
        %p361 = pneg %p75
        %p362 = pneg %p72
        %p363 = scmp.lt.s32.totalorder %s28, 1
        %s364 = scalar_select %p363, %s28, 1
        %s365 = smul.addr %s364, 2
        %s366 = smul.addr %s365, 8
        %s367 = scalar_lea.vmem %s2, %s366
        %p368 = pneg %p101
        %p369 = pneg %p98
        %p370 = pneg %p122
        %p371 = pneg %p119
        %p372 = pneg %p143
        %p373 = pneg %p140
        %p374 = pneg %p164
        %p375 = pneg %p161
        %p376 = pneg %p185
        %p377 = pneg %p182
        %p378 = pneg %p206
        %p379 = pneg %p203
        %p380 = pneg %p232
        %p381 = pneg %p229
        %s382 = sand.u32 %s219, 1
        %s383 = scalar_lea.sflag [#allocation3], %s382
        %s384 = sand.u32 %s219, 1
        %s385 = smul.addr %s384, 16
        %s386 = scalar_lea.vmem [#allocation2], %s385
        %p387 = pneg %p258
        %p388 = pneg %p255
        %s389 = sand.u32 %s245, 1
        %s390 = scalar_lea.sflag [#allocation5], %s389
        %s391 = sand.u32 %s245, 1
        %s392 = smul.addr %s391, 16
        %s393 = scalar_lea.vmem [#allocation4], %s392
        %p394 = pneg %p284
        %p395 = pneg %p281
        %p396 = scmp.lt.s32.totalorder %s28, 1
        %s397 = scalar_select %p396, %s28, 1
        %s398 = smul.addr %s397, 2
        %s399 = smul.addr %s398, 8
        %s400 = scalar_lea.vmem %s10, %s399
        %p401 = scmp.lt.s32.totalorder %s28, 1
        %s402 = scalar_select %p401, %s28, 1
        %s403 = smul.addr %s402, 2
        %s404 = smul.addr %s403, 8
        %s405 = scalar_lea.vmem %s0, %s404
        %p406 = scmp.lt.s32.totalorder %s28, 1
        %s407 = scalar_select %p406, %s28, 1
        %s408 = smul.addr %s407, 2
        %s409 = smul.addr %s408, 8
        %s410 = scalar_lea.vmem %s1, %s409
        %p411 = scmp.lt.s32.totalorder %s28, 1
        %s412 = scalar_select %p411, %s28, 1
        %s413 = smul.addr %s412, 2
        %s414 = smul.addr %s413, 8
        %s415 = scalar_lea.vmem %s2, %s414
        %p416 = scmp.lt.s32.totalorder %s28, 1
        %s417 = scalar_select %p416, %s28, 1
        %s418 = smul.addr %s417, 2
        %s419 = smul.addr %s418, 8
        %s420 = scalar_lea.vmem %s10, %s419
        %v422 = vld [vmem:[%s405] sm:$0xff]
        %v423 = vld [vmem:[%s405 + $0x8] sm:$0xff]
        %v424 = vld [vmem:[%s410] sm:$0xff]
        %v425 = vld [vmem:[%s410 + $0x8] sm:$0xff]
        %v426 = vadd.f32 %v422, %v424
        %v427 = vadd.f32 %v423, %v425
        %v428 = vxor.u32 %v426, 2147483648
        %v429 = vxor.u32 %v427, 2147483648
        %v430 = vmul.f32 %v428, 1.442695
        %v431 = vpow.pop %v430
        %v432 = vmul.f32 %v429, 1.442695
        %v433 = vpow.pop %v432
        %v434 = vadd.f32 %v431, 1.0
        %v435 = vadd.f32 %v433, 1.0
        %v436 = vrcp.pop %v434
        %v437 = vmul.f32 %v434, %v436
        %v438 = vsub.f32 1.0, %v437
        %v439 = vmul.f32 %v436, %v438
        %v440 = vadd.f32 %v436, %v439
        %vm441 = vweird.f32 %v434
        %vm442 = vweird.f32 %v436
        %vm443 = vmor %vm441, %vm442
        %v444 = vsel %vm443, %v436, %v440
        %v445 = vand.u32 2147483647, %v434
        %vm446 = vcmp.eq.f32.partialorder %v445, 8.507059e+37
        %v447 = vand.u32 %v434, 2147483648
        %v448 = vor.u32 1.1754944e-38, %v447
        %v449 = vsel %vm446, %v448, %v444
        %v450 = vmul.f32 1.0, %v449
        %v451 = vrcp.pop %v435
        %v452 = vmul.f32 %v435, %v451
        %v453 = vsub.f32 1.0, %v452
        %v454 = vmul.f32 %v451, %v453
        %v455 = vadd.f32 %v451, %v454
        %vm456 = vweird.f32 %v435
        %vm457 = vweird.f32 %v451
        %vm458 = vmor %vm456, %vm457
        %v459 = vsel %vm458, %v451, %v455
        %v460 = vand.u32 2147483647, %v435
        %vm461 = vcmp.eq.f32.partialorder %v460, 8.507059e+37
        %v462 = vand.u32 %v435, 2147483648
        %v463 = vor.u32 1.1754944e-38, %v462
        %v464 = vsel %vm461, %v463, %v459
        %v465 = vmul.f32 1.0, %v464
        %v466 = vtanh.pop %v426
        %v467 = vtanh.pop %v427
        %v468 = vld [vmem:[%s415] sm:$0xff]
        %v469 = vld [vmem:[%s415 + $0x8] sm:$0xff]
        %v470 = vadd.f32 %v468, %v466
        %v471 = vadd.f32 %v469, %v467
        %v472 = vmul.f32 %v450, %v470
        %v473 = vmul.f32 %v465, %v471
        %v474 = vtanh.pop %v472
        %v475 = vtanh.pop %v473
        %v476 = vmul.f32 %v450, %v474
        %v477 = vmul.f32 %v465, %v475
        %vm478 = vcmask 523264
        %479 = vst.msk [vmem:[%s386] sm:$0xff] %vm478, %v476
        %480 = vst.msk [vmem:[%s386 + $0x8] sm:$0xff] %vm478, %v477
        %481 = vst.msk [vmem:[%s393] sm:$0xff] %vm478, %v472
        %482 = vst.msk [vmem:[%s393 + $0x8] sm:$0xff] %vm478, %v473
        %v483 = vpack.c.bf16 %v477, %v476
        %v484 = vld [vmem:[%s3] sm:$0xf]
        %v485 = vld [vmem:[%s3 + $0x4] sm:$0xf]
        %v486 = vld [vmem:[%s3 + $0x8] sm:$0xf]
        %v487 = vld [vmem:[%s3 + $0xc] sm:$0xf]
        %v488 = vld [vmem:[%s3 + $0x10] sm:$0xf]
        %v489 = vld [vmem:[%s3 + $0x14] sm:$0xf]
        %v490 = vld [vmem:[%s3 + $0x18] sm:$0xf]
        %v491 = vld [vmem:[%s3 + $0x1c] sm:$0xf]
        %v500 = vunpack.c.l.b16 %v484
        %v501 = vunpack.c.l.b16 %v485
        %v502 = vunpack.c.l.b16 %v486
        %v503 = vunpack.c.l.b16 %v487
        %v504 = vunpack.c.l.b16 %v488
        %v505 = vunpack.c.l.b16 %v489
        %v506 = vunpack.c.l.b16 %v490
        %v507 = vunpack.c.l.b16 %v491
        %v508 = vpack.c.b16 %v501, %v500
        %v509 = vpack.c.b16 %v503, %v502
        %v510 = vpack.c.b16 %v505, %v504
        %v511 = vpack.c.b16 %v507, %v506
        %v517 = vsel %vm478, %v483, 0
        %519 = vmatpush.bf16.msra.mxu0 0
        %520 = vmatpush.bf16.msra.mxu0 0
        %521 = vmatpush.bf16.msra.mxu0 0
        %522 = vmatpush.bf16.msra.mxu0 0
        %523 = vmatpush.bf16.msra.mxu0 %v511
        %524 = vmatpush.bf16.msra.mxu0 %v510
        %525 = vmatpush.bf16.msra.mxu0 %v509
        %526 = vmatpush.bf16.msra.mxu0 %v508
        %527 = vmatmul.bf16.gmra.mxu0 %v517
        %v528 = vpop.f32.mrf.mxu0
        %v529 = vadd.f32 0.0, %v528
        %v530 = vpop.f32.mrf.mxu0
        %v531 = vadd.f32 0.0, %v530
        %532 = vdwg.mxu0
        %v533 = vld [vmem:[%s4] sm:$0xff]
        %v534 = vld [vmem:[%s4 + $0x8] sm:$0xff]
        %v535 = vld [vmem:[%s4 + $0x10] sm:$0xff]
        %v536 = vld [vmem:[%s4 + $0x18] sm:$0xff]
        %v537 = vld [vmem:[%s4 + $0x20] sm:$0xff]
        %v538 = vld [vmem:[%s4 + $0x28] sm:$0xff]
        %v539 = vld [vmem:[%s4 + $0x30] sm:$0xff]
        %v540 = vld [vmem:[%s4 + $0x38] sm:$0xff]
        %v541 = vld [vmem:[%s4 + $0x40] sm:$0xff]
        %v542 = vld [vmem:[%s4 + $0x48] sm:$0xff]
        %v543 = vld [vmem:[%s4 + $0x50] sm:$0xff]
        %v544 = vld [vmem:[%s4 + $0x58] sm:$0xff]
        %v545 = vld [vmem:[%s4 + $0x60] sm:$0xff]
        %v546 = vld [vmem:[%s4 + $0x68] sm:$0xff]
        %v547 = vld [vmem:[%s4 + $0x70] sm:$0xff]
        %v548 = vld [vmem:[%s4 + $0x78] sm:$0xff]
        %549 = vmatpush.msra.mxu0 %v548
        %550 = vmatpush.msra.mxu0 %v547
        %551 = vmatpush.msra.mxu0 %v546
        %552 = vmatpush.msra.mxu0 %v545
        %553 = vmatpush.msra.mxu0 %v544
        %554 = vmatpush.msra.mxu0 %v543
        %555 = vmatpush.msra.mxu0 %v542
        %556 = vmatpush.msra.mxu0 %v541
        %557 = vmatpush.msra.mxu0 %v540
        %558 = vmatpush.msra.mxu0 %v539
        %559 = vmatpush.msra.mxu0 %v538
        %560 = vmatpush.msra.mxu0 %v537
        %561 = vmatpush.msra.mxu0 %v536
        %562 = vmatpush.msra.mxu0 %v535
        %563 = vmatpush.msra.mxu0 %v534
        %564 = vmatpush.msra.mxu0 %v533
        %565 = vmatmul.f32.gmra.mxu0 %v529
        %v566 = vpop.f32.mrf.mxu0
        %v567 = vadd.f32 0.0, %v566
        %568 = vmatmul.f32.gmra.mxu0 %v531
        %v569 = vpop.f32.mrf.mxu0
        %v570 = vadd.f32 0.0, %v569
        %571 = vdwg.mxu0
        %v572 = vmul.f32 %v567, 0.03125
        %v573 = vmul.f32 %v570, 0.03125
        %v574 = vld [vmem:[%s5] sm:$0xf]
        %vm575 = vcmask 31744
        %v577 = vsel %vm575, %v572, 0
        %v580 = vsel %vm575, %v573, 0
        %vm582 = vcmask 1043456
        %v584 = vsel %vm582, %v574, 0
        %586 = vmatpush.msra.mxu0 0.0
        %587 = vmatpush.msra.mxu0 0.0
        %588 = vmatpush.msra.mxu0 0.0
        %589 = vmatpush.msra.mxu0 0.0
        %590 = vmatpush.msra.mxu0 0.0
        %591 = vmatpush.msra.mxu0 0.0
        %592 = vmatpush.msra.mxu0 0.0
        %593 = vmatpush.msra.mxu0 0.0
        %594 = vmatpush.msra.mxu0 0.0
        %595 = vmatpush.msra.mxu0 0.0
        %596 = vmatpush.msra.mxu0 0.0
        %597 = vmatpush.msra.mxu0 0.0
        %598 = vmatpush.msra.mxu0 0.0
        %599 = vmatpush.msra.mxu0 0.0
        %600 = vmatpush.msra.mxu0 0.0
        %601 = vmatpush.msra.mxu0 %v584
        %602 = vmatmul.f32.gmra.mxu0 %v577
        %v603 = vpop.f32.mrf.mxu0
        %v604 = vadd.f32 0.0, %v603
        %605 = vmatmul.f32.gmra.mxu0 %v580
        %v606 = vpop.f32.mrf.mxu0
        %v607 = vadd.f32 0.0, %v606
        %608 = vdwg.mxu0
        %v609 = vsub.f32 %v529, %v604
        %v610 = vsub.f32 %v531, %v607
        %v611 = vmul.f32 %v609, %v609
        %v612 = vmul.f32 %v610, %v610
        %613 = vmatpush.msra.mxu0 %v548
        %614 = vmatpush.msra.mxu0 %v547
        %615 = vmatpush.msra.mxu0 %v546
        %616 = vmatpush.msra.mxu0 %v545
        %617 = vmatpush.msra.mxu0 %v544
        %618 = vmatpush.msra.mxu0 %v543
        %619 = vmatpush.msra.mxu0 %v542
        %620 = vmatpush.msra.mxu0 %v541
        %621 = vmatpush.msra.mxu0 %v540
        %622 = vmatpush.msra.mxu0 %v539
        %623 = vmatpush.msra.mxu0 %v538
        %624 = vmatpush.msra.mxu0 %v537
        %625 = vmatpush.msra.mxu0 %v536
        %626 = vmatpush.msra.mxu0 %v535
        %627 = vmatpush.msra.mxu0 %v534
        %628 = vmatpush.msra.mxu0 %v533
        %629 = vmatmul.f32.gmra.mxu0 %v611
        %v630 = vpop.f32.mrf.mxu0
        %v631 = vadd.f32 0.0, %v630
        %632 = vmatmul.f32.gmra.mxu0 %v612
        %v633 = vpop.f32.mrf.mxu0
        %v634 = vadd.f32 0.0, %v633
        %635 = vdwg.mxu0
        %v636 = vmul.f32 %v631, 0.03125
        %v637 = vmul.f32 %v634, 0.03125
        %v639 = vsel %vm575, %v636, 0
        %v642 = vsel %vm575, %v637, 0
        %644 = vmatpush.msra.mxu0 0.0
        %645 = vmatpush.msra.mxu0 0.0
        %646 = vmatpush.msra.mxu0 0.0
        %647 = vmatpush.msra.mxu0 0.0
        %648 = vmatpush.msra.mxu0 0.0
        %649 = vmatpush.msra.mxu0 0.0
        %650 = vmatpush.msra.mxu0 0.0
        %651 = vmatpush.msra.mxu0 0.0
        %652 = vmatpush.msra.mxu0 0.0
        %653 = vmatpush.msra.mxu0 0.0
        %654 = vmatpush.msra.mxu0 0.0
        %655 = vmatpush.msra.mxu0 0.0
        %656 = vmatpush.msra.mxu0 0.0
        %657 = vmatpush.msra.mxu0 0.0
        %658 = vmatpush.msra.mxu0 0.0
        %659 = vmatpush.msra.mxu0 %v584
        %660 = vmatmul.f32.gmra.mxu0 %v639
        %v661 = vpop.f32.mrf.mxu0
        %v662 = vadd.f32 1e-05, %v661
        %663 = vmatmul.f32.gmra.mxu0 %v642
        %v664 = vpop.f32.mrf.mxu0
        %v665 = vadd.f32 1e-05, %v664
        %666 = vdwg.mxu0
        %v667 = vrsqrt.pop %v662
        %v668 = vmul.f32 %v667, %v662
        %v669 = vmul.f32 %v668, %v667
        %v670 = vmul.f32 0.5, %v669
        %v671 = vsub.f32 1.5, %v670
        %v672 = vmul.f32 %v667, %v671
        %vm673 = vweird.f32 %v662
        %vm674 = vweird.f32 %v667
        %vm675 = vmor %vm673, %vm674
        %v676 = vsel %vm675, %v667, %v672
        %v677 = vrsqrt.pop %v665
        %v678 = vmul.f32 %v677, %v665
        %v679 = vmul.f32 %v678, %v677
        %v680 = vmul.f32 0.5, %v679
        %v681 = vsub.f32 1.5, %v680
        %v682 = vmul.f32 %v677, %v681
        %vm683 = vweird.f32 %v665
        %vm684 = vweird.f32 %v677
        %vm685 = vmor %vm683, %vm684
        %v686 = vsel %vm685, %v677, %v682
        %v687 = vmul.f32 %v609, %v676
        %v688 = vmul.f32 %v610, %v686
        %v689 = vld [vmem:[%s6] sm:$0x1]
        %v691 = vperm.slane %v689, 0
        %v693 = vmul.f32 %v687, %v691
        %v694 = vmul.f32 %v688, %v691
        %v695 = vld [vmem:[%s7] sm:$0x1]
        %v697 = vperm.slane %v695, 0
        %v699 = vadd.f32 %v693, %v697
        %v700 = vadd.f32 %v694, %v697
        %701 = vst [vmem:[%s420] sm:$0xff] %v699
        %702 = vst [vmem:[%s420 + $0x8] sm:$0xff] %v700
        %s703 = sand.u32 %s219, 1
        %s704 = scalar_lea.sflag [#allocation3], %s703
        %s705 = sand.u32 %s219, 1
        %s706 = smul.addr %s705, 16
        %s707 = scalar_lea.vmem [#allocation2], %s706
        %s708 = sand.u32 %s245, 1
        %s709 = scalar_lea.sflag [#allocation5], %s708
        %s710 = sand.u32 %s245, 1
        %s711 = smul.addr %s710, 16
        %s712 = scalar_lea.vmem [#allocation4], %s711
        %p713 = scmp.lt.s32.totalorder %s28, 1
        %s714 = scalar_select %p713, %s28, 1
        %s715 = smul.addr %s714, 2
        %s716 = smul.addr %s715, 8
        %s717 = scalar_lea.vmem %s10, %s716
        // Predicated region
        $region53: #{upsample_forward.5} parent=51 // pred_check
          %p718 = pneg %p229
        $region54: #{upsample_forward.5} parent=51 // pred_check_branch
          %720 = sbr.rel (%p718) target = $region56
        $region55: #{upsample_forward.5} parent=51 // pred_region
          %722 = vsyncadd %s704, 0
          %s723 = smul.addr %s28, 2
          %s724 = smul.addr %s723, 8
          %s725 = scalar_lea.hbm %s8, %s724
          %s726 = sshll.u32 %s707, 4
          %s727 = int_to_ptr.vmem [resolvable:$true] %s726
          %s728 = sshll.u32 %s725, 4
          %s729 = int_to_ptr.hbm [resolvable:$true] %s728
          %734 = dma.vmem_to_hbm [thread:$0]  %s727, 256, %s729, %s704, 128, 128, 8
        $region56: #{upsample_forward.5} parent=51 // pred_fallthru
          _
        // Predicated region
        $region57: #{upsample_forward.5} parent=51 // pred_check
          %p735 = pneg %p255
        $region58: #{upsample_forward.5} parent=51 // pred_check_branch
          %737 = sbr.rel (%p735) target = $region60
        $region59: #{upsample_forward.5} parent=51 // pred_region
          %739 = vsyncadd %s709, 0
          %s740 = smul.addr %s28, 2
          %s741 = smul.addr %s740, 8
          %s742 = scalar_lea.hbm %s9, %s741
          %s743 = sshll.u32 %s712, 4
          %s744 = int_to_ptr.vmem [resolvable:$true] %s743
          %s745 = sshll.u32 %s742, 4
          %s746 = int_to_ptr.hbm [resolvable:$true] %s745
          %751 = dma.vmem_to_hbm [thread:$0]  %s744, 256, %s746, %s709, 128, 128, 8
        $region60: #{upsample_forward.5} parent=51 // pred_fallthru
          _
        // Predicated region
        $region61: #{upsample_forward.5} parent=51 // pred_check
          %p752 = pneg %p281
        $region62: #{upsample_forward.5} parent=51 // pred_check_branch
          %754 = sbr.rel (%p752) target = $region64
        $region63: #{upsample_forward.5} parent=51 // pred_region
          _
        $region64: #{upsample_forward.5} parent=51 // pred_fallthru
          _
      $region52: #{upsample_forward.5} parent=5 // pred_fallthru
        _
      %p755 = scmp.le.s32.totalorder 2, %s23
      // Predicated region
      $region65: #{upsample_forward.5} parent=5 // pred_check
        %p756 = pneg %p755
      $region66: #{upsample_forward.5} parent=5 // pred_check_branch
        %758 = sbr.rel (%p756) target = $region68
      $region67: #{upsample_forward.5} parent=5 // pred_region
        %s759 = ssub.s32 %s23, 2
        // Predicated region
        $region69: #{upsample_forward.5} parent=67 // pred_check
          %p760 = pneg %p235
        $region70: #{upsample_forward.5} parent=67 // pred_check_branch
          %762 = sbr.rel (%p760) target = $region72
        $region71: #{upsample_forward.5} parent=67 // pred_region
          %s763 = sand.u32 %s220, 1
          %s764 = scalar_lea.sflag [#allocation3], %s763
          %s765 = sand.u32 %s220, 1
          %s766 = smul.addr %s765, 16
          %s767 = scalar_lea.vmem [#allocation2], %s766
          %769 = dma.done %s764, 256
        $region72: #{upsample_forward.5} parent=67 // pred_fallthru
          _
        // Predicated region
        $region73: #{upsample_forward.5} parent=67 // pred_check
          %p770 = pneg %p261
        $region74: #{upsample_forward.5} parent=67 // pred_check_branch
          %772 = sbr.rel (%p770) target = $region76
        $region75: #{upsample_forward.5} parent=67 // pred_region
          %s773 = sand.u32 %s246, 1
          %s774 = scalar_lea.sflag [#allocation5], %s773
          %s775 = sand.u32 %s246, 1
          %s776 = smul.addr %s775, 16
          %s777 = scalar_lea.vmem [#allocation4], %s776
          %779 = dma.done %s774, 256
        $region76: #{upsample_forward.5} parent=67 // pred_fallthru
          _
        // Predicated region
        $region77: #{upsample_forward.5} parent=67 // pred_check
          %p780 = pneg %p287
        $region78: #{upsample_forward.5} parent=67 // pred_check_branch
          %782 = sbr.rel (%p780) target = $region80
        $region79: #{upsample_forward.5} parent=67 // pred_region
          %p783 = scmp.lt.s32.totalorder %s29, 1
          %s784 = scalar_select %p783, %s29, 1
          %s785 = smul.addr %s784, 2
          %s786 = smul.addr %s785, 8
          %s787 = scalar_lea.vmem %s10, %s786
        $region80: #{upsample_forward.5} parent=67 // pred_fallthru
          _
      $region68: #{upsample_forward.5} parent=5 // pred_fallthru
        _
    $region6: #{upsample_forward.5} parent=1 // loop_footer
      %s27 = sadd.s32 1, %s23
    $region7: #{upsample_forward.5} parent=1 // loop_footer_branch
      %22 = sbr.rel target = $region3
    $region8: #{upsample_forward.5} parent=1 // loop_exit
      _
    %788 = vsyncpa [#allocation3], 1
    %s789 = scalar_lea.sflag [#allocation3], 1
    %790 = vsyncpa %s789, 1
    %791 = vsyncpa [#allocation5], 1
    %s792 = scalar_lea.sflag [#allocation5], 1
    %793 = vsyncpa %s792, 1

// kernel: upsample_forward.4
$region0: #{upsample_forward.4}
  #allocation0 [shape = 'u32[]', space=smem, size = 0x4, offset = 0x4, fixed_abs, tag = 'smem constant byte address 0x4 - core index']
  #allocation1 [shape = 'u32[72,128]{1,0:T(1,128)}', space=vmem, size = 0x9000, scoped, tag = 'internal scratch']
  %s0 = inlined_call_operand.vmem [shape: f32[2,4,128], index: 0, kind: input, shape index: {}]
  %s1 = inlined_call_operand.vmem [shape: f32[2,4,128], index: 1, kind: input, shape index: {}]
  %s2 = inlined_call_operand.vmem [shape: f32[2,4,128], index: 2, kind: input, shape index: {}]
  %s3 = inlined_call_operand.vmem [shape: bf16[128,256], index: 3, kind: input, shape index: {}]
  %s4 = inlined_call_operand.vmem [shape: f32[256,4], index: 4, kind: input, shape index: {}]
  %s5 = inlined_call_operand.vmem [shape: f32[4,256], index: 5, kind: input, shape index: {}]
  %s6 = inlined_call_operand.vmem [shape: f32[1,256], index: 6, kind: input, shape index: {}]
  %s7 = inlined_call_operand.vmem [shape: f32[1,256], index: 7, kind: input, shape index: {}]
  %s8 = inlined_call_operand.hbm [shape: f32[2,4,128], index: 8, kind: output, shape index: {0}]
  %s9 = inlined_call_operand.hbm [shape: f32[2,4,128], index: 9, kind: output, shape index: {1}]
  %s10 = inlined_call_operand.vmem [shape: f32[2,4,256], index: 10, kind: output, shape index: {2}]
  %11 = xla_tuple %s8, %s9, %s10
  %s12 = sld [smem:[#allocation0]]
  $region81: #{upsample_forward.4} parent=0
    _
  %s14 = ssub.s32 1, %s12
  %s15 = scalar_select 0, %s14, %s12
  $region1: #{upsample_forward.4} parent=0
    #allocation2 [shape = 'u8[4096]{0}', space=vmem, size = 0x1000, scoped, tag = 'output window, operand 0']
    #allocation3 [shape = 's32[2]{0}', space=sflag, size = 0x8, scoped, tag = 'scoped memory for upsample_forward.4']
    #allocation4 [shape = 'u8[4096]{0}', space=vmem, size = 0x1000, scoped, tag = 'output window, operand 1']
    #allocation5 [shape = 's32[2]{0}', space=sflag, size = 0x8, scoped, tag = 'scoped memory for upsample_forward.4']
    %16 = vsyncpa [#allocation3], 0
    %s17 = scalar_lea.sflag [#allocation3], 1
    %18 = vsyncpa %s17, 0
    %19 = vsyncpa [#allocation5], 0
    %s20 = scalar_lea.sflag [#allocation5], 1
    %21 = vsyncpa %s20, 0
    loop: start=0, step=1, limit=4
    $region2: #{upsample_forward.4} parent=1 // loop_pre_header
      _
    $region3: #{upsample_forward.4} parent=1 // loop_header
      %s23 = sphi 0, %s27
      %p24 = scmp.ge.s32.totalorder %s23, 4
      %s33 = sphi 0, %s35
      %s36 = sphi 0, %s33
      %s37 = sphi 0, %s36
      %s53 = sphi 0, %s37
      %s59 = sphi 0, %s61
      %s62 = sphi 0, %s59
      %s63 = sphi 0, %s62
      %s79 = sphi 0, %s63
      %s85 = sphi 0, %s87
      %s88 = sphi 0, %s85
      %s89 = sphi 0, %s88
      %s105 = sphi 0, %s89
      %s109 = sphi 0, %s109
      %s111 = sphi 0, %s109
      %s112 = sphi 0, %s111
      %s126 = sphi 0, %s112
      %s130 = sphi 0, %s130
      %s132 = sphi 0, %s130
      %s133 = sphi 0, %s132
      %s147 = sphi 0, %s133
      %s151 = sphi 0, %s151
      %s153 = sphi 0, %s151
      %s154 = sphi 0, %s153
      %s168 = sphi 0, %s154
      %s172 = sphi 0, %s172
      %s174 = sphi 0, %s172
      %s175 = sphi 0, %s174
      %s189 = sphi 0, %s175
      %s193 = sphi 0, %s193
      %s195 = sphi 0, %s193
      %s196 = sphi 0, %s195
      %s210 = sphi 0, %s196
      %s216 = sphi 0, %s218
      %s219 = sphi 0, %s216
      %s220 = sphi 0, %s219
      %s236 = sphi 0, %s220
      %s242 = sphi 0, %s244
      %s245 = sphi 0, %s242
      %s246 = sphi 0, %s245
      %s262 = sphi 0, %s246
      %s268 = sphi 0, %s270
      %s271 = sphi 0, %s268
      %s272 = sphi 0, %s271
      %s288 = sphi 0, %s272
    $region4: #{upsample_forward.4} parent=1 // loop_header_branch
      %26 = sbr.rel (%p24) target = $region8
    $region5: #{upsample_forward.4} parent=1 // loop_body
      %s28 = ssub.s32 %s23, 1
      %s29 = ssub.s32 %s23, 2
      %s30 = sadd.s32 %s23, 1
      %s31 = ssub.s32 %s23, %s30
      %p32 = scmp.eq.s32.totalorder %s31, 0
      %s34 = sadd.s32 %s33, 1
      %s35 = scalar_select %p32, %s33, %s34
      %p38 = pneg %p32
      %p39 = scmp.eq.s32.totalorder %s23, 1
      %p40 = por %p38, %p39
      %p41 = scmp.ne.s32.totalorder %s33, %s36
      %p42 = scmp.eq.s32.totalorder %s23, 0
      %p43 = por %p41, %p42
      %p44 = scmp.ne.s32.totalorder %s33, %s36
      %p45 = scmp.eq.s32.totalorder %s28, 1
      %p46 = por %p44, %p45
      %p47 = scmp.ne.s32.totalorder %s36, %s37
      %p48 = scmp.eq.s32.totalorder %s28, 0
      %p49 = por %p47, %p48
      %p50 = scmp.ne.s32.totalorder %s36, %s37
      %p51 = scmp.eq.s32.totalorder %s29, 1
      %p52 = por %p50, %p51
      %p54 = scmp.ne.s32.totalorder %s37, %s53
      %p55 = scmp.eq.s32.totalorder %s29, 0
      %p56 = por %p54, %p55
      %s57 = ssub.s32 %s23, %s30
      %p58 = scmp.eq.s32.totalorder %s57, 0
      %s60 = sadd.s32 %s59, 1
      %s61 = scalar_select %p58, %s59, %s60
      %p64 = pneg %p58
      %p65 = scmp.eq.s32.totalorder %s23, 1
      %p66 = por %p64, %p65
      %p67 = scmp.ne.s32.totalorder %s59, %s62
      %p68 = scmp.eq.s32.totalorder %s23, 0
      %p69 = por %p67, %p68
      %p70 = scmp.ne.s32.totalorder %s59, %s62
      %p71 = scmp.eq.s32.totalorder %s28, 1
      %p72 = por %p70, %p71
      %p73 = scmp.ne.s32.totalorder %s62, %s63
      %p74 = scmp.eq.s32.totalorder %s28, 0
      %p75 = por %p73, %p74
      %p76 = scmp.ne.s32.totalorder %s62, %s63
      %p77 = scmp.eq.s32.totalorder %s29, 1
      %p78 = por %p76, %p77
      %p80 = scmp.ne.s32.totalorder %s63, %s79
      %p81 = scmp.eq.s32.totalorder %s29, 0
      %p82 = por %p80, %p81
      %s83 = ssub.s32 %s23, %s30
      %p84 = scmp.eq.s32.totalorder %s83, 0
      %s86 = sadd.s32 %s85, 1
      %s87 = scalar_select %p84, %s85, %s86
      %p90 = pneg %p84
      %p91 = scmp.eq.s32.totalorder %s23, 1
      %p92 = por %p90, %p91
      %p93 = scmp.ne.s32.totalorder %s85, %s88
      %p94 = scmp.eq.s32.totalorder %s23, 0
      %p95 = por %p93, %p94
      %p96 = scmp.ne.s32.totalorder %s85, %s88
      %p97 = scmp.eq.s32.totalorder %s28, 1
      %p98 = por %p96, %p97
      %p99 = scmp.ne.s32.totalorder %s88, %s89
      %p100 = scmp.eq.s32.totalorder %s28, 0
      %p101 = por %p99, %p100
      %p102 = scmp.ne.s32.totalorder %s88, %s89
      %p103 = scmp.eq.s32.totalorder %s29, 1
      %p104 = por %p102, %p103
      %p106 = scmp.ne.s32.totalorder %s89, %s105
      %p107 = scmp.eq.s32.totalorder %s29, 0
      %p108 = por %p106, %p107
      %s110 = sadd.s32 %s109, 1
      %p113 = scmp.eq.s32.totalorder %s23, 1
      %p114 = scmp.ne.s32.totalorder %s109, %s111
      %p115 = scmp.eq.s32.totalorder %s23, 0
      %p116 = por %p114, %p115
      %p117 = scmp.ne.s32.totalorder %s109, %s111
      %p118 = scmp.eq.s32.totalorder %s28, 1
      %p119 = por %p117, %p118
      %p120 = scmp.ne.s32.totalorder %s111, %s112
      %p121 = scmp.eq.s32.totalorder %s28, 0
      %p122 = por %p120, %p121
      %p123 = scmp.ne.s32.totalorder %s111, %s112
      %p124 = scmp.eq.s32.totalorder %s29, 1
      %p125 = por %p123, %p124
      %p127 = scmp.ne.s32.totalorder %s112, %s126
      %p128 = scmp.eq.s32.totalorder %s29, 0
      %p129 = por %p127, %p128
      %s131 = sadd.s32 %s130, 1
      %p134 = scmp.eq.s32.totalorder %s23, 1
      %p135 = scmp.ne.s32.totalorder %s130, %s132
      %p136 = scmp.eq.s32.totalorder %s23, 0
      %p137 = por %p135, %p136
      %p138 = scmp.ne.s32.totalorder %s130, %s132
      %p139 = scmp.eq.s32.totalorder %s28, 1
      %p140 = por %p138, %p139
      %p141 = scmp.ne.s32.totalorder %s132, %s133
      %p142 = scmp.eq.s32.totalorder %s28, 0
      %p143 = por %p141, %p142
      %p144 = scmp.ne.s32.totalorder %s132, %s133
      %p145 = scmp.eq.s32.totalorder %s29, 1
      %p146 = por %p144, %p145
      %p148 = scmp.ne.s32.totalorder %s133, %s147
      %p149 = scmp.eq.s32.totalorder %s29, 0
      %p150 = por %p148, %p149
      %s152 = sadd.s32 %s151, 1
      %p155 = scmp.eq.s32.totalorder %s23, 1
      %p156 = scmp.ne.s32.totalorder %s151, %s153
      %p157 = scmp.eq.s32.totalorder %s23, 0
      %p158 = por %p156, %p157
      %p159 = scmp.ne.s32.totalorder %s151, %s153
      %p160 = scmp.eq.s32.totalorder %s28, 1
      %p161 = por %p159, %p160
      %p162 = scmp.ne.s32.totalorder %s153, %s154
      %p163 = scmp.eq.s32.totalorder %s28, 0
      %p164 = por %p162, %p163
      %p165 = scmp.ne.s32.totalorder %s153, %s154
      %p166 = scmp.eq.s32.totalorder %s29, 1
      %p167 = por %p165, %p166
      %p169 = scmp.ne.s32.totalorder %s154, %s168
      %p170 = scmp.eq.s32.totalorder %s29, 0
      %p171 = por %p169, %p170
      %s173 = sadd.s32 %s172, 1
      %p176 = scmp.eq.s32.totalorder %s23, 1
      %p177 = scmp.ne.s32.totalorder %s172, %s174
      %p178 = scmp.eq.s32.totalorder %s23, 0
      %p179 = por %p177, %p178
      %p180 = scmp.ne.s32.totalorder %s172, %s174
      %p181 = scmp.eq.s32.totalorder %s28, 1
      %p182 = por %p180, %p181
      %p183 = scmp.ne.s32.totalorder %s174, %s175
      %p184 = scmp.eq.s32.totalorder %s28, 0
      %p185 = por %p183, %p184
      %p186 = scmp.ne.s32.totalorder %s174, %s175
      %p187 = scmp.eq.s32.totalorder %s29, 1
      %p188 = por %p186, %p187
      %p190 = scmp.ne.s32.totalorder %s175, %s189
      %p191 = scmp.eq.s32.totalorder %s29, 0
      %p192 = por %p190, %p191
      %s194 = sadd.s32 %s193, 1
      %p197 = scmp.eq.s32.totalorder %s23, 1
      %p198 = scmp.ne.s32.totalorder %s193, %s195
      %p199 = scmp.eq.s32.totalorder %s23, 0
      %p200 = por %p198, %p199
      %p201 = scmp.ne.s32.totalorder %s193, %s195
      %p202 = scmp.eq.s32.totalorder %s28, 1
      %p203 = por %p201, %p202
      %p204 = scmp.ne.s32.totalorder %s195, %s196
      %p205 = scmp.eq.s32.totalorder %s28, 0
      %p206 = por %p204, %p205
      %p207 = scmp.ne.s32.totalorder %s195, %s196
      %p208 = scmp.eq.s32.totalorder %s29, 1
      %p209 = por %p207, %p208
      %p211 = scmp.ne.s32.totalorder %s196, %s210
      %p212 = scmp.eq.s32.totalorder %s29, 0
      %p213 = por %p211, %p212
      %s214 = ssub.s32 %s23, %s30
      %p215 = scmp.eq.s32.totalorder %s214, 0
      %s217 = sadd.s32 %s216, 1
      %s218 = scalar_select %p215, %s216, %s217
      %p221 = pneg %p215
      %p222 = scmp.eq.s32.totalorder %s23, 1
      %p223 = por %p221, %p222
      %p224 = scmp.ne.s32.totalorder %s216, %s219
      %p225 = scmp.eq.s32.totalorder %s23, 0
      %p226 = por %p224, %p225
      %p227 = scmp.ne.s32.totalorder %s216, %s219
      %p228 = scmp.eq.s32.totalorder %s28, 1
      %p229 = por %p227, %p228
      %p230 = scmp.ne.s32.totalorder %s219, %s220
      %p231 = scmp.eq.s32.totalorder %s28, 0
      %p232 = por %p230, %p231
      %p233 = scmp.ne.s32.totalorder %s219, %s220
      %p234 = scmp.eq.s32.totalorder %s29, 1
      %p235 = por %p233, %p234
      %p237 = scmp.ne.s32.totalorder %s220, %s236
      %p238 = scmp.eq.s32.totalorder %s29, 0
      %p239 = por %p237, %p238
      %s240 = ssub.s32 %s23, %s30
      %p241 = scmp.eq.s32.totalorder %s240, 0
      %s243 = sadd.s32 %s242, 1
      %s244 = scalar_select %p241, %s242, %s243
      %p247 = pneg %p241
      %p248 = scmp.eq.s32.totalorder %s23, 1
      %p249 = por %p247, %p248
      %p250 = scmp.ne.s32.totalorder %s242, %s245
      %p251 = scmp.eq.s32.totalorder %s23, 0
      %p252 = por %p250, %p251
      %p253 = scmp.ne.s32.totalorder %s242, %s245
      %p254 = scmp.eq.s32.totalorder %s28, 1
      %p255 = por %p253, %p254
      %p256 = scmp.ne.s32.totalorder %s245, %s246
      %p257 = scmp.eq.s32.totalorder %s28, 0
      %p258 = por %p256, %p257
      %p259 = scmp.ne.s32.totalorder %s245, %s246
      %p260 = scmp.eq.s32.totalorder %s29, 1
      %p261 = por %p259, %p260
      %p263 = scmp.ne.s32.totalorder %s246, %s262
      %p264 = scmp.eq.s32.totalorder %s29, 0
      %p265 = por %p263, %p264
      %s266 = ssub.s32 %s23, %s30
      %p267 = scmp.eq.s32.totalorder %s266, 0
      %s269 = sadd.s32 %s268, 1
      %s270 = scalar_select %p267, %s268, %s269
      %p273 = pneg %p267
      %p274 = scmp.eq.s32.totalorder %s23, 1
      %p275 = por %p273, %p274
      %p276 = scmp.ne.s32.totalorder %s268, %s271
      %p277 = scmp.eq.s32.totalorder %s23, 0
      %p278 = por %p276, %p277
      %p279 = scmp.ne.s32.totalorder %s268, %s271
      %p280 = scmp.eq.s32.totalorder %s28, 1
      %p281 = por %p279, %p280
      %p282 = scmp.ne.s32.totalorder %s271, %s272
      %p283 = scmp.eq.s32.totalorder %s28, 0
      %p284 = por %p282, %p283
      %p285 = scmp.ne.s32.totalorder %s271, %s272
      %p286 = scmp.eq.s32.totalorder %s29, 1
      %p287 = por %p285, %p286
      %p289 = scmp.ne.s32.totalorder %s272, %s288
      %p290 = scmp.eq.s32.totalorder %s29, 0
      %p291 = por %p289, %p290
      %p292 = scmp.le.s32.totalorder 1, %s23
      %p293 = scmp.lt.s32.totalorder %s23, 3
      %p294 = pnand %p292, %p293
      %p295 = pneg %p294
      // Predicated region
      $region9: #{upsample_forward.4} parent=5 // pred_check
        _
      $region10: #{upsample_forward.4} parent=5 // pred_check_branch
        %297 = sbr.rel (%p294) target = $region12
      $region11: #{upsample_forward.4} parent=5 // pred_region
        %s298 = ssub.s32 %s23, 1
        // Predicated region
        $region13: #{upsample_forward.4} parent=11 // pred_check
          %p299 = pneg %p122
        $region14: #{upsample_forward.4} parent=11 // pred_check_branch
          %301 = sbr.rel (%p299) target = $region16
        $region15: #{upsample_forward.4} parent=11 // pred_region
          _
        $region16: #{upsample_forward.4} parent=11 // pred_fallthru
          _
        // Predicated region
        $region17: #{upsample_forward.4} parent=11 // pred_check
          %p302 = pneg %p143
        $region18: #{upsample_forward.4} parent=11 // pred_check_branch
          %304 = sbr.rel (%p302) target = $region20
        $region19: #{upsample_forward.4} parent=11 // pred_region
          _
        $region20: #{upsample_forward.4} parent=11 // pred_fallthru
          _
        // Predicated region
        $region21: #{upsample_forward.4} parent=11 // pred_check
          %p305 = pneg %p164
        $region22: #{upsample_forward.4} parent=11 // pred_check_branch
          %307 = sbr.rel (%p305) target = $region24
        $region23: #{upsample_forward.4} parent=11 // pred_region
          _
        $region24: #{upsample_forward.4} parent=11 // pred_fallthru
          _
        // Predicated region
        $region25: #{upsample_forward.4} parent=11 // pred_check
          %p308 = pneg %p185
        $region26: #{upsample_forward.4} parent=11 // pred_check_branch
          %310 = sbr.rel (%p308) target = $region28
        $region27: #{upsample_forward.4} parent=11 // pred_region
          _
        $region28: #{upsample_forward.4} parent=11 // pred_fallthru
          _
        // Predicated region
        $region29: #{upsample_forward.4} parent=11 // pred_check
          %p311 = pneg %p206
        $region30: #{upsample_forward.4} parent=11 // pred_check_branch
          %313 = sbr.rel (%p311) target = $region32
        $region31: #{upsample_forward.4} parent=11 // pred_region
          _
        $region32: #{upsample_forward.4} parent=11 // pred_fallthru
          _
      $region12: #{upsample_forward.4} parent=5 // pred_fallthru
        _
      %p314 = scmp.lt.s32.totalorder %s23, 2
      // Predicated region
      $region33: #{upsample_forward.4} parent=5 // pred_check
        %p315 = pneg %p314
      $region34: #{upsample_forward.4} parent=5 // pred_check_branch
        %317 = sbr.rel (%p315) target = $region36
      $region35: #{upsample_forward.4} parent=5 // pred_region
        // Predicated region
        $region37: #{upsample_forward.4} parent=35 // pred_check
          %p318 = pneg %p43
        $region38: #{upsample_forward.4} parent=35 // pred_check_branch
          %320 = sbr.rel (%p318) target = $region40
        $region39: #{upsample_forward.4} parent=35 // pred_region
          %p321 = scmp.lt.s32.totalorder %s23, 1
          %s322 = scalar_select %p321, %s23, 1
          %s323 = smul.addr %s322, 4
          %s324 = scalar_lea.vmem %s0, %s323
        $region40: #{upsample_forward.4} parent=35 // pred_fallthru
          _
        // Predicated region
        $region41: #{upsample_forward.4} parent=35 // pred_check
          %p325 = pneg %p69
        $region42: #{upsample_forward.4} parent=35 // pred_check_branch
          %327 = sbr.rel (%p325) target = $region44
        $region43: #{upsample_forward.4} parent=35 // pred_region
          %p328 = scmp.lt.s32.totalorder %s23, 1
          %s329 = scalar_select %p328, %s23, 1
          %s330 = smul.addr %s329, 4
          %s331 = scalar_lea.vmem %s1, %s330
        $region44: #{upsample_forward.4} parent=35 // pred_fallthru
          _
        // Predicated region
        $region45: #{upsample_forward.4} parent=35 // pred_check
          %p332 = pneg %p95
        $region46: #{upsample_forward.4} parent=35 // pred_check_branch
          %334 = sbr.rel (%p332) target = $region48
        $region47: #{upsample_forward.4} parent=35 // pred_region
          %p335 = scmp.lt.s32.totalorder %s23, 1
          %s336 = scalar_select %p335, %s23, 1
          %s337 = smul.addr %s336, 4
          %s338 = scalar_lea.vmem %s2, %s337
        $region48: #{upsample_forward.4} parent=35 // pred_fallthru
          _
      $region36: #{upsample_forward.4} parent=5 // pred_fallthru
        _
      %p339 = scmp.le.s32.totalorder 1, %s23
      %p340 = scmp.lt.s32.totalorder %s23, 3
      %p341 = pnand %p339, %p340
      %p342 = pneg %p341
      // Predicated region
      $region49: #{upsample_forward.4} parent=5 // pred_check
        _
      $region50: #{upsample_forward.4} parent=5 // pred_check_branch
        %344 = sbr.rel (%p341) target = $region52
      $region51: #{upsample_forward.4} parent=5 // pred_region
        %s345 = ssub.s32 %s23, 1
        %p346 = scmp.lt.s32.totalorder %s28, 1
        %s347 = scalar_select %p346, %s28, 1
        %s348 = smul.addr %s347, 4
        %s349 = scalar_lea.vmem %s0, %s348
        %p350 = pneg %p49
        %p351 = pneg %p46
        %p352 = scmp.lt.s32.totalorder %s28, 1
        %s353 = scalar_select %p352, %s28, 1
        %s354 = smul.addr %s353, 4
        %s355 = scalar_lea.vmem %s1, %s354
        %p356 = pneg %p75
        %p357 = pneg %p72
        %p358 = scmp.lt.s32.totalorder %s28, 1
        %s359 = scalar_select %p358, %s28, 1
        %s360 = smul.addr %s359, 4
        %s361 = scalar_lea.vmem %s2, %s360
        %p362 = pneg %p101
        %p363 = pneg %p98
        %p364 = pneg %p122
        %p365 = pneg %p119
        %p366 = pneg %p143
        %p367 = pneg %p140
        %p368 = pneg %p164
        %p369 = pneg %p161
        %p370 = pneg %p185
        %p371 = pneg %p182
        %p372 = pneg %p206
        %p373 = pneg %p203
        %p374 = pneg %p232
        %p375 = pneg %p229
        %s376 = sand.u32 %s219, 1
        %s377 = scalar_lea.sflag [#allocation3], %s376
        %s378 = sand.u32 %s219, 1
        %s379 = smul.addr %s378, 4
        %s380 = scalar_lea.vmem [#allocation2], %s379
        %p381 = pneg %p258
        %p382 = pneg %p255
        %s383 = sand.u32 %s245, 1
        %s384 = scalar_lea.sflag [#allocation5], %s383
        %s385 = sand.u32 %s245, 1
        %s386 = smul.addr %s385, 4
        %s387 = scalar_lea.vmem [#allocation4], %s386
        %p388 = pneg %p284
        %p389 = pneg %p281
        %p390 = scmp.lt.s32.totalorder %s28, 1
        %s391 = scalar_select %p390, %s28, 1
        %s392 = smul.addr %s391, 2
        %s393 = smul.addr %s392, 4
        %s394 = scalar_lea.vmem %s10, %s393
        %p395 = scmp.lt.s32.totalorder %s28, 1
        %s396 = scalar_select %p395, %s28, 1
        %s397 = smul.addr %s396, 4
        %s398 = scalar_lea.vmem %s0, %s397
        %p399 = scmp.lt.s32.totalorder %s28, 1
        %s400 = scalar_select %p399, %s28, 1
        %s401 = smul.addr %s400, 4
        %s402 = scalar_lea.vmem %s1, %s401
        %p403 = scmp.lt.s32.totalorder %s28, 1
        %s404 = scalar_select %p403, %s28, 1
        %s405 = smul.addr %s404, 4
        %s406 = scalar_lea.vmem %s2, %s405
        %p407 = scmp.lt.s32.totalorder %s28, 1
        %s408 = scalar_select %p407, %s28, 1
        %s409 = smul.addr %s408, 2
        %s410 = smul.addr %s409, 4
        %s411 = scalar_lea.vmem %s10, %s410
        %v412 = vld [vmem:[%s398] sm:$0xf]
        %v413 = vld [vmem:[%s402] sm:$0xf]
        %v414 = vadd.f32 %v412, %v413
        %v415 = vxor.u32 %v414, 2147483648
        %v416 = vmul.f32 %v415, 1.442695
        %v417 = vpow.pop %v416
        %v418 = vadd.f32 %v417, 1.0
        %v419 = vrcp.pop %v418
        %v420 = vmul.f32 %v418, %v419
        %v421 = vsub.f32 1.0, %v420
        %v422 = vmul.f32 %v419, %v421
        %v423 = vadd.f32 %v419, %v422
        %vm424 = vweird.f32 %v418
        %vm425 = vweird.f32 %v419
        %vm426 = vmor %vm424, %vm425
        %v427 = vsel %vm426, %v419, %v423
        %v428 = vand.u32 2147483647, %v418
        %vm429 = vcmp.eq.f32.partialorder %v428, 8.507059e+37
        %v430 = vand.u32 %v418, 2147483648
        %v431 = vor.u32 1.1754944e-38, %v430
        %v432 = vsel %vm429, %v431, %v427
        %v433 = vmul.f32 1.0, %v432
        %v434 = vtanh.pop %v414
        %v435 = vld [vmem:[%s406] sm:$0xf]
        %v436 = vadd.f32 %v435, %v434
        %v437 = vmul.f32 %v433, %v436
        %v438 = vtanh.pop %v437
        %v439 = vmul.f32 %v433, %v438
        %440 = vst [vmem:[%s380] sm:$0xf] %v439
        %441 = vst [vmem:[%s387] sm:$0xf] %v437
        %v442 = vpack.c.bf16 %v439, %v439
        %v443 = vld [vmem:[%s3] sm:$0xff]
        %v444 = vld [vmem:[%s3 + $0x8] sm:$0xff]
        %v445 = vld [vmem:[%s3 + $0x10] sm:$0xff]
        %v446 = vld [vmem:[%s3 + $0x18] sm:$0xff]
        %v447 = vld [vmem:[%s3 + $0x20] sm:$0xff]
        %v448 = vld [vmem:[%s3 + $0x28] sm:$0xff]
        %v449 = vld [vmem:[%s3 + $0x30] sm:$0xff]
        %v450 = vld [vmem:[%s3 + $0x38] sm:$0xff]
        %v451 = vld [vmem:[%s3 + $0x40] sm:$0xff]
        %v452 = vld [vmem:[%s3 + $0x48] sm:$0xff]
        %v453 = vld [vmem:[%s3 + $0x50] sm:$0xff]
        %v454 = vld [vmem:[%s3 + $0x58] sm:$0xff]
        %v455 = vld [vmem:[%s3 + $0x60] sm:$0xff]
        %v456 = vld [vmem:[%s3 + $0x68] sm:$0xff]
        %v457 = vld [vmem:[%s3 + $0x70] sm:$0xff]
        %v458 = vld [vmem:[%s3 + $0x78] sm:$0xff]
        %v475 = vunpack.c.l.b16 %v443
        %v476 = vunpack.c.h.b16 %v443
        %v477 = vunpack.c.l.b16 %v444
        %v478 = vunpack.c.h.b16 %v444
        %v479 = vunpack.c.l.b16 %v445
        %v480 = vunpack.c.h.b16 %v445
        %v481 = vunpack.c.l.b16 %v446
        %v482 = vunpack.c.h.b16 %v446
        %v483 = vunpack.c.l.b16 %v447
        %v484 = vunpack.c.h.b16 %v447
        %v485 = vunpack.c.l.b16 %v448
        %v486 = vunpack.c.h.b16 %v448
        %v487 = vunpack.c.l.b16 %v449
        %v488 = vunpack.c.h.b16 %v449
        %v489 = vunpack.c.l.b16 %v450
        %v490 = vunpack.c.h.b16 %v450
        %v491 = vunpack.c.l.b16 %v451
        %v492 = vunpack.c.h.b16 %v451
        %v493 = vunpack.c.l.b16 %v452
        %v494 = vunpack.c.h.b16 %v452
        %v495 = vunpack.c.l.b16 %v453
        %v496 = vunpack.c.h.b16 %v453
        %v497 = vunpack.c.l.b16 %v454
        %v498 = vunpack.c.h.b16 %v454
        %v499 = vunpack.c.l.b16 %v455
        %v500 = vunpack.c.h.b16 %v455
        %v501 = vunpack.c.l.b16 %v456
        %v502 = vunpack.c.h.b16 %v456
        %v503 = vunpack.c.l.b16 %v457
        %v504 = vunpack.c.h.b16 %v457
        %v505 = vunpack.c.l.b16 %v458
        %v506 = vunpack.c.h.b16 %v458
        %v507 = vpack.c.b16 %v477, %v475
        %v508 = vpack.c.b16 %v478, %v476
        %v509 = vpack.c.b16 %v481, %v479
        %v510 = vpack.c.b16 %v482, %v480
        %v511 = vpack.c.b16 %v485, %v483
        %v512 = vpack.c.b16 %v486, %v484
        %v513 = vpack.c.b16 %v489, %v487
        %v514 = vpack.c.b16 %v490, %v488
        %v515 = vpack.c.b16 %v493, %v491
        %v516 = vpack.c.b16 %v494, %v492
        %v517 = vpack.c.b16 %v497, %v495
        %v518 = vpack.c.b16 %v498, %v496
        %v519 = vpack.c.b16 %v501, %v499
        %v520 = vpack.c.b16 %v502, %v500
        %v521 = vpack.c.b16 %v505, %v503
        %v522 = vpack.c.b16 %v506, %v504
        %539 = vmatpush.bf16.msra.mxu0 %v521
        %540 = vmatpush.bf16.msra.mxu0 %v519
        %541 = vmatpush.bf16.msra.mxu0 %v517
        %542 = vmatpush.bf16.msra.mxu0 %v515
        %543 = vmatpush.bf16.msra.mxu0 %v513
        %544 = vmatpush.bf16.msra.mxu0 %v511
        %545 = vmatpush.bf16.msra.mxu0 %v509
        %546 = vmatpush.bf16.msra.mxu0 %v507
        %547 = vmatmul.bf16.gmra.mxu0 %v442
        %v548 = vpop.f32.mrf.mxu0
        %v549 = vadd.f32 0.0, %v548
        %v550 = vpop.f32.mrf.mxu0
        %551 = vdwg.mxu0
        %552 = vmatpush.bf16.msra.mxu0 %v522
        %553 = vmatpush.bf16.msra.mxu0 %v520
        %554 = vmatpush.bf16.msra.mxu0 %v518
        %555 = vmatpush.bf16.msra.mxu0 %v516
        %556 = vmatpush.bf16.msra.mxu0 %v514
        %557 = vmatpush.bf16.msra.mxu0 %v512
        %558 = vmatpush.bf16.msra.mxu0 %v510
        %559 = vmatpush.bf16.msra.mxu0 %v508
        %560 = vmatmul.bf16.gmra.mxu0 %v442
        %v561 = vpop.f32.mrf.mxu0
        %v562 = vadd.f32 0.0, %v561
        %v563 = vpop.f32.mrf.mxu0
        %564 = vdwg.mxu0
        %v565 = vld [vmem:[%s4] sm:$0xff]
        %v566 = vld [vmem:[%s4 + $0x8] sm:$0xff]
        %v567 = vld [vmem:[%s4 + $0x10] sm:$0xff]
        %v568 = vld [vmem:[%s4 + $0x18] sm:$0xff]
        %v569 = vld [vmem:[%s4 + $0x20] sm:$0xff]
        %v570 = vld [vmem:[%s4 + $0x28] sm:$0xff]
        %v571 = vld [vmem:[%s4 + $0x30] sm:$0xff]
        %v572 = vld [vmem:[%s4 + $0x38] sm:$0xff]
        %v573 = vld [vmem:[%s4 + $0x40] sm:$0xff]
        %v574 = vld [vmem:[%s4 + $0x48] sm:$0xff]
        %v575 = vld [vmem:[%s4 + $0x50] sm:$0xff]
        %v576 = vld [vmem:[%s4 + $0x58] sm:$0xff]
        %v577 = vld [vmem:[%s4 + $0x60] sm:$0xff]
        %v578 = vld [vmem:[%s4 + $0x68] sm:$0xff]
        %v579 = vld [vmem:[%s4 + $0x70] sm:$0xff]
        %v580 = vld [vmem:[%s4 + $0x78] sm:$0xff]
        %v581 = vld [vmem:[%s4 + $0x80] sm:$0xff]
        %v582 = vld [vmem:[%s4 + $0x88] sm:$0xff]
        %v583 = vld [vmem:[%s4 + $0x90] sm:$0xff]
        %v584 = vld [vmem:[%s4 + $0x98] sm:$0xff]
        %v585 = vld [vmem:[%s4 + $0xa0] sm:$0xff]
        %v586 = vld [vmem:[%s4 + $0xa8] sm:$0xff]
        %v587 = vld [vmem:[%s4 + $0xb0] sm:$0xff]
        %v588 = vld [vmem:[%s4 + $0xb8] sm:$0xff]
        %v589 = vld [vmem:[%s4 + $0xc0] sm:$0xff]
        %v590 = vld [vmem:[%s4 + $0xc8] sm:$0xff]
        %v591 = vld [vmem:[%s4 + $0xd0] sm:$0xff]
        %v592 = vld [vmem:[%s4 + $0xd8] sm:$0xff]
        %v593 = vld [vmem:[%s4 + $0xe0] sm:$0xff]
        %v594 = vld [vmem:[%s4 + $0xe8] sm:$0xff]
        %v595 = vld [vmem:[%s4 + $0xf0] sm:$0xff]
        %v596 = vld [vmem:[%s4 + $0xf8] sm:$0xff]
        %597 = vmatpush.msra.mxu0 %v580
        %598 = vmatpush.msra.mxu0 %v579
        %599 = vmatpush.msra.mxu0 %v578
        %600 = vmatpush.msra.mxu0 %v577
        %601 = vmatpush.msra.mxu0 %v576
        %602 = vmatpush.msra.mxu0 %v575
        %603 = vmatpush.msra.mxu0 %v574
        %604 = vmatpush.msra.mxu0 %v573
        %605 = vmatpush.msra.mxu0 %v572
        %606 = vmatpush.msra.mxu0 %v571
        %607 = vmatpush.msra.mxu0 %v570
        %608 = vmatpush.msra.mxu0 %v569
        %609 = vmatpush.msra.mxu0 %v568
        %610 = vmatpush.msra.mxu0 %v567
        %611 = vmatpush.msra.mxu0 %v566
        %612 = vmatpush.msra.mxu0 %v565
        %613 = vmatmul.f32.gmra.mxu0 %v549
        %v614 = vpop.f32.mrf.mxu0
        %v615 = vadd.f32 0.0, %v614
        %616 = vdwg.mxu0
        %617 = vmatpush.msra.mxu0 %v596
        %618 = vmatpush.msra.mxu0 %v595
        %619 = vmatpush.msra.mxu0 %v594
        %620 = vmatpush.msra.mxu0 %v593
        %621 = vmatpush.msra.mxu0 %v592
        %622 = vmatpush.msra.mxu0 %v591
        %623 = vmatpush.msra.mxu0 %v590
        %624 = vmatpush.msra.mxu0 %v589
        %625 = vmatpush.msra.mxu0 %v588
        %626 = vmatpush.msra.mxu0 %v587
        %627 = vmatpush.msra.mxu0 %v586
        %628 = vmatpush.msra.mxu0 %v585
        %629 = vmatpush.msra.mxu0 %v584
        %630 = vmatpush.msra.mxu0 %v583
        %631 = vmatpush.msra.mxu0 %v582
        %632 = vmatpush.msra.mxu0 %v581
        %633 = vmatmul.f32.gmra.mxu0 %v562
        %v634 = vpop.f32.mrf.mxu0
        %v635 = vadd.f32 %v615, %v634
        %636 = vdwg.mxu0
        %v637 = vmul.f32 %v635, 0.015625
        %v638 = vld [vmem:[%s5] sm:$0xff]
        %640 = vst [vmem:[#allocation1] ss:$2 sm:$0xff] %v638
        %v641 = vld.sshfl [vmem:[#allocation1] sm:$0xff pattern:$0x75316420]
        %v642 = vld.sshfl [vmem:[#allocation1 + $0x8] sm:$0xff pattern:$0x75316420]
        %vm643 = vcmask 31744
        %v645 = vsel %vm643, %v637, 0
        %vm647 = vcmask 1043456
        %v648 = vsel %vm647, %v641, 0
        %v650 = vsel %vm647, %v642, 0
        %652 = vmatpush.msra.mxu0 0.0
        %653 = vmatpush.msra.mxu0 0.0
        %654 = vmatpush.msra.mxu0 0.0
        %655 = vmatpush.msra.mxu0 0.0
        %656 = vmatpush.msra.mxu0 0.0
        %657 = vmatpush.msra.mxu0 0.0
        %658 = vmatpush.msra.mxu0 0.0
        %659 = vmatpush.msra.mxu0 0.0
        %660 = vmatpush.msra.mxu0 0.0
        %661 = vmatpush.msra.mxu0 0.0
        %662 = vmatpush.msra.mxu0 0.0
        %663 = vmatpush.msra.mxu0 0.0
        %664 = vmatpush.msra.mxu0 0.0
        %665 = vmatpush.msra.mxu0 0.0
        %666 = vmatpush.msra.mxu0 0.0
        %667 = vmatpush.msra.mxu0 %v648
        %668 = vmatmul.f32.gmra.mxu0 %v645
        %v669 = vpop.f32.mrf.mxu0
        %v670 = vadd.f32 0.0, %v669
        %671 = vdwg.mxu0
        %672 = vmatpush.msra.mxu0 0.0
        %673 = vmatpush.msra.mxu0 0.0
        %674 = vmatpush.msra.mxu0 0.0
        %675 = vmatpush.msra.mxu0 0.0
        %676 = vmatpush.msra.mxu0 0.0
        %677 = vmatpush.msra.mxu0 0.0
        %678 = vmatpush.msra.mxu0 0.0
        %679 = vmatpush.msra.mxu0 0.0
        %680 = vmatpush.msra.mxu0 0.0
        %681 = vmatpush.msra.mxu0 0.0
        %682 = vmatpush.msra.mxu0 0.0
        %683 = vmatpush.msra.mxu0 0.0
        %684 = vmatpush.msra.mxu0 0.0
        %685 = vmatpush.msra.mxu0 0.0
        %686 = vmatpush.msra.mxu0 0.0
        %687 = vmatpush.msra.mxu0 %v650
        %688 = vmatmul.f32.gmra.mxu0 %v645
        %v689 = vpop.f32.mrf.mxu0
        %v690 = vadd.f32 0.0, %v689
        %691 = vdwg.mxu0
        %v692 = vsub.f32 %v549, %v670
        %v693 = vsub.f32 %v562, %v690
        %v694 = vmul.f32 %v692, %v692
        %v695 = vmul.f32 %v693, %v693
        %696 = vmatpush.msra.mxu0 %v580
        %697 = vmatpush.msra.mxu0 %v579
        %698 = vmatpush.msra.mxu0 %v578
        %699 = vmatpush.msra.mxu0 %v577
        %700 = vmatpush.msra.mxu0 %v576
        %701 = vmatpush.msra.mxu0 %v575
        %702 = vmatpush.msra.mxu0 %v574
        %703 = vmatpush.msra.mxu0 %v573
        %704 = vmatpush.msra.mxu0 %v572
        %705 = vmatpush.msra.mxu0 %v571
        %706 = vmatpush.msra.mxu0 %v570
        %707 = vmatpush.msra.mxu0 %v569
        %708 = vmatpush.msra.mxu0 %v568
        %709 = vmatpush.msra.mxu0 %v567
        %710 = vmatpush.msra.mxu0 %v566
        %711 = vmatpush.msra.mxu0 %v565
        %712 = vmatmul.f32.gmra.mxu0 %v694
        %v713 = vpop.f32.mrf.mxu0
        %v714 = vadd.f32 0.0, %v713
        %715 = vdwg.mxu0
        %716 = vmatpush.msra.mxu0 %v596
        %717 = vmatpush.msra.mxu0 %v595
        %718 = vmatpush.msra.mxu0 %v594
        %719 = vmatpush.msra.mxu0 %v593
        %720 = vmatpush.msra.mxu0 %v592
        %721 = vmatpush.msra.mxu0 %v591
        %722 = vmatpush.msra.mxu0 %v590
        %723 = vmatpush.msra.mxu0 %v589
        %724 = vmatpush.msra.mxu0 %v588
        %725 = vmatpush.msra.mxu0 %v587
        %726 = vmatpush.msra.mxu0 %v586
        %727 = vmatpush.msra.mxu0 %v585
        %728 = vmatpush.msra.mxu0 %v584
        %729 = vmatpush.msra.mxu0 %v583
        %730 = vmatpush.msra.mxu0 %v582
        %731 = vmatpush.msra.mxu0 %v581
        %732 = vmatmul.f32.gmra.mxu0 %v695
        %v733 = vpop.f32.mrf.mxu0
        %v734 = vadd.f32 %v714, %v733
        %735 = vdwg.mxu0
        %v736 = vmul.f32 %v734, 0.015625
        %737 = vst [vmem:[#allocation1] ss:$2 sm:$0xff] %v638
        %v738 = vld.sshfl [vmem:[#allocation1] sm:$0xff pattern:$0x75316420]
        %v739 = vld.sshfl [vmem:[#allocation1 + $0x8] sm:$0xff pattern:$0x75316420]
        %v741 = vsel %vm643, %v736, 0
        %v743 = vsel %vm647, %v738, 0
        %v745 = vsel %vm647, %v739, 0
        %747 = vmatpush.msra.mxu0 0.0
        %748 = vmatpush.msra.mxu0 0.0
        %749 = vmatpush.msra.mxu0 0.0
        %750 = vmatpush.msra.mxu0 0.0
        %751 = vmatpush.msra.mxu0 0.0
        %752 = vmatpush.msra.mxu0 0.0
        %753 = vmatpush.msra.mxu0 0.0
        %754 = vmatpush.msra.mxu0 0.0
        %755 = vmatpush.msra.mxu0 0.0
        %756 = vmatpush.msra.mxu0 0.0
        %757 = vmatpush.msra.mxu0 0.0
        %758 = vmatpush.msra.mxu0 0.0
        %759 = vmatpush.msra.mxu0 0.0
        %760 = vmatpush.msra.mxu0 0.0
        %761 = vmatpush.msra.mxu0 0.0
        %762 = vmatpush.msra.mxu0 %v743
        %763 = vmatmul.f32.gmra.mxu0 %v741
        %v764 = vpop.f32.mrf.mxu0
        %v765 = vadd.f32 1e-05, %v764
        %766 = vdwg.mxu0
        %767 = vmatpush.msra.mxu0 0.0
        %768 = vmatpush.msra.mxu0 0.0
        %769 = vmatpush.msra.mxu0 0.0
        %770 = vmatpush.msra.mxu0 0.0
        %771 = vmatpush.msra.mxu0 0.0
        %772 = vmatpush.msra.mxu0 0.0
        %773 = vmatpush.msra.mxu0 0.0
        %774 = vmatpush.msra.mxu0 0.0
        %775 = vmatpush.msra.mxu0 0.0
        %776 = vmatpush.msra.mxu0 0.0
        %777 = vmatpush.msra.mxu0 0.0
        %778 = vmatpush.msra.mxu0 0.0
        %779 = vmatpush.msra.mxu0 0.0
        %780 = vmatpush.msra.mxu0 0.0
        %781 = vmatpush.msra.mxu0 0.0
        %782 = vmatpush.msra.mxu0 %v745
        %783 = vmatmul.f32.gmra.mxu0 %v741
        %v784 = vpop.f32.mrf.mxu0
        %v785 = vadd.f32 1e-05, %v784
        %786 = vdwg.mxu0
        %v787 = vrsqrt.pop %v765
        %v788 = vmul.f32 %v787, %v765
        %v789 = vmul.f32 %v788, %v787
        %v790 = vmul.f32 0.5, %v789
        %v791 = vsub.f32 1.5, %v790
        %v792 = vmul.f32 %v787, %v791
        %vm793 = vweird.f32 %v765
        %vm794 = vweird.f32 %v787
        %vm795 = vmor %vm793, %vm794
        %v796 = vsel %vm795, %v787, %v792
        %v797 = vrsqrt.pop %v785
        %v798 = vmul.f32 %v797, %v785
        %v799 = vmul.f32 %v798, %v797
        %v800 = vmul.f32 0.5, %v799
        %v801 = vsub.f32 1.5, %v800
        %v802 = vmul.f32 %v797, %v801
        %vm803 = vweird.f32 %v785
        %vm804 = vweird.f32 %v797
        %vm805 = vmor %vm803, %vm804
        %v806 = vsel %vm805, %v797, %v802
        %v807 = vmul.f32 %v692, %v796
        %v808 = vmul.f32 %v693, %v806
        %v809 = vld [vmem:[%s6] sm:$0x3]
        %v811 = vperm.slane %v809, 0
        %v812 = vperm.slane %v809, 1
        %v815 = vmul.f32 %v807, %v811
        %v816 = vmul.f32 %v808, %v812
        %v817 = vld [vmem:[%s7] sm:$0x3]
        %v819 = vperm.slane %v817, 0
        %v820 = vperm.slane %v817, 1
        %v823 = vadd.f32 %v815, %v819
        %v824 = vadd.f32 %v816, %v820
        %v827 = vrot.slane %v824, 4
        %v828 = vsel %vm647, %v823, %v827
        %830 = vst [vmem:[%s411] sm:$0xff] %v828
        %s831 = sand.u32 %s219, 1
        %s832 = scalar_lea.sflag [#allocation3], %s831
        %s833 = sand.u32 %s219, 1
        %s834 = smul.addr %s833, 4
        %s835 = scalar_lea.vmem [#allocation2], %s834
        %s836 = sand.u32 %s245, 1
        %s837 = scalar_lea.sflag [#allocation5], %s836
        %s838 = sand.u32 %s245, 1
        %s839 = smul.addr %s838, 4
        %s840 = scalar_lea.vmem [#allocation4], %s839
        %p841 = scmp.lt.s32.totalorder %s28, 1
        %s842 = scalar_select %p841, %s28, 1
        %s843 = smul.addr %s842, 2
        %s844 = smul.addr %s843, 4
        %s845 = scalar_lea.vmem %s10, %s844
        // Predicated region
        $region53: #{upsample_forward.4} parent=51 // pred_check
          %p846 = pneg %p229
        $region54: #{upsample_forward.4} parent=51 // pred_check_branch
          %848 = sbr.rel (%p846) target = $region56
        $region55: #{upsample_forward.4} parent=51 // pred_region
          %850 = vsyncadd %s832, 0
          %s851 = smul.addr %s28, 4
          %s852 = scalar_lea.hbm %s8, %s851
          %s854 = sshll.u32 %s835, 4
          %s855 = int_to_ptr.vmem [resolvable:$true] %s854
          %s856 = sshll.u32 %s852, 4
          %s857 = int_to_ptr.hbm [resolvable:$true] %s856
          %859 = dma.vmem_to_hbm [thread:$0]  %s855, 64, %s857, %s832
        $region56: #{upsample_forward.4} parent=51 // pred_fallthru
          _
        // Predicated region
        $region57: #{upsample_forward.4} parent=51 // pred_check
          %p860 = pneg %p255
        $region58: #{upsample_forward.4} parent=51 // pred_check_branch
          %862 = sbr.rel (%p860) target = $region60
        $region59: #{upsample_forward.4} parent=51 // pred_region
          %864 = vsyncadd %s837, 0
          %s865 = smul.addr %s28, 4
          %s866 = scalar_lea.hbm %s9, %s865
          %s868 = sshll.u32 %s840, 4
          %s869 = int_to_ptr.vmem [resolvable:$true] %s868
          %s870 = sshll.u32 %s866, 4
          %s871 = int_to_ptr.hbm [resolvable:$true] %s870
          %873 = dma.vmem_to_hbm [thread:$0]  %s869, 64, %s871, %s837
        $region60: #{upsample_forward.4} parent=51 // pred_fallthru
          _
        // Predicated region
        $region61: #{upsample_forward.4} parent=51 // pred_check
          %p874 = pneg %p281
        $region62: #{upsample_forward.4} parent=51 // pred_check_branch
          %876 = sbr.rel (%p874) target = $region64
        $region63: #{upsample_forward.4} parent=51 // pred_region
          _
        $region64: #{upsample_forward.4} parent=51 // pred_fallthru
          _
      $region52: #{upsample_forward.4} parent=5 // pred_fallthru
        _
      %p877 = scmp.le.s32.totalorder 2, %s23
      // Predicated region
      $region65: #{upsample_forward.4} parent=5 // pred_check
        %p878 = pneg %p877
      $region66: #{upsample_forward.4} parent=5 // pred_check_branch
        %880 = sbr.rel (%p878) target = $region68
      $region67: #{upsample_forward.4} parent=5 // pred_region
        %s881 = ssub.s32 %s23, 2
        // Predicated region
        $region69: #{upsample_forward.4} parent=67 // pred_check
          %p882 = pneg %p235
        $region70: #{upsample_forward.4} parent=67 // pred_check_branch
          %884 = sbr.rel (%p882) target = $region72
        $region71: #{upsample_forward.4} parent=67 // pred_region
          %s885 = sand.u32 %s220, 1
          %s886 = scalar_lea.sflag [#allocation3], %s885
          %s887 = sand.u32 %s220, 1
          %s888 = smul.addr %s887, 4
          %s889 = scalar_lea.vmem [#allocation2], %s888
          %891 = dma.done %s886, 64
        $region72: #{upsample_forward.4} parent=67 // pred_fallthru
          _
        // Predicated region
        $region73: #{upsample_forward.4} parent=67 // pred_check
          %p892 = pneg %p261
        $region74: #{upsample_forward.4} parent=67 // pred_check_branch
          %894 = sbr.rel (%p892) target = $region76
        $region75: #{upsample_forward.4} parent=67 // pred_region
          %s895 = sand.u32 %s246, 1
          %s896 = scalar_lea.sflag [#allocation5], %s895
          %s897 = sand.u32 %s246, 1
          %s898 = smul.addr %s897, 4
          %s899 = scalar_lea.vmem [#allocation4], %s898
          %901 = dma.done %s896, 64
        $region76: #{upsample_forward.4} parent=67 // pred_fallthru
          _
        // Predicated region
        $region77: #{upsample_forward.4} parent=67 // pred_check
          %p902 = pneg %p287
        $region78: #{upsample_forward.4} parent=67 // pred_check_branch
          %904 = sbr.rel (%p902) target = $region80
        $region79: #{upsample_forward.4} parent=67 // pred_region
          %p905 = scmp.lt.s32.totalorder %s29, 1
          %s906 = scalar_select %p905, %s29, 1
          %s907 = smul.addr %s906, 2
          %s908 = smul.addr %s907, 4
          %s909 = scalar_lea.vmem %s10, %s908
        $region80: #{upsample_forward.4} parent=67 // pred_fallthru
          _
      $region68: #{upsample_forward.4} parent=5 // pred_fallthru
        _
    $region6: #{upsample_forward.4} parent=1 // loop_footer
      %s27 = sadd.s32 1, %s23
    $region7: #{upsample_forward.4} parent=1 // loop_footer_branch
      %22 = sbr.rel target = $region3
    $region8: #{upsample_forward.4} parent=1 // loop_exit
      _
    %910 = vsyncpa [#allocation3], 1
    %s911 = scalar_lea.sflag [#allocation3], 1
    %912 = vsyncpa %s911, 1
    %913 = vsyncpa [#allocation5], 1
    %s914 = scalar_lea.sflag [#allocation5], 1
    %915 = vsyncpa %s914, 1

// kernel: upsample_forward.6
$region0: #{upsample_forward.6}
  #allocation0 [shape = 'u32[]', space=smem, size = 0x4, offset = 0x4, fixed_abs, tag = 'smem constant byte address 0x4 - core index']
  #allocation1 [shape = 'u32[72,128]{1,0:T(1,128)}', space=vmem, size = 0x9000, scoped, tag = 'internal scratch']
  %s0 = inlined_call_operand.vmem [shape: bf16[2,64,128], index: 0, kind: input, shape index: {}]
  %s1 = inlined_call_operand.vmem [shape: bf16[128,128], index: 1, kind: input, shape index: {}]
  %s2 = inlined_call_operand.vmem [shape: f32[1,128], index: 2, kind: input, shape index: {}]
  %s3 = inlined_call_operand.vmem [shape: f32[128,16], index: 3, kind: input, shape index: {}]
  %s4 = inlined_call_operand.vmem [shape: f32[16,128], index: 4, kind: input, shape index: {}]
  %s5 = inlined_call_operand.vmem [shape: f32[1,128], index: 5, kind: input, shape index: {}]
  %s6 = inlined_call_operand.vmem [shape: f32[1,128], index: 6, kind: input, shape index: {}]
  %s7 = inlined_call_operand.vmem [shape: f32[2,64,128], index: 7, kind: output, shape index: {}]
  %s8 = sld [smem:[#allocation0]]
  $region61: #{upsample_forward.6} parent=0
    _
  %s10 = ssub.s32 1, %s8
  %s11 = scalar_select 0, %s10, %s8
  loop: start=0, step=1, limit=4
  $region2: #{upsample_forward.6} parent=0 // loop_pre_header
    _
  $region3: #{upsample_forward.6} parent=0 // loop_header
    %s13 = sphi 0, %s17
    %p14 = scmp.ge.s32.totalorder %s13, 4
    %s23 = sphi 0, %s25
    %s26 = sphi 0, %s23
    %s27 = sphi 0, %s26
    %s43 = sphi 0, %s27
    %s47 = sphi 0, %s47
    %s49 = sphi 0, %s47
    %s50 = sphi 0, %s49
    %s64 = sphi 0, %s50
    %s68 = sphi 0, %s68
    %s70 = sphi 0, %s68
    %s71 = sphi 0, %s70
    %s85 = sphi 0, %s71
    %s89 = sphi 0, %s89
    %s91 = sphi 0, %s89
    %s92 = sphi 0, %s91
    %s106 = sphi 0, %s92
    %s110 = sphi 0, %s110
    %s112 = sphi 0, %s110
    %s113 = sphi 0, %s112
    %s127 = sphi 0, %s113
    %s131 = sphi 0, %s131
    %s133 = sphi 0, %s131
    %s134 = sphi 0, %s133
    %s148 = sphi 0, %s134
    %s152 = sphi 0, %s152
    %s154 = sphi 0, %s152
    %s155 = sphi 0, %s154
    %s169 = sphi 0, %s155
    %s175 = sphi 0, %s177
    %s178 = sphi 0, %s175
    %s179 = sphi 0, %s178
    %s195 = sphi 0, %s179
  $region4: #{upsample_forward.6} parent=0 // loop_header_branch
    %16 = sbr.rel (%p14) target = $region8
  $region5: #{upsample_forward.6} parent=0 // loop_body
    %s18 = ssub.s32 %s13, 1
    %s19 = ssub.s32 %s13, 2
    %s20 = sadd.s32 %s13, 1
    %s21 = ssub.s32 %s13, %s20
    %p22 = scmp.eq.s32.totalorder %s21, 0
    %s24 = sadd.s32 %s23, 1
    %s25 = scalar_select %p22, %s23, %s24
    %p28 = pneg %p22
    %p29 = scmp.eq.s32.totalorder %s13, 1
    %p30 = por %p28, %p29
    %p31 = scmp.ne.s32.totalorder %s23, %s26
    %p32 = scmp.eq.s32.totalorder %s13, 0
    %p33 = por %p31, %p32
    %p34 = scmp.ne.s32.totalorder %s23, %s26
    %p35 = scmp.eq.s32.totalorder %s18, 1
    %p36 = por %p34, %p35
    %p37 = scmp.ne.s32.totalorder %s26, %s27
    %p38 = scmp.eq.s32.totalorder %s18, 0
    %p39 = por %p37, %p38
    %p40 = scmp.ne.s32.totalorder %s26, %s27
    %p41 = scmp.eq.s32.totalorder %s19, 1
    %p42 = por %p40, %p41
    %p44 = scmp.ne.s32.totalorder %s27, %s43
    %p45 = scmp.eq.s32.totalorder %s19, 0
    %p46 = por %p44, %p45
    %s48 = sadd.s32 %s47, 1
    %p51 = scmp.eq.s32.totalorder %s13, 1
    %p52 = scmp.ne.s32.totalorder %s47, %s49
    %p53 = scmp.eq.s32.totalorder %s13, 0
    %p54 = por %p52, %p53
    %p55 = scmp.ne.s32.totalorder %s47, %s49
    %p56 = scmp.eq.s32.totalorder %s18, 1
    %p57 = por %p55, %p56
    %p58 = scmp.ne.s32.totalorder %s49, %s50
    %p59 = scmp.eq.s32.totalorder %s18, 0
    %p60 = por %p58, %p59
    %p61 = scmp.ne.s32.totalorder %s49, %s50
    %p62 = scmp.eq.s32.totalorder %s19, 1
    %p63 = por %p61, %p62
    %p65 = scmp.ne.s32.totalorder %s50, %s64
    %p66 = scmp.eq.s32.totalorder %s19, 0
    %p67 = por %p65, %p66
    %s69 = sadd.s32 %s68, 1
    %p72 = scmp.eq.s32.totalorder %s13, 1
    %p73 = scmp.ne.s32.totalorder %s68, %s70
    %p74 = scmp.eq.s32.totalorder %s13, 0
    %p75 = por %p73, %p74
    %p76 = scmp.ne.s32.totalorder %s68, %s70
    %p77 = scmp.eq.s32.totalorder %s18, 1
    %p78 = por %p76, %p77
    %p79 = scmp.ne.s32.totalorder %s70, %s71
    %p80 = scmp.eq.s32.totalorder %s18, 0
    %p81 = por %p79, %p80
    %p82 = scmp.ne.s32.totalorder %s70, %s71
    %p83 = scmp.eq.s32.totalorder %s19, 1
    %p84 = por %p82, %p83
    %p86 = scmp.ne.s32.totalorder %s71, %s85
    %p87 = scmp.eq.s32.totalorder %s19, 0
    %p88 = por %p86, %p87
    %s90 = sadd.s32 %s89, 1
    %p93 = scmp.eq.s32.totalorder %s13, 1
    %p94 = scmp.ne.s32.totalorder %s89, %s91
    %p95 = scmp.eq.s32.totalorder %s13, 0
    %p96 = por %p94, %p95
    %p97 = scmp.ne.s32.totalorder %s89, %s91
    %p98 = scmp.eq.s32.totalorder %s18, 1
    %p99 = por %p97, %p98
    %p100 = scmp.ne.s32.totalorder %s91, %s92
    %p101 = scmp.eq.s32.totalorder %s18, 0
    %p102 = por %p100, %p101
    %p103 = scmp.ne.s32.totalorder %s91, %s92
    %p104 = scmp.eq.s32.totalorder %s19, 1
    %p105 = por %p103, %p104
    %p107 = scmp.ne.s32.totalorder %s92, %s106
    %p108 = scmp.eq.s32.totalorder %s19, 0
    %p109 = por %p107, %p108
    %s111 = sadd.s32 %s110, 1
    %p114 = scmp.eq.s32.totalorder %s13, 1
    %p115 = scmp.ne.s32.totalorder %s110, %s112
    %p116 = scmp.eq.s32.totalorder %s13, 0
    %p117 = por %p115, %p116
    %p118 = scmp.ne.s32.totalorder %s110, %s112
    %p119 = scmp.eq.s32.totalorder %s18, 1
    %p120 = por %p118, %p119
    %p121 = scmp.ne.s32.totalorder %s112, %s113
    %p122 = scmp.eq.s32.totalorder %s18, 0
    %p123 = por %p121, %p122
    %p124 = scmp.ne.s32.totalorder %s112, %s113
    %p125 = scmp.eq.s32.totalorder %s19, 1
    %p126 = por %p124, %p125
    %p128 = scmp.ne.s32.totalorder %s113, %s127
    %p129 = scmp.eq.s32.totalorder %s19, 0
    %p130 = por %p128, %p129
    %s132 = sadd.s32 %s131, 1
    %p135 = scmp.eq.s32.totalorder %s13, 1
    %p136 = scmp.ne.s32.totalorder %s131, %s133
    %p137 = scmp.eq.s32.totalorder %s13, 0
    %p138 = por %p136, %p137
    %p139 = scmp.ne.s32.totalorder %s131, %s133
    %p140 = scmp.eq.s32.totalorder %s18, 1
    %p141 = por %p139, %p140
    %p142 = scmp.ne.s32.totalorder %s133, %s134
    %p143 = scmp.eq.s32.totalorder %s18, 0
    %p144 = por %p142, %p143
    %p145 = scmp.ne.s32.totalorder %s133, %s134
    %p146 = scmp.eq.s32.totalorder %s19, 1
    %p147 = por %p145, %p146
    %p149 = scmp.ne.s32.totalorder %s134, %s148
    %p150 = scmp.eq.s32.totalorder %s19, 0
    %p151 = por %p149, %p150
    %s153 = sadd.s32 %s152, 1
    %p156 = scmp.eq.s32.totalorder %s13, 1
    %p157 = scmp.ne.s32.totalorder %s152, %s154
    %p158 = scmp.eq.s32.totalorder %s13, 0
    %p159 = por %p157, %p158
    %p160 = scmp.ne.s32.totalorder %s152, %s154
    %p161 = scmp.eq.s32.totalorder %s18, 1
    %p162 = por %p160, %p161
    %p163 = scmp.ne.s32.totalorder %s154, %s155
    %p164 = scmp.eq.s32.totalorder %s18, 0
    %p165 = por %p163, %p164
    %p166 = scmp.ne.s32.totalorder %s154, %s155
    %p167 = scmp.eq.s32.totalorder %s19, 1
    %p168 = por %p166, %p167
    %p170 = scmp.ne.s32.totalorder %s155, %s169
    %p171 = scmp.eq.s32.totalorder %s19, 0
    %p172 = por %p170, %p171
    %s173 = ssub.s32 %s13, %s20
    %p174 = scmp.eq.s32.totalorder %s173, 0
    %s176 = sadd.s32 %s175, 1
    %s177 = scalar_select %p174, %s175, %s176
    %p180 = pneg %p174
    %p181 = scmp.eq.s32.totalorder %s13, 1
    %p182 = por %p180, %p181
    %p183 = scmp.ne.s32.totalorder %s175, %s178
    %p184 = scmp.eq.s32.totalorder %s13, 0
    %p185 = por %p183, %p184
    %p186 = scmp.ne.s32.totalorder %s175, %s178
    %p187 = scmp.eq.s32.totalorder %s18, 1
    %p188 = por %p186, %p187
    %p189 = scmp.ne.s32.totalorder %s178, %s179
    %p190 = scmp.eq.s32.totalorder %s18, 0
    %p191 = por %p189, %p190
    %p192 = scmp.ne.s32.totalorder %s178, %s179
    %p193 = scmp.eq.s32.totalorder %s19, 1
    %p194 = por %p192, %p193
    %p196 = scmp.ne.s32.totalorder %s179, %s195
    %p197 = scmp.eq.s32.totalorder %s19, 0
    %p198 = por %p196, %p197
    %p199 = scmp.le.s32.totalorder 1, %s13
    %p200 = scmp.lt.s32.totalorder %s13, 3
    %p201 = pnand %p199, %p200
    %p202 = pneg %p201
    // Predicated region
    $region9: #{upsample_forward.6} parent=5 // pred_check
      _
    $region10: #{upsample_forward.6} parent=5 // pred_check_branch
      %204 = sbr.rel (%p201) target = $region12
    $region11: #{upsample_forward.6} parent=5 // pred_region
      %s205 = ssub.s32 %s13, 1
      // Predicated region
      $region13: #{upsample_forward.6} parent=11 // pred_check
        %p206 = pneg %p60
      $region14: #{upsample_forward.6} parent=11 // pred_check_branch
        %208 = sbr.rel (%p206) target = $region16
      $region15: #{upsample_forward.6} parent=11 // pred_region
        _
      $region16: #{upsample_forward.6} parent=11 // pred_fallthru
        _
      // Predicated region
      $region17: #{upsample_forward.6} parent=11 // pred_check
        %p209 = pneg %p81
      $region18: #{upsample_forward.6} parent=11 // pred_check_branch
        %211 = sbr.rel (%p209) target = $region20
      $region19: #{upsample_forward.6} parent=11 // pred_region
        _
      $region20: #{upsample_forward.6} parent=11 // pred_fallthru
        _
      // Predicated region
      $region21: #{upsample_forward.6} parent=11 // pred_check
        %p212 = pneg %p102
      $region22: #{upsample_forward.6} parent=11 // pred_check_branch
        %214 = sbr.rel (%p212) target = $region24
      $region23: #{upsample_forward.6} parent=11 // pred_region
        _
      $region24: #{upsample_forward.6} parent=11 // pred_fallthru
        _
      // Predicated region
      $region25: #{upsample_forward.6} parent=11 // pred_check
        %p215 = pneg %p123
      $region26: #{upsample_forward.6} parent=11 // pred_check_branch
        %217 = sbr.rel (%p215) target = $region28
      $region27: #{upsample_forward.6} parent=11 // pred_region
        _
      $region28: #{upsample_forward.6} parent=11 // pred_fallthru
        _
      // Predicated region
      $region29: #{upsample_forward.6} parent=11 // pred_check
        %p218 = pneg %p144
      $region30: #{upsample_forward.6} parent=11 // pred_check_branch
        %220 = sbr.rel (%p218) target = $region32
      $region31: #{upsample_forward.6} parent=11 // pred_region
        _
      $region32: #{upsample_forward.6} parent=11 // pred_fallthru
        _
      // Predicated region
      $region33: #{upsample_forward.6} parent=11 // pred_check
        %p221 = pneg %p165
      $region34: #{upsample_forward.6} parent=11 // pred_check_branch
        %223 = sbr.rel (%p221) target = $region36
      $region35: #{upsample_forward.6} parent=11 // pred_region
        _
      $region36: #{upsample_forward.6} parent=11 // pred_fallthru
        _
    $region12: #{upsample_forward.6} parent=5 // pred_fallthru
      _
    %p224 = scmp.lt.s32.totalorder %s13, 2
    // Predicated region
    $region37: #{upsample_forward.6} parent=5 // pred_check
      %p225 = pneg %p224
    $region38: #{upsample_forward.6} parent=5 // pred_check_branch
      %227 = sbr.rel (%p225) target = $region40
    $region39: #{upsample_forward.6} parent=5 // pred_region
      // Predicated region
      $region41: #{upsample_forward.6} parent=39 // pred_check
        %p228 = pneg %p33
      $region42: #{upsample_forward.6} parent=39 // pred_check_branch
        %230 = sbr.rel (%p228) target = $region44
      $region43: #{upsample_forward.6} parent=39 // pred_region
        %p231 = scmp.lt.s32.totalorder %s13, 1
        %s232 = scalar_select %p231, %s13, 1
        %s233 = smul.addr %s232, 8
        %s234 = smul.addr %s233, 4
        %s235 = scalar_lea.vmem %s0, %s234
      $region44: #{upsample_forward.6} parent=39 // pred_fallthru
        _
    $region40: #{upsample_forward.6} parent=5 // pred_fallthru
      _
    %p236 = scmp.le.s32.totalorder 1, %s13
    %p237 = scmp.lt.s32.totalorder %s13, 3
    %p238 = pnand %p236, %p237
    %p239 = pneg %p238
    // Predicated region
    $region45: #{upsample_forward.6} parent=5 // pred_check
      _
    $region46: #{upsample_forward.6} parent=5 // pred_check_branch
      %241 = sbr.rel (%p238) target = $region48
    $region47: #{upsample_forward.6} parent=5 // pred_region
      %s242 = ssub.s32 %s13, 1
      %p243 = scmp.lt.s32.totalorder %s18, 1
      %s244 = scalar_select %p243, %s18, 1
      %s245 = smul.addr %s244, 8
      %s246 = smul.addr %s245, 4
      %s247 = scalar_lea.vmem %s0, %s246
      %p248 = pneg %p39
      %p249 = pneg %p36
      %p250 = pneg %p60
      %p251 = pneg %p57
      %p252 = pneg %p81
      %p253 = pneg %p78
      %p254 = pneg %p102
      %p255 = pneg %p99
      %p256 = pneg %p123
      %p257 = pneg %p120
      %p258 = pneg %p144
      %p259 = pneg %p141
      %p260 = pneg %p165
      %p261 = pneg %p162
      %p262 = pneg %p191
      %p263 = pneg %p188
      %p264 = scmp.lt.s32.totalorder %s18, 1
      %s265 = scalar_select %p264, %s18, 1
      %s266 = smul.addr %s265, 8
      %s267 = smul.addr %s266, 8
      %s268 = scalar_lea.vmem %s7, %s267
      %p269 = scmp.lt.s32.totalorder %s18, 1
      %s270 = scalar_select %p269, %s18, 1
      %s271 = smul.addr %s270, 8
      %s272 = smul.addr %s271, 4
      %s273 = scalar_lea.vmem %s0, %s272
      %p274 = scmp.lt.s32.totalorder %s18, 1
      %s275 = scalar_select %p274, %s18, 1
      %s276 = smul.addr %s275, 8
      %s277 = smul.addr %s276, 8
      %s278 = scalar_lea.vmem %s7, %s277
      %v279 = vld [vmem:[%s273] sm:$0xf]
      %v280 = vld [vmem:[%s273 + $0x4] sm:$0xf]
      %v281 = vld [vmem:[%s273 + $0x8] sm:$0xf]
      %v282 = vld [vmem:[%s273 + $0xc] sm:$0xf]
      %v283 = vld [vmem:[%s273 + $0x10] sm:$0xf]
      %v284 = vld [vmem:[%s273 + $0x14] sm:$0xf]
      %v285 = vld [vmem:[%s273 + $0x18] sm:$0xf]
      %v286 = vld [vmem:[%s273 + $0x1c] sm:$0xf]
      %v287 = vld [vmem:[%s1] sm:$0xf]
      %v288 = vld [vmem:[%s1 + $0x4] sm:$0xf]
      %v289 = vld [vmem:[%s1 + $0x8] sm:$0xf]
      %v290 = vld [vmem:[%s1 + $0xc] sm:$0xf]
      %v291 = vld [vmem:[%s1 + $0x10] sm:$0xf]
      %v292 = vld [vmem:[%s1 + $0x14] sm:$0xf]
      %v293 = vld [vmem:[%s1 + $0x18] sm:$0xf]
      %v294 = vld [vmem:[%s1 + $0x1c] sm:$0xf]
      %v295 = vld [vmem:[%s1 + $0x20] sm:$0xf]
      %v296 = vld [vmem:[%s1 + $0x24] sm:$0xf]
      %v297 = vld [vmem:[%s1 + $0x28] sm:$0xf]
      %v298 = vld [vmem:[%s1 + $0x2c] sm:$0xf]
      %v299 = vld [vmem:[%s1 + $0x30] sm:$0xf]
      %v300 = vld [vmem:[%s1 + $0x34] sm:$0xf]
      %v301 = vld [vmem:[%s1 + $0x38] sm:$0xf]
      %v302 = vld [vmem:[%s1 + $0x3c] sm:$0xf]
      %v303 = vld [vmem:[%s2] sm:$0x1]
      %v305 = vperm.slane %v303, 0
      %v315 = vunpack.c.l.b16 %v279
      %v316 = vunpack.c.l.b16 %v280
      %v317 = vunpack.c.l.b16 %v281
      %v318 = vunpack.c.l.b16 %v282
      %v319 = vunpack.c.l.b16 %v283
      %v320 = vunpack.c.l.b16 %v284
      %v321 = vunpack.c.l.b16 %v285
      %v322 = vunpack.c.l.b16 %v286
      %v323 = vpack.c.b16 %v316, %v315
      %v324 = vpack.c.b16 %v318, %v317
      %v325 = vpack.c.b16 %v320, %v319
      %v326 = vpack.c.b16 %v322, %v321
      %v347 = vunpack.c.l.b16 %v287
      %v348 = vunpack.c.l.b16 %v288
      %v349 = vunpack.c.l.b16 %v289
      %v350 = vunpack.c.l.b16 %v290
      %v351 = vunpack.c.l.b16 %v291
      %v352 = vunpack.c.l.b16 %v292
      %v353 = vunpack.c.l.b16 %v293
      %v354 = vunpack.c.l.b16 %v294
      %v355 = vunpack.c.l.b16 %v295
      %v356 = vunpack.c.l.b16 %v296
      %v357 = vunpack.c.l.b16 %v297
      %v358 = vunpack.c.l.b16 %v298
      %v359 = vunpack.c.l.b16 %v299
      %v360 = vunpack.c.l.b16 %v300
      %v361 = vunpack.c.l.b16 %v301
      %v362 = vunpack.c.l.b16 %v302
      %v363 = vpack.c.b16 %v348, %v347
      %v364 = vpack.c.b16 %v350, %v349
      %v365 = vpack.c.b16 %v352, %v351
      %v366 = vpack.c.b16 %v354, %v353
      %v367 = vpack.c.b16 %v356, %v355
      %v368 = vpack.c.b16 %v358, %v357
      %v369 = vpack.c.b16 %v360, %v359
      %v370 = vpack.c.b16 %v362, %v361
      %379 = vmatpush.bf16.msra.mxu0 %v370
      %380 = vmatpush.bf16.msra.mxu0 %v369
      %381 = vmatpush.bf16.msra.mxu0 %v368
      %382 = vmatpush.bf16.msra.mxu0 %v367
      %383 = vmatpush.bf16.msra.mxu0 %v366
      %384 = vmatpush.bf16.msra.mxu0 %v365
      %385 = vmatpush.bf16.msra.mxu0 %v364
      %386 = vmatpush.bf16.msra.mxu0 %v363
      %387 = vmatmul.bf16.gmra.mxu0 %v323
      %v388 = vpop.f32.mrf.mxu0
      %v389 = vadd.f32 %v305, %v388
      %v390 = vpop.f32.mrf.mxu0
      %v391 = vadd.f32 %v305, %v390
      %392 = vmatmul.bf16.gmra.mxu0 %v324
      %v393 = vpop.f32.mrf.mxu0
      %v394 = vadd.f32 %v305, %v393
      %v395 = vpop.f32.mrf.mxu0
      %v396 = vadd.f32 %v305, %v395
      %397 = vmatmul.bf16.gmra.mxu0 %v325
      %v398 = vpop.f32.mrf.mxu0
      %v399 = vadd.f32 %v305, %v398
      %v400 = vpop.f32.mrf.mxu0
      %v401 = vadd.f32 %v305, %v400
      %402 = vmatmul.bf16.gmra.mxu0 %v326
      %v403 = vpop.f32.mrf.mxu0
      %v404 = vadd.f32 %v305, %v403
      %v405 = vpop.f32.mrf.mxu0
      %v406 = vadd.f32 %v305, %v405
      %407 = vdwg.mxu0
      %v408 = vadd.f32 %v389, %v391
      %v409 = vadd.f32 %v408, %v394
      %v410 = vadd.f32 %v409, %v396
      %v411 = vadd.f32 %v410, %v399
      %v412 = vadd.f32 %v411, %v401
      %v413 = vadd.f32 %v412, %v404
      %v414 = vadd.f32 %v413, %v406
      %v415 = vrot.slane %v414, 4
      %v416 = vadd.f32 %v414, %v415
      %v417 = vrot.slane %v416, 2
      %v418 = vadd.f32 %v416, %v417
      %v419 = vrot.slane %v418, 1
      %v420 = vadd.f32 %v418, %v419
      %v421 = vld [vmem:[%s3] sm:$0xff]
      %v422 = vld [vmem:[%s3 + $0x8] sm:$0xff]
      %v423 = vld [vmem:[%s3 + $0x10] sm:$0xff]
      %v424 = vld [vmem:[%s3 + $0x18] sm:$0xff]
      %v425 = vld [vmem:[%s3 + $0x20] sm:$0xff]
      %v426 = vld [vmem:[%s3 + $0x28] sm:$0xff]
      %v427 = vld [vmem:[%s3 + $0x30] sm:$0xff]
      %v428 = vld [vmem:[%s3 + $0x38] sm:$0xff]
      %v429 = vld [vmem:[%s3 + $0x40] sm:$0xff]
      %v430 = vld [vmem:[%s3 + $0x48] sm:$0xff]
      %v431 = vld [vmem:[%s3 + $0x50] sm:$0xff]
      %v432 = vld [vmem:[%s3 + $0x58] sm:$0xff]
      %v433 = vld [vmem:[%s3 + $0x60] sm:$0xff]
      %v434 = vld [vmem:[%s3 + $0x68] sm:$0xff]
      %v435 = vld [vmem:[%s3 + $0x70] sm:$0xff]
      %v436 = vld [vmem:[%s3 + $0x78] sm:$0xff]
      %437 = vmatpush.msra.mxu0 %v436
      %438 = vmatpush.msra.mxu0 %v435
      %439 = vmatpush.msra.mxu0 %v434
      %440 = vmatpush.msra.mxu0 %v433
      %441 = vmatpush.msra.mxu0 %v432
      %442 = vmatpush.msra.mxu0 %v431
      %443 = vmatpush.msra.mxu0 %v430
      %444 = vmatpush.msra.mxu0 %v429
      %445 = vmatpush.msra.mxu0 %v428
      %446 = vmatpush.msra.mxu0 %v427
      %447 = vmatpush.msra.mxu0 %v426
      %448 = vmatpush.msra.mxu0 %v425
      %449 = vmatpush.msra.mxu0 %v424
      %450 = vmatpush.msra.mxu0 %v423
      %451 = vmatpush.msra.mxu0 %v422
      %452 = vmatpush.msra.mxu0 %v421
      %453 = vmatmul.f32.gmra.mxu0 %v420
      %v454 = vpop.f32.mrf.mxu0
      %v455 = vadd.f32 0.0, %v454
      %456 = vdwg.mxu0
      %v457 = vmul.f32 %v455, 0.001953125
      %v458 = vld [vmem:[%s4] sm:$0xff]
      %v459 = vld [vmem:[%s4 + $0x8] sm:$0xff]
      %vm460 = vcmask 130048
      %v462 = vsel %vm460, %v457, 0
      %464 = vmatpush.msra.mxu0 0.0
      %465 = vmatpush.msra.mxu0 0.0
      %466 = vmatpush.msra.mxu0 0.0
      %467 = vmatpush.msra.mxu0 0.0
      %468 = vmatpush.msra.mxu0 0.0
      %469 = vmatpush.msra.mxu0 0.0
      %470 = vmatpush.msra.mxu0 0.0
      %471 = vmatpush.msra.mxu0 0.0
      %472 = vmatpush.msra.mxu0 0.0
      %473 = vmatpush.msra.mxu0 0.0
      %474 = vmatpush.msra.mxu0 0.0
      %475 = vmatpush.msra.mxu0 0.0
      %476 = vmatpush.msra.mxu0 0.0
      %477 = vmatpush.msra.mxu0 0.0
      %478 = vmatpush.msra.mxu0 %v459
      %479 = vmatpush.msra.mxu0 %v458
      %480 = vmatmul.f32.gmra.mxu0 %v462
      %v481 = vpop.f32.mrf.mxu0
      %v482 = vadd.f32 0.0, %v481
      %483 = vdwg.mxu0
      %v484 = vperm.slane %v482, 0
      %v485 = vsub.f32 %v389, %v484
      %v486 = vsub.f32 %v391, %v484
      %v487 = vsub.f32 %v394, %v484
      %v488 = vsub.f32 %v396, %v484
      %v489 = vsub.f32 %v399, %v484
      %v490 = vsub.f32 %v401, %v484
      %v491 = vsub.f32 %v404, %v484
      %v492 = vsub.f32 %v406, %v484
      %v493 = vmul.f32 %v485, %v485
      %v494 = vmul.f32 %v486, %v486
      %v495 = vmul.f32 %v487, %v487
      %v496 = vmul.f32 %v488, %v488
      %v497 = vmul.f32 %v489, %v489
      %v498 = vmul.f32 %v490, %v490
      %v499 = vmul.f32 %v491, %v491
      %v500 = vmul.f32 %v492, %v492
      %v501 = vadd.f32 %v493, %v494
      %v502 = vadd.f32 %v501, %v495
      %v503 = vadd.f32 %v502, %v496
      %v504 = vadd.f32 %v503, %v497
      %v505 = vadd.f32 %v504, %v498
      %v506 = vadd.f32 %v505, %v499
      %v507 = vadd.f32 %v506, %v500
      %v508 = vrot.slane %v507, 4
      %v509 = vadd.f32 %v507, %v508
      %v510 = vrot.slane %v509, 2
      %v511 = vadd.f32 %v509, %v510
      %v512 = vrot.slane %v511, 1
      %v513 = vadd.f32 %v511, %v512
      %514 = vmatpush.msra.mxu0 %v436
      %515 = vmatpush.msra.mxu0 %v435
      %516 = vmatpush.msra.mxu0 %v434
      %517 = vmatpush.msra.mxu0 %v433
      %518 = vmatpush.msra.mxu0 %v432
      %519 = vmatpush.msra.mxu0 %v431
      %520 = vmatpush.msra.mxu0 %v430
      %521 = vmatpush.msra.mxu0 %v429
      %522 = vmatpush.msra.mxu0 %v428
      %523 = vmatpush.msra.mxu0 %v427
      %524 = vmatpush.msra.mxu0 %v426
      %525 = vmatpush.msra.mxu0 %v425
      %526 = vmatpush.msra.mxu0 %v424
      %527 = vmatpush.msra.mxu0 %v423
      %528 = vmatpush.msra.mxu0 %v422
      %529 = vmatpush.msra.mxu0 %v421
      %530 = vmatmul.f32.gmra.mxu0 %v513
      %v531 = vpop.f32.mrf.mxu0
      %v532 = vadd.f32 0.0, %v531
      %533 = vdwg.mxu0
      %v534 = vmul.f32 %v532, 0.001953125
      %v535 = vadd.f32 %v534, 1e-05
      %v536 = vrsqrt.pop %v535
      %v537 = vmul.f32 %v536, %v535
      %v538 = vmul.f32 %v537, %v536
      %v539 = vmul.f32 0.5, %v538
      %v540 = vsub.f32 1.5, %v539
      %v541 = vmul.f32 %v536, %v540
      %vm542 = vweird.f32 %v535
      %vm543 = vweird.f32 %v536
      %vm544 = vmor %vm542, %vm543
      %v545 = vsel %vm544, %v536, %v541
      %v547 = vsel %vm460, %v545, 0
      %549 = vmatpush.msra.mxu0 0.0
      %550 = vmatpush.msra.mxu0 0.0
      %551 = vmatpush.msra.mxu0 0.0
      %552 = vmatpush.msra.mxu0 0.0
      %553 = vmatpush.msra.mxu0 0.0
      %554 = vmatpush.msra.mxu0 0.0
      %555 = vmatpush.msra.mxu0 0.0
      %556 = vmatpush.msra.mxu0 0.0
      %557 = vmatpush.msra.mxu0 0.0
      %558 = vmatpush.msra.mxu0 0.0
      %559 = vmatpush.msra.mxu0 0.0
      %560 = vmatpush.msra.mxu0 0.0
      %561 = vmatpush.msra.mxu0 0.0
      %562 = vmatpush.msra.mxu0 0.0
      %563 = vmatpush.msra.mxu0 %v459
      %564 = vmatpush.msra.mxu0 %v458
      %565 = vmatmul.f32.gmra.mxu0 %v547
      %v566 = vpop.f32.mrf.mxu0
      %v567 = vadd.f32 0.0, %v566
      %568 = vdwg.mxu0
      %v569 = vperm.slane %v567, 0
      %v570 = vmul.f32 %v485, %v569
      %v571 = vmul.f32 %v486, %v569
      %v572 = vmul.f32 %v487, %v569
      %v573 = vmul.f32 %v488, %v569
      %v574 = vmul.f32 %v489, %v569
      %v575 = vmul.f32 %v490, %v569
      %v576 = vmul.f32 %v491, %v569
      %v577 = vmul.f32 %v492, %v569
      %v578 = vld [vmem:[%s5] sm:$0x1]
      %v580 = vperm.slane %v578, 0
      %v582 = vmul.f32 %v570, %v580
      %v583 = vmul.f32 %v571, %v580
      %v584 = vmul.f32 %v572, %v580
      %v585 = vmul.f32 %v573, %v580
      %v586 = vmul.f32 %v574, %v580
      %v587 = vmul.f32 %v575, %v580
      %v588 = vmul.f32 %v576, %v580
      %v589 = vmul.f32 %v577, %v580
      %v590 = vld [vmem:[%s6] sm:$0x1]
      %v592 = vperm.slane %v590, 0
      %v594 = vadd.f32 %v582, %v592
      %v595 = vadd.f32 %v583, %v592
      %v596 = vadd.f32 %v584, %v592
      %v597 = vadd.f32 %v585, %v592
      %v598 = vadd.f32 %v586, %v592
      %v599 = vadd.f32 %v587, %v592
      %v600 = vadd.f32 %v588, %v592
      %v601 = vadd.f32 %v589, %v592
      %vm602 = vcmp.gt.f32.partialorder %v594, 0.0
      %vm603 = vcmp.gt.f32.partialorder %v595, 0.0
      %vm604 = vcmp.gt.f32.partialorder %v596, 0.0
      %vm605 = vcmp.gt.f32.partialorder %v597, 0.0
      %vm606 = vcmp.gt.f32.partialorder %v598, 0.0
      %vm607 = vcmp.gt.f32.partialorder %v599, 0.0
      %vm608 = vcmp.gt.f32.partialorder %v600, 0.0
      %vm609 = vcmp.gt.f32.partialorder %v601, 0.0
      %v610 = vmul.f32 %v594, 0.2
      %v611 = vmul.f32 %v595, 0.2
      %v612 = vmul.f32 %v596, 0.2
      %v613 = vmul.f32 %v597, 0.2
      %v614 = vmul.f32 %v598, 0.2
      %v615 = vmul.f32 %v599, 0.2
      %v616 = vmul.f32 %v600, 0.2
      %v617 = vmul.f32 %v601, 0.2
      %v618 = vsel %vm602, %v594, %v610
      %v619 = vsel %vm603, %v595, %v611
      %v620 = vsel %vm604, %v596, %v612
      %v621 = vsel %vm605, %v597, %v613
      %v622 = vsel %vm606, %v598, %v614
      %v623 = vsel %vm607, %v599, %v615
      %v624 = vsel %vm608, %v600, %v616
      %v625 = vsel %vm609, %v601, %v617
      %626 = vst [vmem:[%s278] sm:$0xff] %v618
      %627 = vst [vmem:[%s278 + $0x8] sm:$0xff] %v619
      %628 = vst [vmem:[%s278 + $0x10] sm:$0xff] %v620
      %629 = vst [vmem:[%s278 + $0x18] sm:$0xff] %v621
      %630 = vst [vmem:[%s278 + $0x20] sm:$0xff] %v622
      %631 = vst [vmem:[%s278 + $0x28] sm:$0xff] %v623
      %632 = vst [vmem:[%s278 + $0x30] sm:$0xff] %v624
      %633 = vst [vmem:[%s278 + $0x38] sm:$0xff] %v625
      %p634 = scmp.lt.s32.totalorder %s18, 1
      %s635 = scalar_select %p634, %s18, 1
      %s636 = smul.addr %s635, 8
      %s637 = smul.addr %s636, 8
      %s638 = scalar_lea.vmem %s7, %s637
      // Predicated region
      $region49: #{upsample_forward.6} parent=47 // pred_check
        %p639 = pneg %p188
      $region50: #{upsample_forward.6} parent=47 // pred_check_branch
        %641 = sbr.rel (%p639) target = $region52
      $region51: #{upsample_forward.6} parent=47 // pred_region
        _
      $region52: #{upsample_forward.6} parent=47 // pred_fallthru
        _
    $region48: #{upsample_forward.6} parent=5 // pred_fallthru
      _
    %p642 = scmp.le.s32.totalorder 2, %s13
    // Predicated region
    $region53: #{upsample_forward.6} parent=5 // pred_check
      %p643 = pneg %p642
    $region54: #{upsample_forward.6} parent=5 // pred_check_branch
      %645 = sbr.rel (%p643) target = $region56
    $region55: #{upsample_forward.6} parent=5 // pred_region
      %s646 = ssub.s32 %s13, 2
      // Predicated region
      $region57: #{upsample_forward.6} parent=55 // pred_check
        %p647 = pneg %p194
      $region58: #{upsample_forward.6} parent=55 // pred_check_branch
        %649 = sbr.rel (%p647) target = $region60
      $region59: #{upsample_forward.6} parent=55 // pred_region
        %p650 = scmp.lt.s32.totalorder %s19, 1
        %s651 = scalar_select %p650, %s19, 1
        %s652 = smul.addr %s651, 8
        %s653 = smul.addr %s652, 8
        %s654 = scalar_lea.vmem %s7, %s653
      $region60: #{upsample_forward.6} parent=55 // pred_fallthru
        _
    $region56: #{upsample_forward.6} parent=5 // pred_fallthru
      _
  $region6: #{upsample_forward.6} parent=0 // loop_footer
    %s17 = sadd.s32 1, %s13
  $region7: #{upsample_forward.6} parent=0 // loop_footer_branch
    %12 = sbr.rel target = $region3
  $region8: #{upsample_forward.6} parent=0 // loop_exit
    _

// kernel: upsample_forward.7
$region0: #{upsample_forward.7}
  #allocation0 [shape = 'u32[]', space=smem, size = 0x4, offset = 0x4, fixed_abs, tag = 'smem constant byte address 0x4 - core index']
  #allocation1 [shape = 'u32[72,128]{1,0:T(1,128)}', space=vmem, size = 0x9000, scoped, tag = 'internal scratch']
  %s0 = inlined_call_operand.vmem [shape: bf16[2,256,128], index: 0, kind: input, shape index: {}]
  %s1 = inlined_call_operand.vmem [shape: bf16[128,16], index: 1, kind: input, shape index: {}]
  %s2 = inlined_call_operand.vmem [shape: f32[1,16], index: 2, kind: input, shape index: {}]
  %s3 = inlined_call_operand.vmem [shape: f32[2,256,16], index: 3, kind: output, shape index: {}]
  %s4 = sld [smem:[#allocation0]]
  $region45: #{upsample_forward.7} parent=0
    _
  %s6 = ssub.s32 1, %s4
  %s7 = scalar_select 0, %s6, %s4
  loop: start=0, step=1, limit=4
  $region2: #{upsample_forward.7} parent=0 // loop_pre_header
    _
  $region3: #{upsample_forward.7} parent=0 // loop_header
    %s9 = sphi 0, %s13
    %p10 = scmp.ge.s32.totalorder %s9, 4
    %s19 = sphi 0, %s21
    %s22 = sphi 0, %s19
    %s23 = sphi 0, %s22
    %s39 = sphi 0, %s23
    %s43 = sphi 0, %s43
    %s45 = sphi 0, %s43
    %s46 = sphi 0, %s45
    %s60 = sphi 0, %s46
    %s64 = sphi 0, %s64
    %s66 = sphi 0, %s64
    %s67 = sphi 0, %s66
    %s81 = sphi 0, %s67
    %s87 = sphi 0, %s89
    %s90 = sphi 0, %s87
    %s91 = sphi 0, %s90
    %s107 = sphi 0, %s91
  $region4: #{upsample_forward.7} parent=0 // loop_header_branch
    %12 = sbr.rel (%p10) target = $region8
  $region5: #{upsample_forward.7} parent=0 // loop_body
    %s14 = ssub.s32 %s9, 1
    %s15 = ssub.s32 %s9, 2
    %s16 = sadd.s32 %s9, 1
    %s17 = ssub.s32 %s9, %s16
    %p18 = scmp.eq.s32.totalorder %s17, 0
    %s20 = sadd.s32 %s19, 1
    %s21 = scalar_select %p18, %s19, %s20
    %p24 = pneg %p18
    %p25 = scmp.eq.s32.totalorder %s9, 1
    %p26 = por %p24, %p25
    %p27 = scmp.ne.s32.totalorder %s19, %s22
    %p28 = scmp.eq.s32.totalorder %s9, 0
    %p29 = por %p27, %p28
    %p30 = scmp.ne.s32.totalorder %s19, %s22
    %p31 = scmp.eq.s32.totalorder %s14, 1
    %p32 = por %p30, %p31
    %p33 = scmp.ne.s32.totalorder %s22, %s23
    %p34 = scmp.eq.s32.totalorder %s14, 0
    %p35 = por %p33, %p34
    %p36 = scmp.ne.s32.totalorder %s22, %s23
    %p37 = scmp.eq.s32.totalorder %s15, 1
    %p38 = por %p36, %p37
    %p40 = scmp.ne.s32.totalorder %s23, %s39
    %p41 = scmp.eq.s32.totalorder %s15, 0
    %p42 = por %p40, %p41
    %s44 = sadd.s32 %s43, 1
    %p47 = scmp.eq.s32.totalorder %s9, 1
    %p48 = scmp.ne.s32.totalorder %s43, %s45
    %p49 = scmp.eq.s32.totalorder %s9, 0
    %p50 = por %p48, %p49
    %p51 = scmp.ne.s32.totalorder %s43, %s45
    %p52 = scmp.eq.s32.totalorder %s14, 1
    %p53 = por %p51, %p52
    %p54 = scmp.ne.s32.totalorder %s45, %s46
    %p55 = scmp.eq.s32.totalorder %s14, 0
    %p56 = por %p54, %p55
    %p57 = scmp.ne.s32.totalorder %s45, %s46
    %p58 = scmp.eq.s32.totalorder %s15, 1
    %p59 = por %p57, %p58
    %p61 = scmp.ne.s32.totalorder %s46, %s60
    %p62 = scmp.eq.s32.totalorder %s15, 0
    %p63 = por %p61, %p62
    %s65 = sadd.s32 %s64, 1
    %p68 = scmp.eq.s32.totalorder %s9, 1
    %p69 = scmp.ne.s32.totalorder %s64, %s66
    %p70 = scmp.eq.s32.totalorder %s9, 0
    %p71 = por %p69, %p70
    %p72 = scmp.ne.s32.totalorder %s64, %s66
    %p73 = scmp.eq.s32.totalorder %s14, 1
    %p74 = por %p72, %p73
    %p75 = scmp.ne.s32.totalorder %s66, %s67
    %p76 = scmp.eq.s32.totalorder %s14, 0
    %p77 = por %p75, %p76
    %p78 = scmp.ne.s32.totalorder %s66, %s67
    %p79 = scmp.eq.s32.totalorder %s15, 1
    %p80 = por %p78, %p79
    %p82 = scmp.ne.s32.totalorder %s67, %s81
    %p83 = scmp.eq.s32.totalorder %s15, 0
    %p84 = por %p82, %p83
    %s85 = ssub.s32 %s9, %s16
    %p86 = scmp.eq.s32.totalorder %s85, 0
    %s88 = sadd.s32 %s87, 1
    %s89 = scalar_select %p86, %s87, %s88
    %p92 = pneg %p86
    %p93 = scmp.eq.s32.totalorder %s9, 1
    %p94 = por %p92, %p93
    %p95 = scmp.ne.s32.totalorder %s87, %s90
    %p96 = scmp.eq.s32.totalorder %s9, 0
    %p97 = por %p95, %p96
    %p98 = scmp.ne.s32.totalorder %s87, %s90
    %p99 = scmp.eq.s32.totalorder %s14, 1
    %p100 = por %p98, %p99
    %p101 = scmp.ne.s32.totalorder %s90, %s91
    %p102 = scmp.eq.s32.totalorder %s14, 0
    %p103 = por %p101, %p102
    %p104 = scmp.ne.s32.totalorder %s90, %s91
    %p105 = scmp.eq.s32.totalorder %s15, 1
    %p106 = por %p104, %p105
    %p108 = scmp.ne.s32.totalorder %s91, %s107
    %p109 = scmp.eq.s32.totalorder %s15, 0
    %p110 = por %p108, %p109
    %p111 = scmp.le.s32.totalorder 1, %s9
    %p112 = scmp.lt.s32.totalorder %s9, 3
    %p113 = pnand %p111, %p112
    %p114 = pneg %p113
    // Predicated region
    $region9: #{upsample_forward.7} parent=5 // pred_check
      _
    $region10: #{upsample_forward.7} parent=5 // pred_check_branch
      %116 = sbr.rel (%p113) target = $region12
    $region11: #{upsample_forward.7} parent=5 // pred_region
      %s117 = ssub.s32 %s9, 1
      // Predicated region
      $region13: #{upsample_forward.7} parent=11 // pred_check
        %p118 = pneg %p56
      $region14: #{upsample_forward.7} parent=11 // pred_check_branch
        %120 = sbr.rel (%p118) target = $region16
      $region15: #{upsample_forward.7} parent=11 // pred_region
        _
      $region16: #{upsample_forward.7} parent=11 // pred_fallthru
        _
      // Predicated region
      $region17: #{upsample_forward.7} parent=11 // pred_check
        %p121 = pneg %p77
      $region18: #{upsample_forward.7} parent=11 // pred_check_branch
        %123 = sbr.rel (%p121) target = $region20
      $region19: #{upsample_forward.7} parent=11 // pred_region
        _
      $region20: #{upsample_forward.7} parent=11 // pred_fallthru
        _
    $region12: #{upsample_forward.7} parent=5 // pred_fallthru
      _
    %p124 = scmp.lt.s32.totalorder %s9, 2
    // Predicated region
    $region21: #{upsample_forward.7} parent=5 // pred_check
      %p125 = pneg %p124
    $region22: #{upsample_forward.7} parent=5 // pred_check_branch
      %127 = sbr.rel (%p125) target = $region24
    $region23: #{upsample_forward.7} parent=5 // pred_region
      // Predicated region
      $region25: #{upsample_forward.7} parent=23 // pred_check
        %p128 = pneg %p29
      $region26: #{upsample_forward.7} parent=23 // pred_check_branch
        %130 = sbr.rel (%p128) target = $region28
      $region27: #{upsample_forward.7} parent=23 // pred_region
        %p131 = scmp.lt.s32.totalorder %s9, 1
        %s132 = scalar_select %p131, %s9, 1
        %s133 = smul.addr %s132, 32
        %s134 = smul.addr %s133, 4
        %s135 = scalar_lea.vmem %s0, %s134
      $region28: #{upsample_forward.7} parent=23 // pred_fallthru
        _
    $region24: #{upsample_forward.7} parent=5 // pred_fallthru
      _
    %p136 = scmp.le.s32.totalorder 1, %s9
    %p137 = scmp.lt.s32.totalorder %s9, 3
    %p138 = pnand %p136, %p137
    %p139 = pneg %p138
    // Predicated region
    $region29: #{upsample_forward.7} parent=5 // pred_check
      _
    $region30: #{upsample_forward.7} parent=5 // pred_check_branch
      %141 = sbr.rel (%p138) target = $region32
    $region31: #{upsample_forward.7} parent=5 // pred_region
      %s142 = ssub.s32 %s9, 1
      %p143 = scmp.lt.s32.totalorder %s14, 1
      %s144 = scalar_select %p143, %s14, 1
      %s145 = smul.addr %s144, 32
      %s146 = smul.addr %s145, 4
      %s147 = scalar_lea.vmem %s0, %s146
      %p148 = pneg %p35
      %p149 = pneg %p32
      %p150 = pneg %p56
      %p151 = pneg %p53
      %p152 = pneg %p77
      %p153 = pneg %p74
      %p154 = pneg %p103
      %p155 = pneg %p100
      %p156 = scmp.lt.s32.totalorder %s14, 1
      %s157 = scalar_select %p156, %s14, 1
      %s158 = smul.addr %s157, 32
      %s159 = smul.addr %s158, 8
      %s160 = scalar_lea.vmem %s3, %s159
      %p161 = scmp.lt.s32.totalorder %s14, 1
      %s162 = scalar_select %p161, %s14, 1
      %s163 = smul.addr %s162, 32
      %s164 = smul.addr %s163, 4
      %s165 = scalar_lea.vmem %s0, %s164
      %p166 = scmp.lt.s32.totalorder %s14, 1
      %s167 = scalar_select %p166, %s14, 1
      %s168 = smul.addr %s167, 32
      %s169 = smul.addr %s168, 8
      %s170 = scalar_lea.vmem %s3, %s169
      %v171 = vld [vmem:[%s165] sm:$0xf]
      %v172 = vld [vmem:[%s165 + $0x4] sm:$0xf]
      %v173 = vld [vmem:[%s165 + $0x8] sm:$0xf]
      %v174 = vld [vmem:[%s165 + $0xc] sm:$0xf]
      %v175 = vld [vmem:[%s165 + $0x10] sm:$0xf]
      %v176 = vld [vmem:[%s165 + $0x14] sm:$0xf]
      %v177 = vld [vmem:[%s165 + $0x18] sm:$0xf]
      %v178 = vld [vmem:[%s165 + $0x1c] sm:$0xf]
      %v179 = vld [vmem:[%s165 + $0x20] sm:$0xf]
      %v180 = vld [vmem:[%s165 + $0x24] sm:$0xf]
      %v181 = vld [vmem:[%s165 + $0x28] sm:$0xf]
      %v182 = vld [vmem:[%s165 + $0x2c] sm:$0xf]
      %v183 = vld [vmem:[%s165 + $0x30] sm:$0xf]
      %v184 = vld [vmem:[%s165 + $0x34] sm:$0xf]
      %v185 = vld [vmem:[%s165 + $0x38] sm:$0xf]
      %v186 = vld [vmem:[%s165 + $0x3c] sm:$0xf]
      %v187 = vld [vmem:[%s165 + $0x40] sm:$0xf]
      %v188 = vld [vmem:[%s165 + $0x44] sm:$0xf]
      %v189 = vld [vmem:[%s165 + $0x48] sm:$0xf]
      %v190 = vld [vmem:[%s165 + $0x4c] sm:$0xf]
      %v191 = vld [vmem:[%s165 + $0x50] sm:$0xf]
      %v192 = vld [vmem:[%s165 + $0x54] sm:$0xf]
      %v193 = vld [vmem:[%s165 + $0x58] sm:$0xf]
      %v194 = vld [vmem:[%s165 + $0x5c] sm:$0xf]
      %v195 = vld [vmem:[%s165 + $0x60] sm:$0xf]
      %v196 = vld [vmem:[%s165 + $0x64] sm:$0xf]
      %v197 = vld [vmem:[%s165 + $0x68] sm:$0xf]
      %v198 = vld [vmem:[%s165 + $0x6c] sm:$0xf]
      %v199 = vld [vmem:[%s165 + $0x70] sm:$0xf]
      %v200 = vld [vmem:[%s165 + $0x74] sm:$0xf]
      %v201 = vld [vmem:[%s165 + $0x78] sm:$0xf]
      %v202 = vld [vmem:[%s165 + $0x7c] sm:$0xf]
      %v203 = vld [vmem:[%s1] sm:$0xf]
      %v204 = vld [vmem:[%s1 + $0x4] sm:$0xf]
      %v205 = vld [vmem:[%s1 + $0x8] sm:$0xf]
      %v206 = vld [vmem:[%s1 + $0xc] sm:$0xf]
      %v207 = vld [vmem:[%s1 + $0x10] sm:$0xf]
      %v208 = vld [vmem:[%s1 + $0x14] sm:$0xf]
      %v209 = vld [vmem:[%s1 + $0x18] sm:$0xf]
      %v210 = vld [vmem:[%s1 + $0x1c] sm:$0xf]
      %v211 = vld [vmem:[%s1 + $0x20] sm:$0xf]
      %v212 = vld [vmem:[%s1 + $0x24] sm:$0xf]
      %v213 = vld [vmem:[%s1 + $0x28] sm:$0xf]
      %v214 = vld [vmem:[%s1 + $0x2c] sm:$0xf]
      %v215 = vld [vmem:[%s1 + $0x30] sm:$0xf]
      %v216 = vld [vmem:[%s1 + $0x34] sm:$0xf]
      %v217 = vld [vmem:[%s1 + $0x38] sm:$0xf]
      %v218 = vld [vmem:[%s1 + $0x3c] sm:$0xf]
      %v219 = vld [vmem:[%s2] sm:$0x1]
      %v221 = vperm.slane %v219, 0
      %v255 = vunpack.c.l.b16 %v171
      %v256 = vunpack.c.l.b16 %v172
      %v257 = vunpack.c.l.b16 %v173
      %v258 = vunpack.c.l.b16 %v174
      %v259 = vunpack.c.l.b16 %v175
      %v260 = vunpack.c.l.b16 %v176
      %v261 = vunpack.c.l.b16 %v177
      %v262 = vunpack.c.l.b16 %v178
      %v263 = vunpack.c.l.b16 %v179
      %v264 = vunpack.c.l.b16 %v180
      %v265 = vunpack.c.l.b16 %v181
      %v266 = vunpack.c.l.b16 %v182
      %v267 = vunpack.c.l.b16 %v183
      %v268 = vunpack.c.l.b16 %v184
      %v269 = vunpack.c.l.b16 %v185
      %v270 = vunpack.c.l.b16 %v186
      %v271 = vunpack.c.l.b16 %v187
      %v272 = vunpack.c.l.b16 %v188
      %v273 = vunpack.c.l.b16 %v189
      %v274 = vunpack.c.l.b16 %v190
      %v275 = vunpack.c.l.b16 %v191
      %v276 = vunpack.c.l.b16 %v192
      %v277 = vunpack.c.l.b16 %v193
      %v278 = vunpack.c.l.b16 %v194
      %v279 = vunpack.c.l.b16 %v195
      %v280 = vunpack.c.l.b16 %v196
      %v281 = vunpack.c.l.b16 %v197
      %v282 = vunpack.c.l.b16 %v198
      %v283 = vunpack.c.l.b16 %v199
      %v284 = vunpack.c.l.b16 %v200
      %v285 = vunpack.c.l.b16 %v201
      %v286 = vunpack.c.l.b16 %v202
      %v287 = vpack.c.b16 %v256, %v255
      %v288 = vpack.c.b16 %v258, %v257
      %v289 = vpack.c.b16 %v260, %v259
      %v290 = vpack.c.b16 %v262, %v261
      %v291 = vpack.c.b16 %v264, %v263
      %v292 = vpack.c.b16 %v266, %v265
      %v293 = vpack.c.b16 %v268, %v267
      %v294 = vpack.c.b16 %v270, %v269
      %v295 = vpack.c.b16 %v272, %v271
      %v296 = vpack.c.b16 %v274, %v273
      %v297 = vpack.c.b16 %v276, %v275
      %v298 = vpack.c.b16 %v278, %v277
      %v299 = vpack.c.b16 %v280, %v279
      %v300 = vpack.c.b16 %v282, %v281
      %v301 = vpack.c.b16 %v284, %v283
      %v302 = vpack.c.b16 %v286, %v285
      %v335 = vunpack.c.l.b16 %v203
      %v336 = vunpack.c.l.b16 %v204
      %v337 = vunpack.c.l.b16 %v205
      %v338 = vunpack.c.l.b16 %v206
      %v339 = vunpack.c.l.b16 %v207
      %v340 = vunpack.c.l.b16 %v208
      %v341 = vunpack.c.l.b16 %v209
      %v342 = vunpack.c.l.b16 %v210
      %v343 = vunpack.c.l.b16 %v211
      %v344 = vunpack.c.l.b16 %v212
      %v345 = vunpack.c.l.b16 %v213
      %v346 = vunpack.c.l.b16 %v214
      %v347 = vunpack.c.l.b16 %v215
      %v348 = vunpack.c.l.b16 %v216
      %v349 = vunpack.c.l.b16 %v217
      %v350 = vunpack.c.l.b16 %v218
      %v351 = vpack.c.b16 %v336, %v335
      %v352 = vpack.c.b16 %v338, %v337
      %v353 = vpack.c.b16 %v340, %v339
      %v354 = vpack.c.b16 %v342, %v341
      %v355 = vpack.c.b16 %v344, %v343
      %v356 = vpack.c.b16 %v346, %v345
      %v357 = vpack.c.b16 %v348, %v347
      %v358 = vpack.c.b16 %v350, %v349
      %367 = vmatpush.bf16.msra.mxu0 %v358
      %368 = vmatpush.bf16.msra.mxu0 %v357
      %369 = vmatpush.bf16.msra.mxu0 %v356
      %370 = vmatpush.bf16.msra.mxu0 %v355
      %371 = vmatpush.bf16.msra.mxu0 %v354
      %372 = vmatpush.bf16.msra.mxu0 %v353
      %373 = vmatpush.bf16.msra.mxu0 %v352
      %374 = vmatpush.bf16.msra.mxu0 %v351
      %375 = vmatmul.bf16.gmra.mxu0 %v287
      %v376 = vpop.f32.mrf.mxu0
      %v377 = vadd.f32 %v221, %v376
      %v378 = vpop.f32.mrf.mxu0
      %v379 = vadd.f32 %v221, %v378
      %380 = vmatmul.bf16.gmra.mxu0 %v288
      %v381 = vpop.f32.mrf.mxu0
      %v382 = vadd.f32 %v221, %v381
      %v383 = vpop.f32.mrf.mxu0
      %v384 = vadd.f32 %v221, %v383
      %385 = vmatmul.bf16.gmra.mxu0 %v289
      %v386 = vpop.f32.mrf.mxu0
      %v387 = vadd.f32 %v221, %v386
      %v388 = vpop.f32.mrf.mxu0
      %v389 = vadd.f32 %v221, %v388
      %390 = vmatmul.bf16.gmra.mxu0 %v290
      %v391 = vpop.f32.mrf.mxu0
      %v392 = vadd.f32 %v221, %v391
      %v393 = vpop.f32.mrf.mxu0
      %v394 = vadd.f32 %v221, %v393
      %395 = vmatmul.bf16.gmra.mxu0 %v291
      %v396 = vpop.f32.mrf.mxu0
      %v397 = vadd.f32 %v221, %v396
      %v398 = vpop.f32.mrf.mxu0
      %v399 = vadd.f32 %v221, %v398
      %400 = vmatmul.bf16.gmra.mxu0 %v292
      %v401 = vpop.f32.mrf.mxu0
      %v402 = vadd.f32 %v221, %v401
      %v403 = vpop.f32.mrf.mxu0
      %v404 = vadd.f32 %v221, %v403
      %405 = vmatmul.bf16.gmra.mxu0 %v293
      %v406 = vpop.f32.mrf.mxu0
      %v407 = vadd.f32 %v221, %v406
      %v408 = vpop.f32.mrf.mxu0
      %v409 = vadd.f32 %v221, %v408
      %410 = vmatmul.bf16.gmra.mxu0 %v294
      %v411 = vpop.f32.mrf.mxu0
      %v412 = vadd.f32 %v221, %v411
      %v413 = vpop.f32.mrf.mxu0
      %v414 = vadd.f32 %v221, %v413
      %415 = vmatmul.bf16.gmra.mxu0 %v295
      %v416 = vpop.f32.mrf.mxu0
      %v417 = vadd.f32 %v221, %v416
      %v418 = vpop.f32.mrf.mxu0
      %v419 = vadd.f32 %v221, %v418
      %420 = vmatmul.bf16.gmra.mxu0 %v296
      %v421 = vpop.f32.mrf.mxu0
      %v422 = vadd.f32 %v221, %v421
      %v423 = vpop.f32.mrf.mxu0
      %v424 = vadd.f32 %v221, %v423
      %425 = vmatmul.bf16.gmra.mxu0 %v297
      %v426 = vpop.f32.mrf.mxu0
      %v427 = vadd.f32 %v221, %v426
      %v428 = vpop.f32.mrf.mxu0
      %v429 = vadd.f32 %v221, %v428
      %430 = vmatmul.bf16.gmra.mxu0 %v298
      %v431 = vpop.f32.mrf.mxu0
      %v432 = vadd.f32 %v221, %v431
      %v433 = vpop.f32.mrf.mxu0
      %v434 = vadd.f32 %v221, %v433
      %435 = vmatmul.bf16.gmra.mxu0 %v299
      %v436 = vpop.f32.mrf.mxu0
      %v437 = vadd.f32 %v221, %v436
      %v438 = vpop.f32.mrf.mxu0
      %v439 = vadd.f32 %v221, %v438
      %440 = vmatmul.bf16.gmra.mxu0 %v300
      %v441 = vpop.f32.mrf.mxu0
      %v442 = vadd.f32 %v221, %v441
      %v443 = vpop.f32.mrf.mxu0
      %v444 = vadd.f32 %v221, %v443
      %445 = vmatmul.bf16.gmra.mxu0 %v301
      %v446 = vpop.f32.mrf.mxu0
      %v447 = vadd.f32 %v221, %v446
      %v448 = vpop.f32.mrf.mxu0
      %v449 = vadd.f32 %v221, %v448
      %450 = vmatmul.bf16.gmra.mxu0 %v302
      %v451 = vpop.f32.mrf.mxu0
      %v452 = vadd.f32 %v221, %v451
      %v453 = vpop.f32.mrf.mxu0
      %v454 = vadd.f32 %v221, %v453
      %455 = vdwg.mxu0
      %v456 = vxor.u32 %v377, 2147483648
      %v457 = vxor.u32 %v379, 2147483648
      %v458 = vxor.u32 %v382, 2147483648
      %v459 = vxor.u32 %v384, 2147483648
      %v460 = vxor.u32 %v387, 2147483648
      %v461 = vxor.u32 %v389, 2147483648
      %v462 = vxor.u32 %v392, 2147483648
      %v463 = vxor.u32 %v394, 2147483648
      %v464 = vxor.u32 %v397, 2147483648
      %v465 = vxor.u32 %v399, 2147483648
      %v466 = vxor.u32 %v402, 2147483648
      %v467 = vxor.u32 %v404, 2147483648
      %v468 = vxor.u32 %v407, 2147483648
      %v469 = vxor.u32 %v409, 2147483648
      %v470 = vxor.u32 %v412, 2147483648
      %v471 = vxor.u32 %v414, 2147483648
      %v472 = vxor.u32 %v417, 2147483648
      %v473 = vxor.u32 %v419, 2147483648
      %v474 = vxor.u32 %v422, 2147483648
      %v475 = vxor.u32 %v424, 2147483648
      %v476 = vxor.u32 %v427, 2147483648
      %v477 = vxor.u32 %v429, 2147483648
      %v478 = vxor.u32 %v432, 2147483648
      %v479 = vxor.u32 %v434, 2147483648
      %v480 = vxor.u32 %v437, 2147483648
      %v481 = vxor.u32 %v439, 2147483648
      %v482 = vxor.u32 %v442, 2147483648
      %v483 = vxor.u32 %v444, 2147483648
      %v484 = vxor.u32 %v447, 2147483648
      %v485 = vxor.u32 %v449, 2147483648
      %v486 = vxor.u32 %v452, 2147483648
      %v487 = vxor.u32 %v454, 2147483648
      %v488 = vmul.f32 %v456, 1.442695
      %v489 = vpow.pop %v488
      %v490 = vmul.f32 %v457, 1.442695
      %v491 = vpow.pop %v490
      %v492 = vmul.f32 %v458, 1.442695
      %v493 = vpow.pop %v492
      %v494 = vmul.f32 %v459, 1.442695
      %v495 = vpow.pop %v494
      %v496 = vmul.f32 %v460, 1.442695
      %v497 = vpow.pop %v496
      %v498 = vmul.f32 %v461, 1.442695
      %v499 = vpow.pop %v498
      %v500 = vmul.f32 %v462, 1.442695
      %v501 = vpow.pop %v500
      %v502 = vmul.f32 %v463, 1.442695
      %v503 = vpow.pop %v502
      %v504 = vmul.f32 %v464, 1.442695
      %v505 = vpow.pop %v504
      %v506 = vmul.f32 %v465, 1.442695
      %v507 = vpow.pop %v506
      %v508 = vmul.f32 %v466, 1.442695
      %v509 = vpow.pop %v508
      %v510 = vmul.f32 %v467, 1.442695
      %v511 = vpow.pop %v510
      %v512 = vmul.f32 %v468, 1.442695
      %v513 = vpow.pop %v512
      %v514 = vmul.f32 %v469, 1.442695
      %v515 = vpow.pop %v514
      %v516 = vmul.f32 %v470, 1.442695
      %v517 = vpow.pop %v516
      %v518 = vmul.f32 %v471, 1.442695
      %v519 = vpow.pop %v518
      %v520 = vmul.f32 %v472, 1.442695
      %v521 = vpow.pop %v520
      %v522 = vmul.f32 %v473, 1.442695
      %v523 = vpow.pop %v522
      %v524 = vmul.f32 %v474, 1.442695
      %v525 = vpow.pop %v524
      %v526 = vmul.f32 %v475, 1.442695
      %v527 = vpow.pop %v526
      %v528 = vmul.f32 %v476, 1.442695
      %v529 = vpow.pop %v528
      %v530 = vmul.f32 %v477, 1.442695
      %v531 = vpow.pop %v530
      %v532 = vmul.f32 %v478, 1.442695
      %v533 = vpow.pop %v532
      %v534 = vmul.f32 %v479, 1.442695
      %v535 = vpow.pop %v534
      %v536 = vmul.f32 %v480, 1.442695
      %v537 = vpow.pop %v536
      %v538 = vmul.f32 %v481, 1.442695
      %v539 = vpow.pop %v538
      %v540 = vmul.f32 %v482, 1.442695
      %v541 = vpow.pop %v540
      %v542 = vmul.f32 %v483, 1.442695
      %v543 = vpow.pop %v542
      %v544 = vmul.f32 %v484, 1.442695
      %v545 = vpow.pop %v544
      %v546 = vmul.f32 %v485, 1.442695
      %v547 = vpow.pop %v546
      %v548 = vmul.f32 %v486, 1.442695
      %v549 = vpow.pop %v548
      %v550 = vmul.f32 %v487, 1.442695
      %v551 = vpow.pop %v550
      %v552 = vadd.f32 %v489, 1.0
      %v553 = vadd.f32 %v491, 1.0
      %v554 = vadd.f32 %v493, 1.0
      %v555 = vadd.f32 %v495, 1.0
      %v556 = vadd.f32 %v497, 1.0
      %v557 = vadd.f32 %v499, 1.0
      %v558 = vadd.f32 %v501, 1.0
      %v559 = vadd.f32 %v503, 1.0
      %v560 = vadd.f32 %v505, 1.0
      %v561 = vadd.f32 %v507, 1.0
      %v562 = vadd.f32 %v509, 1.0
      %v563 = vadd.f32 %v511, 1.0
      %v564 = vadd.f32 %v513, 1.0
      %v565 = vadd.f32 %v515, 1.0
      %v566 = vadd.f32 %v517, 1.0
      %v567 = vadd.f32 %v519, 1.0
      %v568 = vadd.f32 %v521, 1.0
      %v569 = vadd.f32 %v523, 1.0
      %v570 = vadd.f32 %v525, 1.0
      %v571 = vadd.f32 %v527, 1.0
      %v572 = vadd.f32 %v529, 1.0
      %v573 = vadd.f32 %v531, 1.0
      %v574 = vadd.f32 %v533, 1.0
      %v575 = vadd.f32 %v535, 1.0
      %v576 = vadd.f32 %v537, 1.0
      %v577 = vadd.f32 %v539, 1.0
      %v578 = vadd.f32 %v541, 1.0
      %v579 = vadd.f32 %v543, 1.0
      %v580 = vadd.f32 %v545, 1.0
      %v581 = vadd.f32 %v547, 1.0
      %v582 = vadd.f32 %v549, 1.0
      %v583 = vadd.f32 %v551, 1.0
      %v584 = vrcp.pop %v552
      %v585 = vmul.f32 %v552, %v584
      %v586 = vsub.f32 1.0, %v585
      %v587 = vmul.f32 %v584, %v586
      %v588 = vadd.f32 %v584, %v587
      %vm589 = vweird.f32 %v552
      %vm590 = vweird.f32 %v584
      %vm591 = vmor %vm589, %vm590
      %v592 = vsel %vm591, %v584, %v588
      %v593 = vand.u32 2147483647, %v552
      %vm594 = vcmp.eq.f32.partialorder %v593, 8.507059e+37
      %v595 = vand.u32 %v552, 2147483648
      %v596 = vor.u32 1.1754944e-38, %v595
      %v597 = vsel %vm594, %v596, %v592
      %v598 = vmul.f32 1.0, %v597
      %v599 = vrcp.pop %v553
      %v600 = vmul.f32 %v553, %v599
      %v601 = vsub.f32 1.0, %v600
      %v602 = vmul.f32 %v599, %v601
      %v603 = vadd.f32 %v599, %v602
      %vm604 = vweird.f32 %v553
      %vm605 = vweird.f32 %v599
      %vm606 = vmor %vm604, %vm605
      %v607 = vsel %vm606, %v599, %v603
      %v608 = vand.u32 2147483647, %v553
      %vm609 = vcmp.eq.f32.partialorder %v608, 8.507059e+37
      %v610 = vand.u32 %v553, 2147483648
      %v611 = vor.u32 1.1754944e-38, %v610
      %v612 = vsel %vm609, %v611, %v607
      %v613 = vmul.f32 1.0, %v612
      %v614 = vrcp.pop %v554
      %v615 = vmul.f32 %v554, %v614
      %v616 = vsub.f32 1.0, %v615
      %v617 = vmul.f32 %v614, %v616
      %v618 = vadd.f32 %v614, %v617
      %vm619 = vweird.f32 %v554
      %vm620 = vweird.f32 %v614
      %vm621 = vmor %vm619, %vm620
      %v622 = vsel %vm621, %v614, %v618
      %v623 = vand.u32 2147483647, %v554
      %vm624 = vcmp.eq.f32.partialorder %v623, 8.507059e+37
      %v625 = vand.u32 %v554, 2147483648
      %v626 = vor.u32 1.1754944e-38, %v625
      %v627 = vsel %vm624, %v626, %v622
      %v628 = vmul.f32 1.0, %v627
      %v629 = vrcp.pop %v555
      %v630 = vmul.f32 %v555, %v629
      %v631 = vsub.f32 1.0, %v630
      %v632 = vmul.f32 %v629, %v631
      %v633 = vadd.f32 %v629, %v632
      %vm634 = vweird.f32 %v555
      %vm635 = vweird.f32 %v629
      %vm636 = vmor %vm634, %vm635
      %v637 = vsel %vm636, %v629, %v633
      %v638 = vand.u32 2147483647, %v555
      %vm639 = vcmp.eq.f32.partialorder %v638, 8.507059e+37
      %v640 = vand.u32 %v555, 2147483648
      %v641 = vor.u32 1.1754944e-38, %v640
      %v642 = vsel %vm639, %v641, %v637
      %v643 = vmul.f32 1.0, %v642
      %v644 = vrcp.pop %v556
      %v645 = vmul.f32 %v556, %v644
      %v646 = vsub.f32 1.0, %v645
      %v647 = vmul.f32 %v644, %v646
      %v648 = vadd.f32 %v644, %v647
      %vm649 = vweird.f32 %v556
      %vm650 = vweird.f32 %v644
      %vm651 = vmor %vm649, %vm650
      %v652 = vsel %vm651, %v644, %v648
      %v653 = vand.u32 2147483647, %v556
      %vm654 = vcmp.eq.f32.partialorder %v653, 8.507059e+37
      %v655 = vand.u32 %v556, 2147483648
      %v656 = vor.u32 1.1754944e-38, %v655
      %v657 = vsel %vm654, %v656, %v652
      %v658 = vmul.f32 1.0, %v657
      %v659 = vrcp.pop %v557
      %v660 = vmul.f32 %v557, %v659
      %v661 = vsub.f32 1.0, %v660
      %v662 = vmul.f32 %v659, %v661
      %v663 = vadd.f32 %v659, %v662
      %vm664 = vweird.f32 %v557
      %vm665 = vweird.f32 %v659
      %vm666 = vmor %vm664, %vm665
      %v667 = vsel %vm666, %v659, %v663
      %v668 = vand.u32 2147483647, %v557
      %vm669 = vcmp.eq.f32.partialorder %v668, 8.507059e+37
      %v670 = vand.u32 %v557, 2147483648
      %v671 = vor.u32 1.1754944e-38, %v670
      %v672 = vsel %vm669, %v671, %v667
      %v673 = vmul.f32 1.0, %v672
      %v674 = vrcp.pop %v558
      %v675 = vmul.f32 %v558, %v674
      %v676 = vsub.f32 1.0, %v675
      %v677 = vmul.f32 %v674, %v676
      %v678 = vadd.f32 %v674, %v677
      %vm679 = vweird.f32 %v558
      %vm680 = vweird.f32 %v674
      %vm681 = vmor %vm679, %vm680
      %v682 = vsel %vm681, %v674, %v678
      %v683 = vand.u32 2147483647, %v558
      %vm684 = vcmp.eq.f32.partialorder %v683, 8.507059e+37
      %v685 = vand.u32 %v558, 2147483648
      %v686 = vor.u32 1.1754944e-38, %v685
      %v687 = vsel %vm684, %v686, %v682
      %v688 = vmul.f32 1.0, %v687
      %v689 = vrcp.pop %v559
      %v690 = vmul.f32 %v559, %v689
      %v691 = vsub.f32 1.0, %v690
      %v692 = vmul.f32 %v689, %v691
      %v693 = vadd.f32 %v689, %v692
      %vm694 = vweird.f32 %v559
      %vm695 = vweird.f32 %v689
      %vm696 = vmor %vm694, %vm695
      %v697 = vsel %vm696, %v689, %v693
      %v698 = vand.u32 2147483647, %v559
      %vm699 = vcmp.eq.f32.partialorder %v698, 8.507059e+37
      %v700 = vand.u32 %v559, 2147483648
      %v701 = vor.u32 1.1754944e-38, %v700
      %v702 = vsel %vm699, %v701, %v697
      %v703 = vmul.f32 1.0, %v702
      %v704 = vrcp.pop %v560
      %v705 = vmul.f32 %v560, %v704
      %v706 = vsub.f32 1.0, %v705
      %v707 = vmul.f32 %v704, %v706
      %v708 = vadd.f32 %v704, %v707
      %vm709 = vweird.f32 %v560
      %vm710 = vweird.f32 %v704
      %vm711 = vmor %vm709, %vm710
      %v712 = vsel %vm711, %v704, %v708
      %v713 = vand.u32 2147483647, %v560
      %vm714 = vcmp.eq.f32.partialorder %v713, 8.507059e+37
      %v715 = vand.u32 %v560, 2147483648
      %v716 = vor.u32 1.1754944e-38, %v715
      %v717 = vsel %vm714, %v716, %v712
      %v718 = vmul.f32 1.0, %v717
      %v719 = vrcp.pop %v561
      %v720 = vmul.f32 %v561, %v719
      %v721 = vsub.f32 1.0, %v720
      %v722 = vmul.f32 %v719, %v721
      %v723 = vadd.f32 %v719, %v722
      %vm724 = vweird.f32 %v561
      %vm725 = vweird.f32 %v719
      %vm726 = vmor %vm724, %vm725
      %v727 = vsel %vm726, %v719, %v723
      %v728 = vand.u32 2147483647, %v561
      %vm729 = vcmp.eq.f32.partialorder %v728, 8.507059e+37
      %v730 = vand.u32 %v561, 2147483648
      %v731 = vor.u32 1.1754944e-38, %v730
      %v732 = vsel %vm729, %v731, %v727
      %v733 = vmul.f32 1.0, %v732
      %v734 = vrcp.pop %v562
      %v735 = vmul.f32 %v562, %v734
      %v736 = vsub.f32 1.0, %v735
      %v737 = vmul.f32 %v734, %v736
      %v738 = vadd.f32 %v734, %v737
      %vm739 = vweird.f32 %v562
      %vm740 = vweird.f32 %v734
      %vm741 = vmor %vm739, %vm740
      %v742 = vsel %vm741, %v734, %v738
      %v743 = vand.u32 2147483647, %v562
      %vm744 = vcmp.eq.f32.partialorder %v743, 8.507059e+37
      %v745 = vand.u32 %v562, 2147483648
      %v746 = vor.u32 1.1754944e-38, %v745
      %v747 = vsel %vm744, %v746, %v742
      %v748 = vmul.f32 1.0, %v747
      %v749 = vrcp.pop %v563
      %v750 = vmul.f32 %v563, %v749
      %v751 = vsub.f32 1.0, %v750
      %v752 = vmul.f32 %v749, %v751
      %v753 = vadd.f32 %v749, %v752
      %vm754 = vweird.f32 %v563
      %vm755 = vweird.f32 %v749
      %vm756 = vmor %vm754, %vm755
      %v757 = vsel %vm756, %v749, %v753
      %v758 = vand.u32 2147483647, %v563
      %vm759 = vcmp.eq.f32.partialorder %v758, 8.507059e+37
      %v760 = vand.u32 %v563, 2147483648
      %v761 = vor.u32 1.1754944e-38, %v760
      %v762 = vsel %vm759, %v761, %v757
      %v763 = vmul.f32 1.0, %v762
      %v764 = vrcp.pop %v564
      %v765 = vmul.f32 %v564, %v764
      %v766 = vsub.f32 1.0, %v765
      %v767 = vmul.f32 %v764, %v766
      %v768 = vadd.f32 %v764, %v767
      %vm769 = vweird.f32 %v564
      %vm770 = vweird.f32 %v764
      %vm771 = vmor %vm769, %vm770
      %v772 = vsel %vm771, %v764, %v768
      %v773 = vand.u32 2147483647, %v564
      %vm774 = vcmp.eq.f32.partialorder %v773, 8.507059e+37
      %v775 = vand.u32 %v564, 2147483648
      %v776 = vor.u32 1.1754944e-38, %v775
      %v777 = vsel %vm774, %v776, %v772
      %v778 = vmul.f32 1.0, %v777
      %v779 = vrcp.pop %v565
      %v780 = vmul.f32 %v565, %v779
      %v781 = vsub.f32 1.0, %v780
      %v782 = vmul.f32 %v779, %v781
      %v783 = vadd.f32 %v779, %v782
      %vm784 = vweird.f32 %v565
      %vm785 = vweird.f32 %v779
      %vm786 = vmor %vm784, %vm785
      %v787 = vsel %vm786, %v779, %v783
      %v788 = vand.u32 2147483647, %v565
      %vm789 = vcmp.eq.f32.partialorder %v788, 8.507059e+37
      %v790 = vand.u32 %v565, 2147483648
      %v791 = vor.u32 1.1754944e-38, %v790
      %v792 = vsel %vm789, %v791, %v787
      %v793 = vmul.f32 1.0, %v792
      %v794 = vrcp.pop %v566
      %v795 = vmul.f32 %v566, %v794
      %v796 = vsub.f32 1.0, %v795
      %v797 = vmul.f32 %v794, %v796
      %v798 = vadd.f32 %v794, %v797
      %vm799 = vweird.f32 %v566
      %vm800 = vweird.f32 %v794
      %vm801 = vmor %vm799, %vm800
      %v802 = vsel %vm801, %v794, %v798
      %v803 = vand.u32 2147483647, %v566
      %vm804 = vcmp.eq.f32.partialorder %v803, 8.507059e+37
      %v805 = vand.u32 %v566, 2147483648
      %v806 = vor.u32 1.1754944e-38, %v805
      %v807 = vsel %vm804, %v806, %v802
      %v808 = vmul.f32 1.0, %v807
      %v809 = vrcp.pop %v567
      %v810 = vmul.f32 %v567, %v809
      %v811 = vsub.f32 1.0, %v810
      %v812 = vmul.f32 %v809, %v811
      %v813 = vadd.f32 %v809, %v812
      %vm814 = vweird.f32 %v567
      %vm815 = vweird.f32 %v809
      %vm816 = vmor %vm814, %vm815
      %v817 = vsel %vm816, %v809, %v813
      %v818 = vand.u32 2147483647, %v567
      %vm819 = vcmp.eq.f32.partialorder %v818, 8.507059e+37
      %v820 = vand.u32 %v567, 2147483648
      %v821 = vor.u32 1.1754944e-38, %v820
      %v822 = vsel %vm819, %v821, %v817
      %v823 = vmul.f32 1.0, %v822
      %v824 = vrcp.pop %v568
      %v825 = vmul.f32 %v568, %v824
      %v826 = vsub.f32 1.0, %v825
      %v827 = vmul.f32 %v824, %v826
      %v828 = vadd.f32 %v824, %v827
      %vm829 = vweird.f32 %v568
      %vm830 = vweird.f32 %v824
      %vm831 = vmor %vm829, %vm830
      %v832 = vsel %vm831, %v824, %v828
      %v833 = vand.u32 2147483647, %v568
      %vm834 = vcmp.eq.f32.partialorder %v833, 8.507059e+37
      %v835 = vand.u32 %v568, 2147483648
      %v836 = vor.u32 1.1754944e-38, %v835
      %v837 = vsel %vm834, %v836, %v832
      %v838 = vmul.f32 1.0, %v837
      %v839 = vrcp.pop %v569
      %v840 = vmul.f32 %v569, %v839
      %v841 = vsub.f32 1.0, %v840
      %v842 = vmul.f32 %v839, %v841
      %v843 = vadd.f32 %v839, %v842
      %vm844 = vweird.f32 %v569
      %vm845 = vweird.f32 %v839
      %vm846 = vmor %vm844, %vm845
      %v847 = vsel %vm846, %v839, %v843
      %v848 = vand.u32 2147483647, %v569
      %vm849 = vcmp.eq.f32.partialorder %v848, 8.507059e+37
      %v850 = vand.u32 %v569, 2147483648
      %v851 = vor.u32 1.1754944e-38, %v850
      %v852 = vsel %vm849, %v851, %v847
      %v853 = vmul.f32 1.0, %v852
      %v854 = vrcp.pop %v570
      %v855 = vmul.f32 %v570, %v854
      %v856 = vsub.f32 1.0, %v855
      %v857 = vmul.f32 %v854, %v856
      %v858 = vadd.f32 %v854, %v857
      %vm859 = vweird.f32 %v570
      %vm860 = vweird.f32 %v854
      %vm861 = vmor %vm859, %vm860
      %v862 = vsel %vm861, %v854, %v858
      %v863 = vand.u32 2147483647, %v570
      %vm864 = vcmp.eq.f32.partialorder %v863, 8.507059e+37
      %v865 = vand.u32 %v570, 2147483648
      %v866 = vor.u32 1.1754944e-38, %v865
      %v867 = vsel %vm864, %v866, %v862
      %v868 = vmul.f32 1.0, %v867
      %v869 = vrcp.pop %v571
      %v870 = vmul.f32 %v571, %v869
      %v871 = vsub.f32 1.0, %v870
      %v872 = vmul.f32 %v869, %v871
      %v873 = vadd.f32 %v869, %v872
      %vm874 = vweird.f32 %v571
      %vm875 = vweird.f32 %v869
      %vm876 = vmor %vm874, %vm875
      %v877 = vsel %vm876, %v869, %v873
      %v878 = vand.u32 2147483647, %v571
      %vm879 = vcmp.eq.f32.partialorder %v878, 8.507059e+37
      %v880 = vand.u32 %v571, 2147483648
      %v881 = vor.u32 1.1754944e-38, %v880
      %v882 = vsel %vm879, %v881, %v877
      %v883 = vmul.f32 1.0, %v882
      %v884 = vrcp.pop %v572
      %v885 = vmul.f32 %v572, %v884
      %v886 = vsub.f32 1.0, %v885
      %v887 = vmul.f32 %v884, %v886
      %v888 = vadd.f32 %v884, %v887
      %vm889 = vweird.f32 %v572
      %vm890 = vweird.f32 %v884
      %vm891 = vmor %vm889, %vm890
      %v892 = vsel %vm891, %v884, %v888
      %v893 = vand.u32 2147483647, %v572
      %vm894 = vcmp.eq.f32.partialorder %v893, 8.507059e+37
      %v895 = vand.u32 %v572, 2147483648
      %v896 = vor.u32 1.1754944e-38, %v895
      %v897 = vsel %vm894, %v896, %v892
      %v898 = vmul.f32 1.0, %v897
      %v899 = vrcp.pop %v573
      %v900 = vmul.f32 %v573, %v899
      %v901 = vsub.f32 1.0, %v900
      %v902 = vmul.f32 %v899, %v901
      %v903 = vadd.f32 %v899, %v902
      %vm904 = vweird.f32 %v573
      %vm905 = vweird.f32 %v899
      %vm906 = vmor %vm904, %vm905
      %v907 = vsel %vm906, %v899, %v903
      %v908 = vand.u32 2147483647, %v573
      %vm909 = vcmp.eq.f32.partialorder %v908, 8.507059e+37
      %v910 = vand.u32 %v573, 2147483648
      %v911 = vor.u32 1.1754944e-38, %v910
      %v912 = vsel %vm909, %v911, %v907
      %v913 = vmul.f32 1.0, %v912
      %v914 = vrcp.pop %v574
      %v915 = vmul.f32 %v574, %v914
      %v916 = vsub.f32 1.0, %v915
      %v917 = vmul.f32 %v914, %v916
      %v918 = vadd.f32 %v914, %v917
      %vm919 = vweird.f32 %v574
      %vm920 = vweird.f32 %v914
      %vm921 = vmor %vm919, %vm920
      %v922 = vsel %vm921, %v914, %v918
      %v923 = vand.u32 2147483647, %v574
      %vm924 = vcmp.eq.f32.partialorder %v923, 8.507059e+37
      %v925 = vand.u32 %v574, 2147483648
      %v926 = vor.u32 1.1754944e-38, %v925
      %v927 = vsel %vm924, %v926, %v922
      %v928 = vmul.f32 1.0, %v927
      %v929 = vrcp.pop %v575
      %v930 = vmul.f32 %v575, %v929
      %v931 = vsub.f32 1.0, %v930
      %v932 = vmul.f32 %v929, %v931
      %v933 = vadd.f32 %v929, %v932
      %vm934 = vweird.f32 %v575
      %vm935 = vweird.f32 %v929
      %vm936 = vmor %vm934, %vm935
      %v937 = vsel %vm936, %v929, %v933
      %v938 = vand.u32 2147483647, %v575
      %vm939 = vcmp.eq.f32.partialorder %v938, 8.507059e+37
      %v940 = vand.u32 %v575, 2147483648
      %v941 = vor.u32 1.1754944e-38, %v940
      %v942 = vsel %vm939, %v941, %v937
      %v943 = vmul.f32 1.0, %v942
      %v944 = vrcp.pop %v576
      %v945 = vmul.f32 %v576, %v944
      %v946 = vsub.f32 1.0, %v945
      %v947 = vmul.f32 %v944, %v946
      %v948 = vadd.f32 %v944, %v947
      %vm949 = vweird.f32 %v576
      %vm950 = vweird.f32 %v944
      %vm951 = vmor %vm949, %vm950
      %v952 = vsel %vm951, %v944, %v948
      %v953 = vand.u32 2147483647, %v576
      %vm954 = vcmp.eq.f32.partialorder %v953, 8.507059e+37
      %v955 = vand.u32 %v576, 2147483648
      %v956 = vor.u32 1.1754944e-38, %v955
      %v957 = vsel %vm954, %v956, %v952
      %v958 = vmul.f32 1.0, %v957
      %v959 = vrcp.pop %v577
      %v960 = vmul.f32 %v577, %v959
      %v961 = vsub.f32 1.0, %v960
      %v962 = vmul.f32 %v959, %v961
      %v963 = vadd.f32 %v959, %v962
      %vm964 = vweird.f32 %v577
      %vm965 = vweird.f32 %v959
      %vm966 = vmor %vm964, %vm965
      %v967 = vsel %vm966, %v959, %v963
      %v968 = vand.u32 2147483647, %v577
      %vm969 = vcmp.eq.f32.partialorder %v968, 8.507059e+37
      %v970 = vand.u32 %v577, 2147483648
      %v971 = vor.u32 1.1754944e-38, %v970
      %v972 = vsel %vm969, %v971, %v967
      %v973 = vmul.f32 1.0, %v972
      %v974 = vrcp.pop %v578
      %v975 = vmul.f32 %v578, %v974
      %v976 = vsub.f32 1.0, %v975
      %v977 = vmul.f32 %v974, %v976
      %v978 = vadd.f32 %v974, %v977
      %vm979 = vweird.f32 %v578
      %vm980 = vweird.f32 %v974
      %vm981 = vmor %vm979, %vm980
      %v982 = vsel %vm981, %v974, %v978
      %v983 = vand.u32 2147483647, %v578
      %vm984 = vcmp.eq.f32.partialorder %v983, 8.507059e+37
      %v985 = vand.u32 %v578, 2147483648
      %v986 = vor.u32 1.1754944e-38, %v985
      %v987 = vsel %vm984, %v986, %v982
      %v988 = vmul.f32 1.0, %v987
      %v989 = vrcp.pop %v579
      %v990 = vmul.f32 %v579, %v989
      %v991 = vsub.f32 1.0, %v990
      %v992 = vmul.f32 %v989, %v991
      %v993 = vadd.f32 %v989, %v992
      %vm994 = vweird.f32 %v579
      %vm995 = vweird.f32 %v989
      %vm996 = vmor %vm994, %vm995
      %v997 = vsel %vm996, %v989, %v993
      %v998 = vand.u32 2147483647, %v579
      %vm999 = vcmp.eq.f32.partialorder %v998, 8.507059e+37
      %v1000 = vand.u32 %v579, 2147483648
      %v1001 = vor.u32 1.1754944e-38, %v1000
      %v1002 = vsel %vm999, %v1001, %v997
      %v1003 = vmul.f32 1.0, %v1002
      %v1004 = vrcp.pop %v580
      %v1005 = vmul.f32 %v580, %v1004
      %v1006 = vsub.f32 1.0, %v1005
      %v1007 = vmul.f32 %v1004, %v1006
      %v1008 = vadd.f32 %v1004, %v1007
      %vm1009 = vweird.f32 %v580
      %vm1010 = vweird.f32 %v1004
      %vm1011 = vmor %vm1009, %vm1010
      %v1012 = vsel %vm1011, %v1004, %v1008
      %v1013 = vand.u32 2147483647, %v580
      %vm1014 = vcmp.eq.f32.partialorder %v1013, 8.507059e+37
      %v1015 = vand.u32 %v580, 2147483648
      %v1016 = vor.u32 1.1754944e-38, %v1015
      %v1017 = vsel %vm1014, %v1016, %v1012
      %v1018 = vmul.f32 1.0, %v1017
      %v1019 = vrcp.pop %v581
      %v1020 = vmul.f32 %v581, %v1019
      %v1021 = vsub.f32 1.0, %v1020
      %v1022 = vmul.f32 %v1019, %v1021
      %v1023 = vadd.f32 %v1019, %v1022
      %vm1024 = vweird.f32 %v581
      %vm1025 = vweird.f32 %v1019
      %vm1026 = vmor %vm1024, %vm1025
      %v1027 = vsel %vm1026, %v1019, %v1023
      %v1028 = vand.u32 2147483647, %v581
      %vm1029 = vcmp.eq.f32.partialorder %v1028, 8.507059e+37
      %v1030 = vand.u32 %v581, 2147483648
      %v1031 = vor.u32 1.1754944e-38, %v1030
      %v1032 = vsel %vm1029, %v1031, %v1027
      %v1033 = vmul.f32 1.0, %v1032
      %v1034 = vrcp.pop %v582
      %v1035 = vmul.f32 %v582, %v1034
      %v1036 = vsub.f32 1.0, %v1035
      %v1037 = vmul.f32 %v1034, %v1036
      %v1038 = vadd.f32 %v1034, %v1037
      %vm1039 = vweird.f32 %v582
      %vm1040 = vweird.f32 %v1034
      %vm1041 = vmor %vm1039, %vm1040
      %v1042 = vsel %vm1041, %v1034, %v1038
      %v1043 = vand.u32 2147483647, %v582
      %vm1044 = vcmp.eq.f32.partialorder %v1043, 8.507059e+37
      %v1045 = vand.u32 %v582, 2147483648
      %v1046 = vor.u32 1.1754944e-38, %v1045
      %v1047 = vsel %vm1044, %v1046, %v1042
      %v1048 = vmul.f32 1.0, %v1047
      %v1049 = vrcp.pop %v583
      %v1050 = vmul.f32 %v583, %v1049
      %v1051 = vsub.f32 1.0, %v1050
      %v1052 = vmul.f32 %v1049, %v1051
      %v1053 = vadd.f32 %v1049, %v1052
      %vm1054 = vweird.f32 %v583
      %vm1055 = vweird.f32 %v1049
      %vm1056 = vmor %vm1054, %vm1055
      %v1057 = vsel %vm1056, %v1049, %v1053
      %v1058 = vand.u32 2147483647, %v583
      %vm1059 = vcmp.eq.f32.partialorder %v1058, 8.507059e+37
      %v1060 = vand.u32 %v583, 2147483648
      %v1061 = vor.u32 1.1754944e-38, %v1060
      %v1062 = vsel %vm1059, %v1061, %v1057
      %v1063 = vmul.f32 1.0, %v1062
      %vm1064 = vcmask 130048
      %1065 = vst.msk [vmem:[%s170] sm:$0xff] %vm1064, %v598
      %1066 = vst.msk [vmem:[%s170 + $0x8] sm:$0xff] %vm1064, %v613
      %1067 = vst.msk [vmem:[%s170 + $0x10] sm:$0xff] %vm1064, %v628
      %1068 = vst.msk [vmem:[%s170 + $0x18] sm:$0xff] %vm1064, %v643
      %1069 = vst.msk [vmem:[%s170 + $0x20] sm:$0xff] %vm1064, %v658
      %1070 = vst.msk [vmem:[%s170 + $0x28] sm:$0xff] %vm1064, %v673
      %1071 = vst.msk [vmem:[%s170 + $0x30] sm:$0xff] %vm1064, %v688
      %1072 = vst.msk [vmem:[%s170 + $0x38] sm:$0xff] %vm1064, %v703
      %1073 = vst.msk [vmem:[%s170 + $0x40] sm:$0xff] %vm1064, %v718
      %1074 = vst.msk [vmem:[%s170 + $0x48] sm:$0xff] %vm1064, %v733
      %1075 = vst.msk [vmem:[%s170 + $0x50] sm:$0xff] %vm1064, %v748
      %1076 = vst.msk [vmem:[%s170 + $0x58] sm:$0xff] %vm1064, %v763
      %1077 = vst.msk [vmem:[%s170 + $0x60] sm:$0xff] %vm1064, %v778
      %1078 = vst.msk [vmem:[%s170 + $0x68] sm:$0xff] %vm1064, %v793
      %1079 = vst.msk [vmem:[%s170 + $0x70] sm:$0xff] %vm1064, %v808
      %1080 = vst.msk [vmem:[%s170 + $0x78] sm:$0xff] %vm1064, %v823
      %1081 = vst.msk [vmem:[%s170 + $0x80] sm:$0xff] %vm1064, %v838
      %1082 = vst.msk [vmem:[%s170 + $0x88] sm:$0xff] %vm1064, %v853
      %1083 = vst.msk [vmem:[%s170 + $0x90] sm:$0xff] %vm1064, %v868
      %1084 = vst.msk [vmem:[%s170 + $0x98] sm:$0xff] %vm1064, %v883
      %1085 = vst.msk [vmem:[%s170 + $0xa0] sm:$0xff] %vm1064, %v898
      %1086 = vst.msk [vmem:[%s170 + $0xa8] sm:$0xff] %vm1064, %v913
      %1087 = vst.msk [vmem:[%s170 + $0xb0] sm:$0xff] %vm1064, %v928
      %1088 = vst.msk [vmem:[%s170 + $0xb8] sm:$0xff] %vm1064, %v943
      %1089 = vst.msk [vmem:[%s170 + $0xc0] sm:$0xff] %vm1064, %v958
      %1090 = vst.msk [vmem:[%s170 + $0xc8] sm:$0xff] %vm1064, %v973
      %1091 = vst.msk [vmem:[%s170 + $0xd0] sm:$0xff] %vm1064, %v988
      %1092 = vst.msk [vmem:[%s170 + $0xd8] sm:$0xff] %vm1064, %v1003
      %1093 = vst.msk [vmem:[%s170 + $0xe0] sm:$0xff] %vm1064, %v1018
      %1094 = vst.msk [vmem:[%s170 + $0xe8] sm:$0xff] %vm1064, %v1033
      %1095 = vst.msk [vmem:[%s170 + $0xf0] sm:$0xff] %vm1064, %v1048
      %1096 = vst.msk [vmem:[%s170 + $0xf8] sm:$0xff] %vm1064, %v1063
      %p1097 = scmp.lt.s32.totalorder %s14, 1
      %s1098 = scalar_select %p1097, %s14, 1
      %s1099 = smul.addr %s1098, 32
      %s1100 = smul.addr %s1099, 8
      %s1101 = scalar_lea.vmem %s3, %s1100
      // Predicated region
      $region33: #{upsample_forward.7} parent=31 // pred_check
        %p1102 = pneg %p100
      $region34: #{upsample_forward.7} parent=31 // pred_check_branch
        %1104 = sbr.rel (%p1102) target = $region36
      $region35: #{upsample_forward.7} parent=31 // pred_region
        _
      $region36: #{upsample_forward.7} parent=31 // pred_fallthru
        _
    $region32: #{upsample_forward.7} parent=5 // pred_fallthru
      _
    %p1105 = scmp.le.s32.totalorder 2, %s9
    // Predicated region
    $region37: #{upsample_forward.7} parent=5 // pred_check
      %p1106 = pneg %p1105
    $region38: #{upsample_forward.7} parent=5 // pred_check_branch
      %1108 = sbr.rel (%p1106) target = $region40
    $region39: #{upsample_forward.7} parent=5 // pred_region
      %s1109 = ssub.s32 %s9, 2
      // Predicated region
      $region41: #{upsample_forward.7} parent=39 // pred_check
        %p1110 = pneg %p106
      $region42: #{upsample_forward.7} parent=39 // pred_check_branch
        %1112 = sbr.rel (%p1110) target = $region44
      $region43: #{upsample_forward.7} parent=39 // pred_region
        %p1113 = scmp.lt.s32.totalorder %s15, 1
        %s1114 = scalar_select %p1113, %s15, 1
        %s1115 = smul.addr %s1114, 32
        %s1116 = smul.addr %s1115, 8
        %s1117 = scalar_lea.vmem %s3, %s1116
      $region44: #{upsample_forward.7} parent=39 // pred_fallthru
        _
    $region40: #{upsample_forward.7} parent=5 // pred_fallthru
      _
  $region6: #{upsample_forward.7} parent=0 // loop_footer
    %s13 = sadd.s32 1, %s9
  $region7: #{upsample_forward.7} parent=0 // loop_footer_branch
    %8 = sbr.rel target = $region3
  $region8: #{upsample_forward.7} parent=0 // loop_exit
    _

</llo_original>
